<compile_context>
chip_gen: v7x
topology: tpu7x:2x2x1
jax: 0.10.0
libtpu: 0.0.40
codegen_flags: <defaults>
</compile_context>

<pallas_src>
import functools

import numpy as np
import jax
import jax.numpy as jnp
from jax.experimental import pallas as pl
from jax.experimental.pallas import tpu as pltpu

KW = 4
PAD = 2              # int(np.ceil((4 - 1) / 2)) == 2, as in the PyTorch module
NEG_SLOPE = 0.2
BN_EPS = 1e-5
LANE = 128
TM = 128             # M-rows per tile. Raise to 512 (v7x) / 1024 (v5e/v6e) for large images;
                     # kept at 128 here so the tiny test exercises the multi-tile path.


def _round_up(x, m):
    return (x + m - 1) // m * m


def _compiler_params():
    return pltpu.CompilerParams(
        dimension_semantics=("parallel",),
        vmem_limit_bytes=32 * 1024 * 1024,
    )


# ------------------------------ Pallas kernels ------------------------------

def _conv_mm_kernel(a_ref, w_ref, b_ref, y_ref, *stats_ref, apply_act):
    """One M-tile of the im2col conv matmul.

    a_ref: (TM, K) bf16   w_ref: (K, Cp) bf16   b_ref: (1, Cp) f32
    y_ref: (TM, Cp) f32 (lane-dense, Cp multiple of 128)
    optional stats_ref[0]: (8, Cp) f32 -- row 0 = per-channel sum over this tile,
    row 1 = per-channel sum of squares (fused train-mode BatchNorm statistics).
    """
    acc = jnp.dot(a_ref[...], w_ref[...], preferred_element_type=jnp.float32)
    y = acc + b_ref[...]                                # f32 epilogue
    if apply_act:
        y = jnp.where(y >= 0, y, NEG_SLOPE * y)
    y_ref[...] = y
    if stats_ref:
        cp = y.shape[1]
        s = jnp.sum(y, axis=0, keepdims=True)           # (1, Cp)
        ss = jnp.sum(y * y, axis=0, keepdims=True)      # (1, Cp)
        row = jax.lax.broadcasted_iota(jnp.int32, (8, cp), 0)
        stats_ref[0][...] = jnp.where(row == 0, s, 0.0) + jnp.where(row == 1, ss, 0.0)


def _bn_lrelu_kernel(x_ref, scale_ref, shift_ref, o_ref):
    """Fused affine BatchNorm (precomputed per-channel scale/shift) + LeakyReLU(0.2)."""
    y = x_ref[...] * scale_ref[...] + shift_ref[...]
    o_ref[...] = jnp.where(y >= 0, y, NEG_SLOPE * y)


# ------------------------------ pallas_call wrappers -------------------------

def _conv_matmul(a_pad, w_pad, b_row, apply_act, want_stats):
    mp, k = a_pad.shape
    cp = w_pad.shape[1]
    grid_m = mp // TM

    out_specs = [pl.BlockSpec((TM, cp), lambda i: (i, 0))]
    out_shape = [jax.ShapeDtypeStruct((mp, cp), jnp.float32)]
    if want_stats:
        out_specs.append(pl.BlockSpec((8, cp), lambda i: (i, 0)))
        out_shape.append(jax.ShapeDtypeStruct((grid_m * 8, cp), jnp.float32))

    cost = pl.CostEstimate(
        flops=2 * mp * k * cp,
        transcendentals=0,
        bytes_accessed=(a_pad.size * 2 + w_pad.size * 2 + b_row.size * 4
                        + mp * cp * 4 + (grid_m * 8 * cp * 4 if want_stats else 0)),
    )

    outs = pl.pallas_call(
        functools.partial(_conv_mm_kernel, apply_act=apply_act),
        grid=(grid_m,),
        in_specs=[
            pl.BlockSpec((TM, k), lambda i: (i, 0)),     # A tile, streamed/pipelined over M
            pl.BlockSpec((k, cp), lambda i: (0, 0)),     # full weight matrix (small)
            pl.BlockSpec((1, cp), lambda i: (0, 0)),     # bias row
        ],
        out_specs=out_specs,
        out_shape=out_shape,
        compiler_params=_compiler_params(),
        cost_estimate=cost,
    )(a_pad, w_pad, b_row)

    if want_stats:
        y_pad, stats = outs
        return y_pad, stats
    return outs[0], None


def _bn_lrelu(x_pad, scale_row, shift_row):
    mp, cp = x_pad.shape
    grid_m = mp // TM
    cost = pl.CostEstimate(flops=4 * mp * cp, transcendentals=0,
                           bytes_accessed=2 * mp * cp * 4 + 2 * cp * 4)
    return pl.pallas_call(
        _bn_lrelu_kernel,
        grid=(grid_m,),
        in_specs=[
            pl.BlockSpec((TM, cp), lambda i: (i, 0)),
            pl.BlockSpec((1, cp), lambda i: (0, 0)),
            pl.BlockSpec((1, cp), lambda i: (0, 0)),
        ],
        out_specs=pl.BlockSpec((TM, cp), lambda i: (i, 0)),
        out_shape=jax.ShapeDtypeStruct((mp, cp), jnp.float32),
        compiler_params=_compiler_params(),
        cost_estimate=cost,
    )(x_pad, scale_row, shift_row)


# ------------------------------- glue (JAX) ----------------------------------

def _extract_patches(x_nhwc, stride):
    """im2col: (N,H,W,C) -> ((N*OH*OW, KW*KW*C) f32, (N, OH, OW))."""
    n, h, w, c = x_nhwc.shape
    xp = jnp.pad(x_nhwc, ((0, 0), (PAD, PAD), (PAD, PAD), (0, 0)))
    oh = (h + 2 * PAD - KW) // stride + 1
    ow = (w + 2 * PAD - KW) // stride + 1
    taps = []
    for i in range(KW):
        for j in range(KW):
            taps.append(xp[:, i:i + stride * oh:stride, j:j + stride * ow:stride, :])
    p = jnp.stack(taps, axis=3)                          # (N, OH, OW, KW*KW, C)
    return p.reshape(n * oh * ow, KW * KW * c), (n, oh, ow)


def conv2d_pallas(x_nhwc, w_oihw, bias, stride, fuse_act, add_bias, want_stats):
    cout, cin = w_oihw.shape[0], w_oihw.shape[1]
    a, (n, oh, ow) = _extract_patches(x_nhwc, stride)
    m, k = a.shape
    mp = _round_up(m, TM)                                # zero-pad rows to tile multiple
    cp = _round_up(cout, LANE)                           # zero-pad channels to lane multiple

    a_pad = jnp.zeros((mp, k), jnp.bfloat16).at[:m, :].set(a.astype(jnp.bfloat16))
    # torch weight (Cout,Cin,KH,KW) -> (KH,KW,Cin,Cout) -> (KH*KW*Cin, Cout); matches A layout.
    w_mat = jnp.transpose(w_oihw, (2, 3, 1, 0)).reshape(k, cout)
    w_pad = jnp.zeros((k, cp), jnp.bfloat16).at[:, :cout].set(w_mat.astype(jnp.bfloat16))
    if add_bias:
        b_row = jnp.zeros((1, cp), jnp.float32).at[0, :cout].set(bias.astype(jnp.float32))
    else:
        b_row = jnp.zeros((1, cp), jnp.float32)

    y_pad, stats = _conv_matmul(a_pad, w_pad, b_row, fuse_act, want_stats)
    return y_pad, stats, (n, oh, ow, m, cout, cp)


def discriminator_forward(x_nchw, params):
    """Pallas forward.  Input/output NCHW to match PyTorch."""
    x = jnp.transpose(x_nchw, (0, 2, 3, 1))                       # -> NHWC (f32 between layers)
    for layer in params:
        has_bn = layer['has_bn']
        fuse_act = layer['has_act'] and not has_bn                # LeakyReLU fused into conv
        add_bias = not has_bn                                     # bias is a no-op before train-mode BN
        y_pad, stats, (n, oh, ow, m, cout, cp) = conv2d_pallas(
            x, layer['w'], layer['b'], layer['stride'], fuse_act, add_bias, has_bn)
        if has_bn:
            # Reduce the tiny per-tile partial sums emitted by the conv kernel.
            st = stats.reshape(-1, 8, cp)
            ch_sum = jnp.sum(st[:, 0, :cout], axis=0)             # padded rows/channels are exact 0
            ch_sumsq = jnp.sum(st[:, 1, :cout], axis=0)
            mean = ch_sum / m
            var = ch_sumsq / m - mean * mean                      # biased variance (train-mode BN)
            scale_c = layer['gamma'] / jnp.sqrt(var + BN_EPS)
            shift_c = layer['beta'] - mean * scale_c
            scale = jnp.zeros((1, cp), jnp.float32).at[0, :cout].set(scale_c)
            shift = jnp.zeros((1, cp), jnp.float32).at[0, :cout].set(shift_c)
            y_pad = _bn_lrelu(y_pad, scale, shift)
        x = y_pad[:m, :cout].reshape(n, oh, ow, cout)             # drop row/channel padding
    return jnp.transpose(x, (0, 3, 1, 2))                         # -> NCHW


# ------------------------- parameters & pure-JAX reference -------------------

def init_params(key, input_rgb, dis_filters, n_layers=3):
    """Deterministic synthetic parameters with the exact shapes of NeuralNetDiscr.__init__."""
    specs = [(input_rgb, dis_filters, 2, False, True)]            # (Cin, Cout, stride, has_bn, has_act)
    nf_mult = 1
    for n in range(1, n_layers):
        nf_prev, nf_mult = nf_mult, min(2 ** n, 8)
        specs.append((dis_filters * nf_prev, dis_filters * nf_mult, 2, True, True))
    nf_prev, nf_mult = nf_mult, min(2 ** n_layers, 8)
    specs.append((dis_filters * nf_prev, dis_filters * nf_mult, 1, True, True))
    specs.append((dis_filters * nf_mult, 1, 1, False, False))

    params = []
    for cin, cout, stride, has_bn, has_act in specs:
        key, k1, k2, k3, k4 = jax.random.split(key, 5)
        fan_in = cin * KW * KW
        w = jax.random.normal(k1, (cout, cin, KW, KW), jnp.float32) * np.sqrt(2.0 / fan_in)
        b = jax.random.normal(k2, (cout,), jnp.float32) * 0.01
        gamma = 1.0 + 0.1 * jax.random.normal(k3, (cout,), jnp.float32) if has_bn else None
        beta = 0.1 * jax.random.normal(k4, (cout,), jnp.float32) if has_bn else None
        params.append(dict(w=w, b=b, gamma=gamma, beta=beta,
                           stride=stride, has_bn=has_bn, has_act=has_act))
    return params


def reference_forward(x_nchw, params):
    """Pure-JAX f32 reference (lax.conv) for correctness check."""
    x = x_nchw
    for layer in params:
        x = jax.lax.conv_general_dilated(
            x, layer['w'], (layer['stride'],) * 2, [(PAD, PAD), (PAD, PAD)],
            dimension_numbers=('NCHW', 'OIHW', 'NCHW'))
        x = x + layer['b'][None, :, None, None]
        if layer['has_bn']:
            mean = jnp.mean(x, axis=(0, 2, 3), keepdims=True)
            var = jnp.mean((x - mean) ** 2, axis=(0, 2, 3), keepdims=True)
            x = ((x - mean) / jnp.sqrt(var + BN_EPS)
                 * layer['gamma'][None, :, None, None] + layer['beta'][None, :, None, None])
        if layer['has_act']:
            x = jnp.where(x >= 0, x, NEG_SLOPE * x)
    return x


if __name__ == "__main__":
    key = jax.random.PRNGKey(0)
    k_x, k_p = jax.random.split(key)

    INPUT_RGB, DIS_FILTERS, N_LAYERS = 4, 8, 3
    x = jax.random.normal(k_x, (2, INPUT_RGB, 16, 16), jnp.float32)   # NCHW, like PyTorch

    params = init_params(k_p, INPUT_RGB, DIS_FILTERS, N_LAYERS)

    fwd = jax.jit(lambda inp: discriminator_forward(inp, params))
    out = jax.block_until_ready(fwd(x))
    assert out.shape == (2, 1, 5, 5), out.shape

    ref = jax.block_until_ready(reference_forward(x, params))
    # Pallas path uses bf16 MXU inputs with f32 accumulation vs an all-f32 reference, so the
    # tolerance is set accordingly; structural/indexing bugs would produce O(1) errors.
    np.testing.assert_allclose(np.asarray(out), np.asarray(ref), rtol=5e-2, atol=5e-2)

    print("KERNEL_OK")
</pallas_src>

<mosaic_0001>
module attributes {stable_mosaic.version = 11 : i64} {
  func.func @_conv_mm_kernel(%arg0: i32, %arg1: memref<128x64xbf16, #tpu.memory_space<vmem>>, %arg2: memref<64x128xbf16, #tpu.memory_space<vmem>>, %arg3: memref<1x128xf32, #tpu.memory_space<vmem>>, %arg4: memref<128x128xf32, #tpu.memory_space<vmem>>) attributes {dimension_semantics = [#tpu.dimension_semantics<parallel>], iteration_bounds = array<i64: 2>, scalar_prefetch = 0 : i64, scratch_operands = 0 : i64, tpu.core_type = #tpu.core_type<tc>, window_params = [{transform_indices = @transform_0, window_bounds = array<i64: 128, 64>}, {pipeline_mode = #tpu.pipeline_mode<synchronous>, transform_indices = @transform_1, window_bounds = array<i64: 64, 128>}, {pipeline_mode = #tpu.pipeline_mode<synchronous>, transform_indices = @transform_2, window_bounds = array<i64: 1, 128>}, {transform_indices = @transform_3, window_bounds = array<i64: 128, 128>}]} {
    %c0 = arith.constant 0 : index
    %c0_0 = arith.constant 0 : index
    %0 = vector.load %arg1[%c0, %c0_0] : memref<128x64xbf16, #tpu.memory_space<vmem>>, vector<128x64xbf16>
    %c0_1 = arith.constant 0 : index
    %c0_2 = arith.constant 0 : index
    %1 = vector.load %arg2[%c0_1, %c0_2] : memref<64x128xbf16, #tpu.memory_space<vmem>>, vector<64x128xbf16>
    %cst = arith.constant dense<0.000000e+00> : vector<128x128xf32>
    %2 = tpu.matmul %0, %1, %cst {dimension_numbers = #tpu.dot_dimension_numbers<[1], [0], [0], [1], [0, 0, 1, 1], [], []>} : vector<128x64xbf16>, vector<64x128xbf16>, vector<128x128xf32> -> vector<128x128xf32>
    %c0_3 = arith.constant 0 : index
    %c0_4 = arith.constant 0 : index
    %3 = vector.load %arg3[%c0_3, %c0_4] : memref<1x128xf32, #tpu.memory_space<vmem>>, vector<1x128xf32>
    %4 = vector.broadcast %3 : vector<1x128xf32> to vector<128x128xf32>
    %5 = arith.addf %2, %4 : vector<128x128xf32>
    %cst_5 = arith.constant 0.000000e+00 : f32
    %6 = vector.broadcast %cst_5 : f32 to vector<128x128xf32>
    %7 = arith.cmpf oge, %5, %6 : vector<128x128xf32>
    %cst_6 = arith.constant 2.000000e-01 : f32
    %8 = vector.broadcast %cst_6 : f32 to vector<128x128xf32>
    %9 = arith.mulf %8, %5 : vector<128x128xf32>
    %10 = arith.select %7, %5, %9 : vector<128x128xi1>, vector<128x128xf32>
    %c0_7 = arith.constant 0 : index
    %c0_8 = arith.constant 0 : index
    %11 = vector.load %arg4[%c0_7, %c0_8] : memref<128x128xf32, #tpu.memory_space<vmem>>, vector<128x128xf32>
    tpu.vector_store %arg4[%c0_7, %c0_8], %10 {strides = array<i32>} : memref<128x128xf32, #tpu.memory_space<vmem>>, vector<128x128xf32>,
    return
  }
  func.func @transform_0(%arg0: i32) -> (i32, i32) {
    %c0_i32 = arith.constant 0 : i32
    %c0_i32_0 = arith.constant 0 : i32
    return %arg0, %c0_i32 : i32, i32
  }
  func.func @transform_1(%arg0: i32) -> (i32, i32) {
    %c0_i32 = arith.constant 0 : i32
    %c0_i32_0 = arith.constant 0 : i32
    %c0_i32_1 = arith.constant 0 : i32
    return %c0_i32, %c0_i32_0 : i32, i32
  }
  func.func @transform_2(%arg0: i32) -> (i32, i32) {
    %c0_i32 = arith.constant 0 : i32
    %c0_i32_0 = arith.constant 0 : i32
    %c0_i32_1 = arith.constant 0 : i32
    return %c0_i32, %c0_i32_0 : i32, i32
  }
  func.func @transform_3(%arg0: i32) -> (i32, i32) {
    %c0_i32 = arith.constant 0 : i32
    %c0_i32_0 = arith.constant 0 : i32
    return %arg0, %c0_i32 : i32, i32
  }
}

module attributes {stable_mosaic.version = 11 : i64} {
  func.func @_bn_lrelu_kernel(%arg0: i32, %arg1: memref<128x128xf32, #tpu.memory_space<vmem>>, %arg2: memref<1x128xf32, #tpu.memory_space<vmem>>, %arg3: memref<1x128xf32, #tpu.memory_space<vmem>>, %arg4: memref<128x128xf32, #tpu.memory_space<vmem>>) attributes {dimension_semantics = [#tpu.dimension_semantics<parallel>], iteration_bounds = array<i64: 1>, scalar_prefetch = 0 : i64, scratch_operands = 0 : i64, tpu.core_type = #tpu.core_type<tc>, window_params = [{transform_indices = @transform_0, window_bounds = array<i64: 128, 128>}, {pipeline_mode = #tpu.pipeline_mode<synchronous>, transform_indices = @transform_1, window_bounds = array<i64: 1, 128>}, {pipeline_mode = #tpu.pipeline_mode<synchronous>, transform_indices = @transform_2, window_bounds = array<i64: 1, 128>}, {transform_indices = @transform_3, window_bounds = array<i64: 128, 128>}]} {
    %c0 = arith.constant 0 : index
    %c0_0 = arith.constant 0 : index
    %0 = vector.load %arg1[%c0, %c0_0] : memref<128x128xf32, #tpu.memory_space<vmem>>, vector<128x128xf32>
    %c0_1 = arith.constant 0 : index
    %c0_2 = arith.constant 0 : index
    %1 = vector.load %arg2[%c0_1, %c0_2] : memref<1x128xf32, #tpu.memory_space<vmem>>, vector<1x128xf32>
    %2 = vector.broadcast %1 : vector<1x128xf32> to vector<128x128xf32>
    %3 = arith.mulf %0, %2 : vector<128x128xf32>
    %c0_3 = arith.constant 0 : index
    %c0_4 = arith.constant 0 : index
    %4 = vector.load %arg3[%c0_3, %c0_4] : memref<1x128xf32, #tpu.memory_space<vmem>>, vector<1x128xf32>
    %5 = vector.broadcast %4 : vector<1x128xf32> to vector<128x128xf32>
    %6 = arith.addf %3, %5 : vector<128x128xf32>
    %cst = arith.constant 0.000000e+00 : f32
    %7 = vector.broadcast %cst : f32 to vector<128x128xf32>
    %8 = arith.cmpf oge, %6, %7 : vector<128x128xf32>
    %cst_5 = arith.constant 2.000000e-01 : f32
    %9 = vector.broadcast %cst_5 : f32 to vector<128x128xf32>
    %10 = arith.mulf %9, %6 : vector<128x128xf32>
    %11 = arith.select %8, %6, %10 : vector<128x128xi1>, vector<128x128xf32>
    %c0_6 = arith.constant 0 : index
    %c0_7 = arith.constant 0 : index
    %12 = vector.load %arg4[%c0_6, %c0_7] : memref<128x128xf32, #tpu.memory_space<vmem>>, vector<128x128xf32>
    tpu.vector_store %arg4[%c0_6, %c0_7], %11 {strides = array<i32>} : memref<128x128xf32, #tpu.memory_space<vmem>>, vector<128x128xf32>,
    return
  }
  func.func @transform_0(%arg0: i32) -> (i32, i32) {
    %c0_i32 = arith.constant 0 : i32
    %c0_i32_0 = arith.constant 0 : i32
    return %arg0, %c0_i32 : i32, i32
  }
  func.func @transform_1(%arg0: i32) -> (i32, i32) {
    %c0_i32 = arith.constant 0 : i32
    %c0_i32_0 = arith.constant 0 : i32
    %c0_i32_1 = arith.constant 0 : i32
    return %c0_i32, %c0_i32_0 : i32, i32
  }
  func.func @transform_2(%arg0: i32) -> (i32, i32) {
    %c0_i32 = arith.constant 0 : i32
    %c0_i32_0 = arith.constant 0 : i32
    %c0_i32_1 = arith.constant 0 : i32
    return %c0_i32, %c0_i32_0 : i32, i32
  }
  func.func @transform_3(%arg0: i32) -> (i32, i32) {
    %c0_i32 = arith.constant 0 : i32
    %c0_i32_0 = arith.constant 0 : i32
    return %arg0, %c0_i32 : i32, i32
  }
}

module attributes {stable_mosaic.version = 11 : i64} {
  func.func @_conv_mm_kernel(%arg0: i32, %arg1: memref<128x128xbf16, #tpu.memory_space<vmem>>, %arg2: memref<128x128xbf16, #tpu.memory_space<vmem>>, %arg3: memref<1x128xf32, #tpu.memory_space<vmem>>, %arg4: memref<128x128xf32, #tpu.memory_space<vmem>>, %arg5: memref<8x128xf32, #tpu.memory_space<vmem>>) attributes {dimension_semantics = [#tpu.dimension_semantics<parallel>], iteration_bounds = array<i64: 1>, scalar_prefetch = 0 : i64, scratch_operands = 0 : i64, tpu.core_type = #tpu.core_type<tc>, window_params = [{transform_indices = @transform_0, window_bounds = array<i64: 128, 128>}, {pipeline_mode = #tpu.pipeline_mode<synchronous>, transform_indices = @transform_1, window_bounds = array<i64: 128, 128>}, {pipeline_mode = #tpu.pipeline_mode<synchronous>, transform_indices = @transform_2, window_bounds = array<i64: 1, 128>}, {transform_indices = @transform_3, window_bounds = array<i64: 128, 128>}, {transform_indices = @transform_4, window_bounds = array<i64: 8, 128>}]} {
    %c0 = arith.constant 0 : index
    %c0_0 = arith.constant 0 : index
    %0 = vector.load %arg1[%c0, %c0_0] : memref<128x128xbf16, #tpu.memory_space<vmem>>, vector<128x128xbf16>
    %c0_1 = arith.constant 0 : index
    %c0_2 = arith.constant 0 : index
    %1 = vector.load %arg2[%c0_1, %c0_2] : memref<128x128xbf16, #tpu.memory_space<vmem>>, vector<128x128xbf16>
    %cst = arith.constant dense<0.000000e+00> : vector<128x128xf32>
    %2 = tpu.matmul %0, %1, %cst {dimension_numbers = #tpu.dot_dimension_numbers<[1], [0], [0], [1], [0, 0, 1, 1], [], []>} : vector<128x128xbf16>, vector<128x128xbf16>, vector<128x128xf32> -> vector<128x128xf32>
    %c0_3 = arith.constant 0 : index
    %c0_4 = arith.constant 0 : index
    %3 = vector.load %arg3[%c0_3, %c0_4] : memref<1x128xf32, #tpu.memory_space<vmem>>, vector<1x128xf32>
    %4 = vector.broadcast %3 : vector<1x128xf32> to vector<128x128xf32>
    %5 = arith.addf %2, %4 : vector<128x128xf32>
    %c0_5 = arith.constant 0 : index
    %c0_6 = arith.constant 0 : index
    %6 = vector.load %arg4[%c0_5, %c0_6] : memref<128x128xf32, #tpu.memory_space<vmem>>, vector<128x128xf32>
    tpu.vector_store %arg4[%c0_5, %c0_6], %5 {strides = array<i32>} : memref<128x128xf32, #tpu.memory_space<vmem>>, vector<128x128xf32>,
    %cst_7 = arith.constant dense<0.000000e+00> : vector<128xf32>
    %7 = vector.multi_reduction <add>, %5, %cst_7 [0] : vector<128x128xf32> to vector<128xf32>
    %8 = vector.shape_cast %7 : vector<128xf32> to vector<1x128xf32>
    %9 = arith.mulf %5, %5 : vector<128x128xf32>
    %cst_8 = arith.constant dense<0.000000e+00> : vector<128xf32>
    %10 = vector.multi_reduction <add>, %9, %cst_8 [0] : vector<128x128xf32> to vector<128xf32>
    %11 = vector.shape_cast %10 : vector<128xf32> to vector<1x128xf32>
    %12 = tpu.iota {dimensions = array<i32: 0>} : vector<8x128xi32>
    %c0_i32 = arith.constant 0 : i32
    %13 = vector.broadcast %c0_i32 : i32 to vector<8x128xi32>
    %14 = arith.cmpi eq, %12, %13 : vector<8x128xi32>
    %cst_9 = arith.constant 0.000000e+00 : f32
    %15 = vector.shape_cast %8 : vector<1x128xf32> to vector<1x128xf32>
    %16 = vector.broadcast %15 : vector<1x128xf32> to vector<8x128xf32>
    %17 = vector.broadcast %cst_9 : f32 to vector<8x128xf32>
    %18 = arith.select %14, %16, %17 : vector<8x128xi1>, vector<8x128xf32>
    %c1_i32 = arith.constant 1 : i32
    %19 = vector.broadcast %c1_i32 : i32 to vector<8x128xi32>
    %20 = arith.cmpi eq, %12, %19 : vector<8x128xi32>
    %cst_10 = arith.constant 0.000000e+00 : f32
    %21 = vector.shape_cast %11 : vector<1x128xf32> to vector<1x128xf32>
    %22 = vector.broadcast %21 : vector<1x128xf32> to vector<8x128xf32>
    %23 = vector.broadcast %cst_10 : f32 to vector<8x128xf32>
    %24 = arith.select %20, %22, %23 : vector<8x128xi1>, vector<8x128xf32>
    %25 = arith.addf %18, %24 : vector<8x128xf32>
    %c0_11 = arith.constant 0 : index
    %c0_12 = arith.constant 0 : index
    %26 = vector.load %arg5[%c0_11, %c0_12] : memref<8x128xf32, #tpu.memory_space<vmem>>, vector<8x128xf32>
    tpu.vector_store %arg5[%c0_11, %c0_12], %25 {strides = array<i32>} : memref<8x128xf32, #tpu.memory_space<vmem>>, vector<8x128xf32>,
    return
  }
  func.func @transform_0(%arg0: i32) -> (i32, i32) {
    %c0_i32 = arith.constant 0 : i32
    %c0_i32_0 = arith.constant 0 : i32
    return %arg0, %c0_i32 : i32, i32
  }
  func.func @transform_1(%arg0: i32) -> (i32, i32) {
    %c0_i32 = arith.constant 0 : i32
    %c0_i32_0 = arith.constant 0 : i32
    %c0_i32_1 = arith.constant 0 : i32
    return %c0_i32, %c0_i32_0 : i32, i32
  }
  func.func @transform_2(%arg0: i32) -> (i32, i32) {
    %c0_i32 = arith.constant 0 : i32
    %c0_i32_0 = arith.constant 0 : i32
    %c0_i32_1 = arith.constant 0 : i32
    return %c0_i32, %c0_i32_0 : i32, i32
  }
  func.func @transform_3(%arg0: i32) -> (i32, i32) {
    %c0_i32 = arith.constant 0 : i32
    %c0_i32_0 = arith.constant 0 : i32
    return %arg0, %c0_i32 : i32, i32
  }
  func.func @transform_4(%arg0: i32) -> (i32, i32) {
    %c0_i32 = arith.constant 0 : i32
    %c0_i32_0 = arith.constant 0 : i32
    return %arg0, %c0_i32 : i32, i32
  }
}

module attributes {stable_mosaic.version = 11 : i64} {
  func.func @_conv_mm_kernel(%arg0: i32, %arg1: memref<128x256xbf16, #tpu.memory_space<vmem>>, %arg2: memref<256x128xbf16, #tpu.memory_space<vmem>>, %arg3: memref<1x128xf32, #tpu.memory_space<vmem>>, %arg4: memref<128x128xf32, #tpu.memory_space<vmem>>, %arg5: memref<8x128xf32, #tpu.memory_space<vmem>>) attributes {dimension_semantics = [#tpu.dimension_semantics<parallel>], iteration_bounds = array<i64: 1>, scalar_prefetch = 0 : i64, scratch_operands = 0 : i64, tpu.core_type = #tpu.core_type<tc>, window_params = [{transform_indices = @transform_0, window_bounds = array<i64: 128, 256>}, {pipeline_mode = #tpu.pipeline_mode<synchronous>, transform_indices = @transform_1, window_bounds = array<i64: 256, 128>}, {pipeline_mode = #tpu.pipeline_mode<synchronous>, transform_indices = @transform_2, window_bounds = array<i64: 1, 128>}, {transform_indices = @transform_3, window_bounds = array<i64: 128, 128>}, {transform_indices = @transform_4, window_bounds = array<i64: 8, 128>}]} {
    %c0 = arith.constant 0 : index
    %c0_0 = arith.constant 0 : index
    %0 = vector.load %arg1[%c0, %c0_0] : memref<128x256xbf16, #tpu.memory_space<vmem>>, vector<128x256xbf16>
    %c0_1 = arith.constant 0 : index
    %c0_2 = arith.constant 0 : index
    %1 = vector.load %arg2[%c0_1, %c0_2] : memref<256x128xbf16, #tpu.memory_space<vmem>>, vector<256x128xbf16>
    %cst = arith.constant dense<0.000000e+00> : vector<128x128xf32>
    %2 = tpu.matmul %0, %1, %cst {dimension_numbers = #tpu.dot_dimension_numbers<[1], [0], [0], [1], [0, 0, 1, 1], [], []>} : vector<128x256xbf16>, vector<256x128xbf16>, vector<128x128xf32> -> vector<128x128xf32>
    %c0_3 = arith.constant 0 : index
    %c0_4 = arith.constant 0 : index
    %3 = vector.load %arg3[%c0_3, %c0_4] : memref<1x128xf32, #tpu.memory_space<vmem>>, vector<1x128xf32>
    %4 = vector.broadcast %3 : vector<1x128xf32> to vector<128x128xf32>
    %5 = arith.addf %2, %4 : vector<128x128xf32>
    %c0_5 = arith.constant 0 : index
    %c0_6 = arith.constant 0 : index
    %6 = vector.load %arg4[%c0_5, %c0_6] : memref<128x128xf32, #tpu.memory_space<vmem>>, vector<128x128xf32>
    tpu.vector_store %arg4[%c0_5, %c0_6], %5 {strides = array<i32>} : memref<128x128xf32, #tpu.memory_space<vmem>>, vector<128x128xf32>,
    %cst_7 = arith.constant dense<0.000000e+00> : vector<128xf32>
    %7 = vector.multi_reduction <add>, %5, %cst_7 [0] : vector<128x128xf32> to vector<128xf32>
    %8 = vector.shape_cast %7 : vector<128xf32> to vector<1x128xf32>
    %9 = arith.mulf %5, %5 : vector<128x128xf32>
    %cst_8 = arith.constant dense<0.000000e+00> : vector<128xf32>
    %10 = vector.multi_reduction <add>, %9, %cst_8 [0] : vector<128x128xf32> to vector<128xf32>
    %11 = vector.shape_cast %10 : vector<128xf32> to vector<1x128xf32>
    %12 = tpu.iota {dimensions = array<i32: 0>} : vector<8x128xi32>
    %c0_i32 = arith.constant 0 : i32
    %13 = vector.broadcast %c0_i32 : i32 to vector<8x128xi32>
    %14 = arith.cmpi eq, %12, %13 : vector<8x128xi32>
    %cst_9 = arith.constant 0.000000e+00 : f32
    %15 = vector.shape_cast %8 : vector<1x128xf32> to vector<1x128xf32>
    %16 = vector.broadcast %15 : vector<1x128xf32> to vector<8x128xf32>
    %17 = vector.broadcast %cst_9 : f32 to vector<8x128xf32>
    %18 = arith.select %14, %16, %17 : vector<8x128xi1>, vector<8x128xf32>
    %c1_i32 = arith.constant 1 : i32
    %19 = vector.broadcast %c1_i32 : i32 to vector<8x128xi32>
    %20 = arith.cmpi eq, %12, %19 : vector<8x128xi32>
    %cst_10 = arith.constant 0.000000e+00 : f32
    %21 = vector.shape_cast %11 : vector<1x128xf32> to vector<1x128xf32>
    %22 = vector.broadcast %21 : vector<1x128xf32> to vector<8x128xf32>
    %23 = vector.broadcast %cst_10 : f32 to vector<8x128xf32>
    %24 = arith.select %20, %22, %23 : vector<8x128xi1>, vector<8x128xf32>
    %25 = arith.addf %18, %24 : vector<8x128xf32>
    %c0_11 = arith.constant 0 : index
    %c0_12 = arith.constant 0 : index
    %26 = vector.load %arg5[%c0_11, %c0_12] : memref<8x128xf32, #tpu.memory_space<vmem>>, vector<8x128xf32>
    tpu.vector_store %arg5[%c0_11, %c0_12], %25 {strides = array<i32>} : memref<8x128xf32, #tpu.memory_space<vmem>>, vector<8x128xf32>,
    return
  }
  func.func @transform_0(%arg0: i32) -> (i32, i32) {
    %c0_i32 = arith.constant 0 : i32
    %c0_i32_0 = arith.constant 0 : i32
    return %arg0, %c0_i32 : i32, i32
  }
  func.func @transform_1(%arg0: i32) -> (i32, i32) {
    %c0_i32 = arith.constant 0 : i32
    %c0_i32_0 = arith.constant 0 : i32
    %c0_i32_1 = arith.constant 0 : i32
    return %c0_i32, %c0_i32_0 : i32, i32
  }
  func.func @transform_2(%arg0: i32) -> (i32, i32) {
    %c0_i32 = arith.constant 0 : i32
    %c0_i32_0 = arith.constant 0 : i32
    %c0_i32_1 = arith.constant 0 : i32
    return %c0_i32, %c0_i32_0 : i32, i32
  }
  func.func @transform_3(%arg0: i32) -> (i32, i32) {
    %c0_i32 = arith.constant 0 : i32
    %c0_i32_0 = arith.constant 0 : i32
    return %arg0, %c0_i32 : i32, i32
  }
  func.func @transform_4(%arg0: i32) -> (i32, i32) {
    %c0_i32 = arith.constant 0 : i32
    %c0_i32_0 = arith.constant 0 : i32
    return %arg0, %c0_i32 : i32, i32
  }
}

module attributes {stable_mosaic.version = 11 : i64} {
  func.func @_conv_mm_kernel(%arg0: i32, %arg1: memref<128x512xbf16, #tpu.memory_space<vmem>>, %arg2: memref<512x128xbf16, #tpu.memory_space<vmem>>, %arg3: memref<1x128xf32, #tpu.memory_space<vmem>>, %arg4: memref<128x128xf32, #tpu.memory_space<vmem>>, %arg5: memref<8x128xf32, #tpu.memory_space<vmem>>) attributes {dimension_semantics = [#tpu.dimension_semantics<parallel>], iteration_bounds = array<i64: 1>, scalar_prefetch = 0 : i64, scratch_operands = 0 : i64, tpu.core_type = #tpu.core_type<tc>, window_params = [{transform_indices = @transform_0, window_bounds = array<i64: 128, 512>}, {pipeline_mode = #tpu.pipeline_mode<synchronous>, transform_indices = @transform_1, window_bounds = array<i64: 512, 128>}, {pipeline_mode = #tpu.pipeline_mode<synchronous>, transform_indices = @transform_2, window_bounds = array<i64: 1, 128>}, {transform_indices = @transform_3, window_bounds = array<i64: 128, 128>}, {transform_indices = @transform_4, window_bounds = array<i64: 8, 128>}]} {
    %c0 = arith.constant 0 : index
    %c0_0 = arith.constant 0 : index
    %0 = vector.load %arg1[%c0, %c0_0] : memref<128x512xbf16, #tpu.memory_space<vmem>>, vector<128x512xbf16>
    %c0_1 = arith.constant 0 : index
    %c0_2 = arith.constant 0 : index
    %1 = vector.load %arg2[%c0_1, %c0_2] : memref<512x128xbf16, #tpu.memory_space<vmem>>, vector<512x128xbf16>
    %cst = arith.constant dense<0.000000e+00> : vector<128x128xf32>
    %2 = tpu.matmul %0, %1, %cst {dimension_numbers = #tpu.dot_dimension_numbers<[1], [0], [0], [1], [0, 0, 1, 1], [], []>} : vector<128x512xbf16>, vector<512x128xbf16>, vector<128x128xf32> -> vector<128x128xf32>
    %c0_3 = arith.constant 0 : index
    %c0_4 = arith.constant 0 : index
    %3 = vector.load %arg3[%c0_3, %c0_4] : memref<1x128xf32, #tpu.memory_space<vmem>>, vector<1x128xf32>
    %4 = vector.broadcast %3 : vector<1x128xf32> to vector<128x128xf32>
    %5 = arith.addf %2, %4 : vector<128x128xf32>
    %c0_5 = arith.constant 0 : index
    %c0_6 = arith.constant 0 : index
    %6 = vector.load %arg4[%c0_5, %c0_6] : memref<128x128xf32, #tpu.memory_space<vmem>>, vector<128x128xf32>
    tpu.vector_store %arg4[%c0_5, %c0_6], %5 {strides = array<i32>} : memref<128x128xf32, #tpu.memory_space<vmem>>, vector<128x128xf32>,
    %cst_7 = arith.constant dense<0.000000e+00> : vector<128xf32>
    %7 = vector.multi_reduction <add>, %5, %cst_7 [0] : vector<128x128xf32> to vector<128xf32>
    %8 = vector.shape_cast %7 : vector<128xf32> to vector<1x128xf32>
    %9 = arith.mulf %5, %5 : vector<128x128xf32>
    %cst_8 = arith.constant dense<0.000000e+00> : vector<128xf32>
    %10 = vector.multi_reduction <add>, %9, %cst_8 [0] : vector<128x128xf32> to vector<128xf32>
    %11 = vector.shape_cast %10 : vector<128xf32> to vector<1x128xf32>
    %12 = tpu.iota {dimensions = array<i32: 0>} : vector<8x128xi32>
    %c0_i32 = arith.constant 0 : i32
    %13 = vector.broadcast %c0_i32 : i32 to vector<8x128xi32>
    %14 = arith.cmpi eq, %12, %13 : vector<8x128xi32>
    %cst_9 = arith.constant 0.000000e+00 : f32
    %15 = vector.shape_cast %8 : vector<1x128xf32> to vector<1x128xf32>
    %16 = vector.broadcast %15 : vector<1x128xf32> to vector<8x128xf32>
    %17 = vector.broadcast %cst_9 : f32 to vector<8x128xf32>
    %18 = arith.select %14, %16, %17 : vector<8x128xi1>, vector<8x128xf32>
    %c1_i32 = arith.constant 1 : i32
    %19 = vector.broadcast %c1_i32 : i32 to vector<8x128xi32>
    %20 = arith.cmpi eq, %12, %19 : vector<8x128xi32>
    %cst_10 = arith.constant 0.000000e+00 : f32
    %21 = vector.shape_cast %11 : vector<1x128xf32> to vector<1x128xf32>
    %22 = vector.broadcast %21 : vector<1x128xf32> to vector<8x128xf32>
    %23 = vector.broadcast %cst_10 : f32 to vector<8x128xf32>
    %24 = arith.select %20, %22, %23 : vector<8x128xi1>, vector<8x128xf32>
    %25 = arith.addf %18, %24 : vector<8x128xf32>
    %c0_11 = arith.constant 0 : index
    %c0_12 = arith.constant 0 : index
    %26 = vector.load %arg5[%c0_11, %c0_12] : memref<8x128xf32, #tpu.memory_space<vmem>>, vector<8x128xf32>
    tpu.vector_store %arg5[%c0_11, %c0_12], %25 {strides = array<i32>} : memref<8x128xf32, #tpu.memory_space<vmem>>, vector<8x128xf32>,
    return
  }
  func.func @transform_0(%arg0: i32) -> (i32, i32) {
    %c0_i32 = arith.constant 0 : i32
    %c0_i32_0 = arith.constant 0 : i32
    return %arg0, %c0_i32 : i32, i32
  }
  func.func @transform_1(%arg0: i32) -> (i32, i32) {
    %c0_i32 = arith.constant 0 : i32
    %c0_i32_0 = arith.constant 0 : i32
    %c0_i32_1 = arith.constant 0 : i32
    return %c0_i32, %c0_i32_0 : i32, i32
  }
  func.func @transform_2(%arg0: i32) -> (i32, i32) {
    %c0_i32 = arith.constant 0 : i32
    %c0_i32_0 = arith.constant 0 : i32
    %c0_i32_1 = arith.constant 0 : i32
    return %c0_i32, %c0_i32_0 : i32, i32
  }
  func.func @transform_3(%arg0: i32) -> (i32, i32) {
    %c0_i32 = arith.constant 0 : i32
    %c0_i32_0 = arith.constant 0 : i32
    return %arg0, %c0_i32 : i32, i32
  }
  func.func @transform_4(%arg0: i32) -> (i32, i32) {
    %c0_i32 = arith.constant 0 : i32
    %c0_i32_0 = arith.constant 0 : i32
    return %arg0, %c0_i32 : i32, i32
  }
}

module attributes {stable_mosaic.version = 11 : i64} {
  func.func @_conv_mm_kernel(%arg0: i32, %arg1: memref<128x1024xbf16, #tpu.memory_space<vmem>>, %arg2: memref<1024x128xbf16, #tpu.memory_space<vmem>>, %arg3: memref<1x128xf32, #tpu.memory_space<vmem>>, %arg4: memref<128x128xf32, #tpu.memory_space<vmem>>) attributes {dimension_semantics = [#tpu.dimension_semantics<parallel>], iteration_bounds = array<i64: 1>, scalar_prefetch = 0 : i64, scratch_operands = 0 : i64, tpu.core_type = #tpu.core_type<tc>, window_params = [{transform_indices = @transform_0, window_bounds = array<i64: 128, 1024>}, {pipeline_mode = #tpu.pipeline_mode<synchronous>, transform_indices = @transform_1, window_bounds = array<i64: 1024, 128>}, {pipeline_mode = #tpu.pipeline_mode<synchronous>, transform_indices = @transform_2, window_bounds = array<i64: 1, 128>}, {transform_indices = @transform_3, window_bounds = array<i64: 128, 128>}]} {
    %c0 = arith.constant 0 : index
    %c0_0 = arith.constant 0 : index
    %0 = vector.load %arg1[%c0, %c0_0] : memref<128x1024xbf16, #tpu.memory_space<vmem>>, vector<128x1024xbf16>
    %c0_1 = arith.constant 0 : index
    %c0_2 = arith.constant 0 : index
    %1 = vector.load %arg2[%c0_1, %c0_2] : memref<1024x128xbf16, #tpu.memory_space<vmem>>, vector<1024x128xbf16>
    %cst = arith.constant dense<0.000000e+00> : vector<128x128xf32>
    %2 = tpu.matmul %0, %1, %cst {dimension_numbers = #tpu.dot_dimension_numbers<[1], [0], [0], [1], [0, 0, 1, 1], [], []>} : vector<128x1024xbf16>, vector<1024x128xbf16>, vector<128x128xf32> -> vector<128x128xf32>
    %c0_3 = arith.constant 0 : index
    %c0_4 = arith.constant 0 : index
    %3 = vector.load %arg3[%c0_3, %c0_4] : memref<1x128xf32, #tpu.memory_space<vmem>>, vector<1x128xf32>
    %4 = vector.broadcast %3 : vector<1x128xf32> to vector<128x128xf32>
    %5 = arith.addf %2, %4 : vector<128x128xf32>
    %c0_5 = arith.constant 0 : index
    %c0_6 = arith.constant 0 : index
    %6 = vector.load %arg4[%c0_5, %c0_6] : memref<128x128xf32, #tpu.memory_space<vmem>>, vector<128x128xf32>
    tpu.vector_store %arg4[%c0_5, %c0_6], %5 {strides = array<i32>} : memref<128x128xf32, #tpu.memory_space<vmem>>, vector<128x128xf32>,
    return
  }
  func.func @transform_0(%arg0: i32) -> (i32, i32) {
    %c0_i32 = arith.constant 0 : i32
    %c0_i32_0 = arith.constant 0 : i32
    return %arg0, %c0_i32 : i32, i32
  }
  func.func @transform_1(%arg0: i32) -> (i32, i32) {
    %c0_i32 = arith.constant 0 : i32
    %c0_i32_0 = arith.constant 0 : i32
    %c0_i32_1 = arith.constant 0 : i32
    return %c0_i32, %c0_i32_0 : i32, i32
  }
  func.func @transform_2(%arg0: i32) -> (i32, i32) {
    %c0_i32 = arith.constant 0 : i32
    %c0_i32_0 = arith.constant 0 : i32
    %c0_i32_1 = arith.constant 0 : i32
    return %c0_i32, %c0_i32_0 : i32, i32
  }
  func.func @transform_3(%arg0: i32) -> (i32, i32) {
    %c0_i32 = arith.constant 0 : i32
    %c0_i32_0 = arith.constant 0 : i32
    return %arg0, %c0_i32 : i32, i32
  }
}

</mosaic_0001>

<llo_original>
// kernel: _lambda_.8
$region0: #{_lambda_.8}
  #allocation0 [shape = 'u32[]', space=smem, size = 0x4, offset = 0x4, fixed_abs, tag = 'smem constant byte address 0x4 - core index']
  #allocation1 [shape = 'u32[144,128]{1,0:T(1,128)}', space=vmem, size = 0x12000, scoped, tag = 'internal scratch']
  %s0 = inlined_call_operand.vmem [shape: bf16[256,64], index: 0, kind: input, shape index: {}]
  %s1 = inlined_call_operand.vmem [shape: bf16[64,128], index: 1, kind: input, shape index: {}]
  %s2 = inlined_call_operand.vmem [shape: f32[1,128], index: 2, kind: input, shape index: {}]
  %s3 = inlined_call_operand.vmem [shape: f32[256,128], index: 3, kind: output, shape index: {}]
  %s4 = sld [smem:[#allocation0]]
  $region45: #{_lambda_.8} parent=0
    _
  %s6 = ssub.s32 1, %s4
  %s7 = scalar_select 0, %s6, %s4
  loop: start=0, step=1, limit=4
  $region2: #{_lambda_.8} parent=0 // loop_pre_header
    _
  $region3: #{_lambda_.8} parent=0 // loop_header
    %s9 = sphi 0, %s13
    %p10 = scmp.ge.s32.totalorder %s9, 4
    %s19 = sphi 0, %s21
    %s22 = sphi 0, %s19
    %s23 = sphi 0, %s22
    %s39 = sphi 0, %s23
    %s43 = sphi 0, %s43
    %s45 = sphi 0, %s43
    %s46 = sphi 0, %s45
    %s60 = sphi 0, %s46
    %s64 = sphi 0, %s64
    %s66 = sphi 0, %s64
    %s67 = sphi 0, %s66
    %s81 = sphi 0, %s67
    %s87 = sphi 0, %s89
    %s90 = sphi 0, %s87
    %s91 = sphi 0, %s90
    %s107 = sphi 0, %s91
  $region4: #{_lambda_.8} parent=0 // loop_header_branch
    %12 = sbr.rel (%p10) target = $region8
  $region5: #{_lambda_.8} parent=0 // loop_body
    %s14 = ssub.s32 %s9, 1
    %s15 = ssub.s32 %s9, 2
    %s16 = sadd.s32 %s9, 1
    %s17 = ssub.s32 %s9, %s16
    %p18 = scmp.eq.s32.totalorder %s17, 0
    %s20 = sadd.s32 %s19, 1
    %s21 = scalar_select %p18, %s19, %s20
    %p24 = pneg %p18
    %p25 = scmp.eq.s32.totalorder %s9, 1
    %p26 = por %p24, %p25
    %p27 = scmp.ne.s32.totalorder %s19, %s22
    %p28 = scmp.eq.s32.totalorder %s9, 0
    %p29 = por %p27, %p28
    %p30 = scmp.ne.s32.totalorder %s19, %s22
    %p31 = scmp.eq.s32.totalorder %s14, 1
    %p32 = por %p30, %p31
    %p33 = scmp.ne.s32.totalorder %s22, %s23
    %p34 = scmp.eq.s32.totalorder %s14, 0
    %p35 = por %p33, %p34
    %p36 = scmp.ne.s32.totalorder %s22, %s23
    %p37 = scmp.eq.s32.totalorder %s15, 1
    %p38 = por %p36, %p37
    %p40 = scmp.ne.s32.totalorder %s23, %s39
    %p41 = scmp.eq.s32.totalorder %s15, 0
    %p42 = por %p40, %p41
    %s44 = sadd.s32 %s43, 1
    %p47 = scmp.eq.s32.totalorder %s9, 1
    %p48 = scmp.ne.s32.totalorder %s43, %s45
    %p49 = scmp.eq.s32.totalorder %s9, 0
    %p50 = por %p48, %p49
    %p51 = scmp.ne.s32.totalorder %s43, %s45
    %p52 = scmp.eq.s32.totalorder %s14, 1
    %p53 = por %p51, %p52
    %p54 = scmp.ne.s32.totalorder %s45, %s46
    %p55 = scmp.eq.s32.totalorder %s14, 0
    %p56 = por %p54, %p55
    %p57 = scmp.ne.s32.totalorder %s45, %s46
    %p58 = scmp.eq.s32.totalorder %s15, 1
    %p59 = por %p57, %p58
    %p61 = scmp.ne.s32.totalorder %s46, %s60
    %p62 = scmp.eq.s32.totalorder %s15, 0
    %p63 = por %p61, %p62
    %s65 = sadd.s32 %s64, 1
    %p68 = scmp.eq.s32.totalorder %s9, 1
    %p69 = scmp.ne.s32.totalorder %s64, %s66
    %p70 = scmp.eq.s32.totalorder %s9, 0
    %p71 = por %p69, %p70
    %p72 = scmp.ne.s32.totalorder %s64, %s66
    %p73 = scmp.eq.s32.totalorder %s14, 1
    %p74 = por %p72, %p73
    %p75 = scmp.ne.s32.totalorder %s66, %s67
    %p76 = scmp.eq.s32.totalorder %s14, 0
    %p77 = por %p75, %p76
    %p78 = scmp.ne.s32.totalorder %s66, %s67
    %p79 = scmp.eq.s32.totalorder %s15, 1
    %p80 = por %p78, %p79
    %p82 = scmp.ne.s32.totalorder %s67, %s81
    %p83 = scmp.eq.s32.totalorder %s15, 0
    %p84 = por %p82, %p83
    %s85 = ssub.s32 %s9, %s16
    %p86 = scmp.eq.s32.totalorder %s85, 0
    %s88 = sadd.s32 %s87, 1
    %s89 = scalar_select %p86, %s87, %s88
    %p92 = pneg %p86
    %p93 = scmp.eq.s32.totalorder %s9, 1
    %p94 = por %p92, %p93
    %p95 = scmp.ne.s32.totalorder %s87, %s90
    %p96 = scmp.eq.s32.totalorder %s9, 0
    %p97 = por %p95, %p96
    %p98 = scmp.ne.s32.totalorder %s87, %s90
    %p99 = scmp.eq.s32.totalorder %s14, 1
    %p100 = por %p98, %p99
    %p101 = scmp.ne.s32.totalorder %s90, %s91
    %p102 = scmp.eq.s32.totalorder %s14, 0
    %p103 = por %p101, %p102
    %p104 = scmp.ne.s32.totalorder %s90, %s91
    %p105 = scmp.eq.s32.totalorder %s15, 1
    %p106 = por %p104, %p105
    %p108 = scmp.ne.s32.totalorder %s91, %s107
    %p109 = scmp.eq.s32.totalorder %s15, 0
    %p110 = por %p108, %p109
    %p111 = scmp.le.s32.totalorder 1, %s9
    %p112 = scmp.lt.s32.totalorder %s9, 3
    %p113 = pnand %p111, %p112
    %p114 = pneg %p113
    // Predicated region
    $region9: #{_lambda_.8} parent=5 // pred_check
      _
    $region10: #{_lambda_.8} parent=5 // pred_check_branch
      %116 = sbr.rel (%p113) target = $region12
    $region11: #{_lambda_.8} parent=5 // pred_region
      %s117 = ssub.s32 %s9, 1
      // Predicated region
      $region13: #{_lambda_.8} parent=11 // pred_check
        %p118 = pneg %p56
      $region14: #{_lambda_.8} parent=11 // pred_check_branch
        %120 = sbr.rel (%p118) target = $region16
      $region15: #{_lambda_.8} parent=11 // pred_region
        _
      $region16: #{_lambda_.8} parent=11 // pred_fallthru
        _
      // Predicated region
      $region17: #{_lambda_.8} parent=11 // pred_check
        %p121 = pneg %p77
      $region18: #{_lambda_.8} parent=11 // pred_check_branch
        %123 = sbr.rel (%p121) target = $region20
      $region19: #{_lambda_.8} parent=11 // pred_region
        _
      $region20: #{_lambda_.8} parent=11 // pred_fallthru
        _
    $region12: #{_lambda_.8} parent=5 // pred_fallthru
      _
    %p124 = scmp.lt.s32.totalorder %s9, 2
    // Predicated region
    $region21: #{_lambda_.8} parent=5 // pred_check
      %p125 = pneg %p124
    $region22: #{_lambda_.8} parent=5 // pred_check_branch
      %127 = sbr.rel (%p125) target = $region24
    $region23: #{_lambda_.8} parent=5 // pred_region
      // Predicated region
      $region25: #{_lambda_.8} parent=23 // pred_check
        %p128 = pneg %p29
      $region26: #{_lambda_.8} parent=23 // pred_check_branch
        %130 = sbr.rel (%p128) target = $region28
      $region27: #{_lambda_.8} parent=23 // pred_region
        %s131 = smul.u32 16, %s9
        %p132 = scmp.lt.s32.totalorder %s131, 31
        %s133 = scalar_select %p132, %s131, 31
        %s134 = smul.addr %s133, 4
        %s135 = scalar_lea.vmem %s0, %s134
        %s136 = smul.u32 16, %s9
      $region28: #{_lambda_.8} parent=23 // pred_fallthru
        _
    $region24: #{_lambda_.8} parent=5 // pred_fallthru
      _
    %p137 = scmp.le.s32.totalorder 1, %s9
    %p138 = scmp.lt.s32.totalorder %s9, 3
    %p139 = pnand %p137, %p138
    %p140 = pneg %p139
    // Predicated region
    $region29: #{_lambda_.8} parent=5 // pred_check
      _
    $region30: #{_lambda_.8} parent=5 // pred_check_branch
      %142 = sbr.rel (%p139) target = $region32
    $region31: #{_lambda_.8} parent=5 // pred_region
      %s143 = ssub.s32 %s9, 1
      %s144 = smul.u32 16, %s14
      %p145 = scmp.lt.s32.totalorder %s144, 31
      %s146 = scalar_select %p145, %s144, 31
      %s147 = smul.addr %s146, 4
      %s148 = scalar_lea.vmem %s0, %s147
      %p149 = pneg %p35
      %p150 = pneg %p32
      %p151 = pneg %p56
      %p152 = pneg %p53
      %p153 = pneg %p77
      %p154 = pneg %p74
      %p155 = pneg %p103
      %p156 = pneg %p100
      %s157 = smul.u32 16, %s14
      %p158 = scmp.lt.s32.totalorder %s157, 31
      %s159 = scalar_select %p158, %s157, 31
      %s160 = smul.addr %s159, 8
      %s161 = scalar_lea.vmem %s3, %s160
      %s162 = smul.u32 16, %s14
      %p163 = scmp.lt.s32.totalorder %s162, 31
      %s164 = scalar_select %p163, %s162, 31
      %s165 = smul.addr %s164, 4
      %s166 = scalar_lea.vmem %s0, %s165
      %s167 = smul.u32 16, %s14
      %s168 = smul.u32 16, %s14
      %p169 = scmp.lt.s32.totalorder %s168, 31
      %s170 = scalar_select %p169, %s168, 31
      %s171 = smul.addr %s170, 8
      %s172 = scalar_lea.vmem %s3, %s171
      %s173 = smul.u32 16, %s14
      %v175 = vld [vmem:[%s166] sm:$0xf]
      %v176 = vld [vmem:[%s166 + $0x4] sm:$0xf]
      %v177 = vld [vmem:[%s166 + $0x8] sm:$0xf]
      %v178 = vld [vmem:[%s166 + $0xc] sm:$0xf]
      %v179 = vld [vmem:[%s166 + $0x10] sm:$0xf]
      %v180 = vld [vmem:[%s166 + $0x14] sm:$0xf]
      %v181 = vld [vmem:[%s166 + $0x18] sm:$0xf]
      %v182 = vld [vmem:[%s166 + $0x1c] sm:$0xf]
      %v183 = vld [vmem:[%s166 + $0x20] sm:$0xf]
      %v184 = vld [vmem:[%s166 + $0x24] sm:$0xf]
      %v185 = vld [vmem:[%s166 + $0x28] sm:$0xf]
      %v186 = vld [vmem:[%s166 + $0x2c] sm:$0xf]
      %v187 = vld [vmem:[%s166 + $0x30] sm:$0xf]
      %v188 = vld [vmem:[%s166 + $0x34] sm:$0xf]
      %v189 = vld [vmem:[%s166 + $0x38] sm:$0xf]
      %v190 = vld [vmem:[%s166 + $0x3c] sm:$0xf]
      %v191 = vld [vmem:[%s1] sm:$0xf]
      %v192 = vld [vmem:[%s1 + $0x4] sm:$0xf]
      %v193 = vld [vmem:[%s1 + $0x8] sm:$0xf]
      %v194 = vld [vmem:[%s1 + $0xc] sm:$0xf]
      %v195 = vld [vmem:[%s1 + $0x10] sm:$0xf]
      %v196 = vld [vmem:[%s1 + $0x14] sm:$0xf]
      %v197 = vld [vmem:[%s1 + $0x18] sm:$0xf]
      %v198 = vld [vmem:[%s1 + $0x1c] sm:$0xf]
      %v199 = vld [vmem:[%s2] sm:$0x1]
      %v201 = vlaneseq
      %v202 = vshrl.u32 %v201, 7
      %v203 = vsub.s32 0, %v202
      %v204 = vrot.slane %v199, %v203
      %v222 = vunpack.c.l.b16 %v175
      %v223 = vunpack.c.l.b16 %v176
      %v224 = vunpack.c.l.b16 %v177
      %v225 = vunpack.c.l.b16 %v178
      %v226 = vunpack.c.l.b16 %v179
      %v227 = vunpack.c.l.b16 %v180
      %v228 = vunpack.c.l.b16 %v181
      %v229 = vunpack.c.l.b16 %v182
      %v230 = vunpack.c.l.b16 %v183
      %v231 = vunpack.c.l.b16 %v184
      %v232 = vunpack.c.l.b16 %v185
      %v233 = vunpack.c.l.b16 %v186
      %v234 = vunpack.c.l.b16 %v187
      %v235 = vunpack.c.l.b16 %v188
      %v236 = vunpack.c.l.b16 %v189
      %v237 = vunpack.c.l.b16 %v190
      %v238 = vpack.c.b16 %v223, %v222
      %v239 = vpack.c.b16 %v225, %v224
      %v240 = vpack.c.b16 %v227, %v226
      %v241 = vpack.c.b16 %v229, %v228
      %v242 = vpack.c.b16 %v231, %v230
      %v243 = vpack.c.b16 %v233, %v232
      %v244 = vpack.c.b16 %v235, %v234
      %v245 = vpack.c.b16 %v237, %v236
      %v254 = vunpack.c.l.b16 %v191
      %v255 = vunpack.c.l.b16 %v192
      %v256 = vunpack.c.l.b16 %v193
      %v257 = vunpack.c.l.b16 %v194
      %v258 = vunpack.c.l.b16 %v195
      %v259 = vunpack.c.l.b16 %v196
      %v260 = vunpack.c.l.b16 %v197
      %v261 = vunpack.c.l.b16 %v198
      %v262 = vpack.c.b16 %v255, %v254
      %v263 = vpack.c.b16 %v257, %v256
      %v264 = vpack.c.b16 %v259, %v258
      %v265 = vpack.c.b16 %v261, %v260
      %vm270 = vcmask 523264
      %v272 = vsel %vm270, %v238, 0
      %v275 = vsel %vm270, %v239, 0
      %v278 = vsel %vm270, %v240, 0
      %v281 = vsel %vm270, %v241, 0
      %v284 = vsel %vm270, %v242, 0
      %v287 = vsel %vm270, %v243, 0
      %v290 = vsel %vm270, %v244, 0
      %v293 = vsel %vm270, %v245, 0
      %295 = vmatprep.subr.bf16.mxu0 0
      %296 = vmatpush1.bf16.msra.mxu0 %v262
      %297 = vmatprep.subr.bf16.mxu0 0
      %298 = vmatpush1.bf16.msra.mxu0 %v263
      %299 = vmatprep.subr.bf16.mxu0 0
      %300 = vmatpush1.bf16.msra.mxu0 %v264
      %301 = vmatprep.subr.bf16.mxu0 0
      %302 = vmatpush1.bf16.msra.mxu0 %v265
      %303 = vmatprep.subr.bf16.mxu0 0
      %304 = vmatpush1.bf16.msra.mxu0 0
      %305 = vmatprep.subr.bf16.mxu0 0
      %306 = vmatpush1.bf16.msra.mxu0 0
      %307 = vmatprep.subr.bf16.mxu0 0
      %308 = vmatpush1.bf16.msra.mxu0 0
      %309 = vmatprep.subr.bf16.mxu0 0
      %310 = vmatpush1.bf16.msra.mxu0 0
      %311 = vmatprep.subr.bf16.mxu0 0
      %312 = vmatpush1.bf16.msra.mxu0 0
      %313 = vmatprep.subr.bf16.mxu0 0
      %314 = vmatpush1.bf16.msra.mxu0 0
      %315 = vmatprep.subr.bf16.mxu0 0
      %316 = vmatpush1.bf16.msra.mxu0 0
      %317 = vmatprep.subr.bf16.mxu0 0
      %318 = vmatpush1.bf16.msra.mxu0 0
      %319 = vmatprep.subr.bf16.mxu0 0
      %320 = vmatpush1.bf16.msra.mxu0 0
      %321 = vmatprep.subr.bf16.mxu0 0
      %322 = vmatpush1.bf16.msra.mxu0 0
      %323 = vmatprep.subr.bf16.mxu0 0
      %324 = vmatpush1.bf16.msra.mxu0 0
      %325 = vmatprep.subr.bf16.mxu0 0
      %326 = vmatpush1.bf16.msra.mxu0 0
      %327 = vmatprep.mubr.bf16.mxu0 0
      %328 = vmatmul.mubr.bf16.gmra.mrb[0].mxu0 %v272
      %v329 = vpop.f32.mrb[0].mxu0
      %v330 = vadd.f32 %v204, %v329
      %v331 = vpop.f32.mrb[0].mxu0
      %v332 = vpop.f32.mrb[0].mxu0
      %v333 = vadd.f32 %v204, %v332
      %v334 = vpop.f32.mrb[0].mxu0
      %335 = vmatprep.mubr.bf16.mxu0 0
      %336 = vmatmul.mubr.bf16.gmra.mrb[0].mxu0 %v275
      %v337 = vpop.f32.mrb[0].mxu0
      %v338 = vadd.f32 %v204, %v337
      %v339 = vpop.f32.mrb[0].mxu0
      %v340 = vpop.f32.mrb[0].mxu0
      %v341 = vadd.f32 %v204, %v340
      %v342 = vpop.f32.mrb[0].mxu0
      %343 = vmatprep.mubr.bf16.mxu0 0
      %344 = vmatmul.mubr.bf16.gmra.mrb[0].mxu0 %v278
      %v345 = vpop.f32.mrb[0].mxu0
      %v346 = vadd.f32 %v204, %v345
      %v347 = vpop.f32.mrb[0].mxu0
      %v348 = vpop.f32.mrb[0].mxu0
      %v349 = vadd.f32 %v204, %v348
      %v350 = vpop.f32.mrb[0].mxu0
      %351 = vmatprep.mubr.bf16.mxu0 0
      %352 = vmatmul.mubr.bf16.gmra.mrb[0].mxu0 %v281
      %v353 = vpop.f32.mrb[0].mxu0
      %v354 = vadd.f32 %v204, %v353
      %v355 = vpop.f32.mrb[0].mxu0
      %v356 = vpop.f32.mrb[0].mxu0
      %v357 = vadd.f32 %v204, %v356
      %v358 = vpop.f32.mrb[0].mxu0
      %359 = vmatprep.mubr.bf16.mxu0 0
      %360 = vmatmul.mubr.bf16.gmra.mrb[0].mxu0 %v284
      %v361 = vpop.f32.mrb[0].mxu0
      %v362 = vadd.f32 %v204, %v361
      %v363 = vpop.f32.mrb[0].mxu0
      %v364 = vpop.f32.mrb[0].mxu0
      %v365 = vadd.f32 %v204, %v364
      %v366 = vpop.f32.mrb[0].mxu0
      %367 = vmatprep.mubr.bf16.mxu0 0
      %368 = vmatmul.mubr.bf16.gmra.mrb[0].mxu0 %v287
      %v369 = vpop.f32.mrb[0].mxu0
      %v370 = vadd.f32 %v204, %v369
      %v371 = vpop.f32.mrb[0].mxu0
      %v372 = vpop.f32.mrb[0].mxu0
      %v373 = vadd.f32 %v204, %v372
      %v374 = vpop.f32.mrb[0].mxu0
      %375 = vmatprep.mubr.bf16.mxu0 0
      %376 = vmatmul.mubr.bf16.gmra.mrb[0].mxu0 %v290
      %v377 = vpop.f32.mrb[0].mxu0
      %v378 = vadd.f32 %v204, %v377
      %v379 = vpop.f32.mrb[0].mxu0
      %v380 = vpop.f32.mrb[0].mxu0
      %v381 = vadd.f32 %v204, %v380
      %v382 = vpop.f32.mrb[0].mxu0
      %383 = vmatprep.mubr.bf16.mxu0 0
      %384 = vmatmul.mubr.bf16.gmra.mrb[0].mxu0 %v293
      %v385 = vpop.f32.mrb[0].mxu0
      %v386 = vadd.f32 %v204, %v385
      %v387 = vpop.f32.mrb[0].mxu0
      %v388 = vpop.f32.mrb[0].mxu0
      %v389 = vadd.f32 %v204, %v388
      %v390 = vpop.f32.mrb[0].mxu0
      %391 = vdwg.mxu0
      %vm392 = vcmp.ge.f32.partialorder %v330, 0.0
      %vm393 = vcmp.ge.f32.partialorder %v333, 0.0
      %vm394 = vcmp.ge.f32.partialorder %v338, 0.0
      %vm395 = vcmp.ge.f32.partialorder %v341, 0.0
      %vm396 = vcmp.ge.f32.partialorder %v346, 0.0
      %vm397 = vcmp.ge.f32.partialorder %v349, 0.0
      %vm398 = vcmp.ge.f32.partialorder %v354, 0.0
      %vm399 = vcmp.ge.f32.partialorder %v357, 0.0
      %vm400 = vcmp.ge.f32.partialorder %v362, 0.0
      %vm401 = vcmp.ge.f32.partialorder %v365, 0.0
      %vm402 = vcmp.ge.f32.partialorder %v370, 0.0
      %vm403 = vcmp.ge.f32.partialorder %v373, 0.0
      %vm404 = vcmp.ge.f32.partialorder %v378, 0.0
      %vm405 = vcmp.ge.f32.partialorder %v381, 0.0
      %vm406 = vcmp.ge.f32.partialorder %v386, 0.0
      %vm407 = vcmp.ge.f32.partialorder %v389, 0.0
      %v408 = vmul.f32 %v330, 0.2
      %v409 = vmul.f32 %v333, 0.2
      %v410 = vmul.f32 %v338, 0.2
      %v411 = vmul.f32 %v341, 0.2
      %v412 = vmul.f32 %v346, 0.2
      %v413 = vmul.f32 %v349, 0.2
      %v414 = vmul.f32 %v354, 0.2
      %v415 = vmul.f32 %v357, 0.2
      %v416 = vmul.f32 %v362, 0.2
      %v417 = vmul.f32 %v365, 0.2
      %v418 = vmul.f32 %v370, 0.2
      %v419 = vmul.f32 %v373, 0.2
      %v420 = vmul.f32 %v378, 0.2
      %v421 = vmul.f32 %v381, 0.2
      %v422 = vmul.f32 %v386, 0.2
      %v423 = vmul.f32 %v389, 0.2
      %v424 = vsel %vm392, %v330, %v408
      %v425 = vsel %vm393, %v333, %v409
      %v426 = vsel %vm394, %v338, %v410
      %v427 = vsel %vm395, %v341, %v411
      %v428 = vsel %vm396, %v346, %v412
      %v429 = vsel %vm397, %v349, %v413
      %v430 = vsel %vm398, %v354, %v414
      %v431 = vsel %vm399, %v357, %v415
      %v432 = vsel %vm400, %v362, %v416
      %v433 = vsel %vm401, %v365, %v417
      %v434 = vsel %vm402, %v370, %v418
      %v435 = vsel %vm403, %v373, %v419
      %v436 = vsel %vm404, %v378, %v420
      %v437 = vsel %vm405, %v381, %v421
      %v438 = vsel %vm406, %v386, %v422
      %v439 = vsel %vm407, %v389, %v423
      %440 = vst [vmem:[%s172] sm:$0xff] %v424
      %441 = vst [vmem:[%s172 + $0x8] sm:$0xff] %v425
      %442 = vst [vmem:[%s172 + $0x10] sm:$0xff] %v426
      %443 = vst [vmem:[%s172 + $0x18] sm:$0xff] %v427
      %444 = vst [vmem:[%s172 + $0x20] sm:$0xff] %v428
      %445 = vst [vmem:[%s172 + $0x28] sm:$0xff] %v429
      %446 = vst [vmem:[%s172 + $0x30] sm:$0xff] %v430
      %447 = vst [vmem:[%s172 + $0x38] sm:$0xff] %v431
      %448 = vst [vmem:[%s172 + $0x40] sm:$0xff] %v432
      %449 = vst [vmem:[%s172 + $0x48] sm:$0xff] %v433
      %450 = vst [vmem:[%s172 + $0x50] sm:$0xff] %v434
      %451 = vst [vmem:[%s172 + $0x58] sm:$0xff] %v435
      %452 = vst [vmem:[%s172 + $0x60] sm:$0xff] %v436
      %453 = vst [vmem:[%s172 + $0x68] sm:$0xff] %v437
      %454 = vst [vmem:[%s172 + $0x70] sm:$0xff] %v438
      %455 = vst [vmem:[%s172 + $0x78] sm:$0xff] %v439
      %s456 = smul.u32 16, %s14
      %p457 = scmp.lt.s32.totalorder %s456, 31
      %s458 = scalar_select %p457, %s456, 31
      %s459 = smul.addr %s458, 8
      %s460 = scalar_lea.vmem %s3, %s459
      // Predicated region
      $region33: #{_lambda_.8} parent=31 // pred_check
        %p461 = pneg %p100
      $region34: #{_lambda_.8} parent=31 // pred_check_branch
        %463 = sbr.rel (%p461) target = $region36
      $region35: #{_lambda_.8} parent=31 // pred_region
        %s464 = smul.u32 16, %s14
      $region36: #{_lambda_.8} parent=31 // pred_fallthru
        _
    $region32: #{_lambda_.8} parent=5 // pred_fallthru
      _
    %p465 = scmp.le.s32.totalorder 2, %s9
    // Predicated region
    $region37: #{_lambda_.8} parent=5 // pred_check
      %p466 = pneg %p465
    $region38: #{_lambda_.8} parent=5 // pred_check_branch
      %468 = sbr.rel (%p466) target = $region40
    $region39: #{_lambda_.8} parent=5 // pred_region
      %s469 = ssub.s32 %s9, 2
      // Predicated region
      $region41: #{_lambda_.8} parent=39 // pred_check
        %p470 = pneg %p106
      $region42: #{_lambda_.8} parent=39 // pred_check_branch
        %472 = sbr.rel (%p470) target = $region44
      $region43: #{_lambda_.8} parent=39 // pred_region
        %s473 = smul.u32 16, %s15
        %p474 = scmp.lt.s32.totalorder %s473, 31
        %s475 = scalar_select %p474, %s473, 31
        %s476 = smul.addr %s475, 8
        %s477 = scalar_lea.vmem %s3, %s476
      $region44: #{_lambda_.8} parent=39 // pred_fallthru
        _
    $region40: #{_lambda_.8} parent=5 // pred_fallthru
      _
  $region6: #{_lambda_.8} parent=0 // loop_footer
    %s13 = sadd.s32 1, %s9
  $region7: #{_lambda_.8} parent=0 // loop_footer_branch
    %8 = sbr.rel target = $region3
  $region8: #{_lambda_.8} parent=0 // loop_exit
    _

// kernel: _lambda_.10
$region0: #{_lambda_.10}
  #allocation0 [shape = 'u32[]', space=smem, size = 0x4, offset = 0x4, fixed_abs, tag = 'smem constant byte address 0x4 - core index']
  #allocation1 [shape = 'u32[144,128]{1,0:T(1,128)}', space=vmem, size = 0x12000, scoped, tag = 'internal scratch']
  %s0 = inlined_call_operand.vmem [shape: f32[128,128], index: 0, kind: input, shape index: {}]
  %s1 = inlined_call_operand.vmem [shape: f32[1,128], index: 1, kind: input, shape index: {}]
  %s2 = inlined_call_operand.vmem [shape: f32[1,128], index: 2, kind: input, shape index: {}]
  %s3 = inlined_call_operand.vmem [shape: f32[128,128], index: 3, kind: output, shape index: {}]
  %s4 = sld [smem:[#allocation0]]
  $region22: #{_lambda_.10} parent=0
    _
  %s6 = ssub.s32 1, %s4
  %s7 = scalar_select 0, %s6, %s4
  // Predicated region
  $region2: #{_lambda_.10} parent=0 // pred_check
    _
  $region3: #{_lambda_.10} parent=0 // pred_check_branch
    %9 = sbr.rel (0) target = $region5
  $region4: #{_lambda_.10} parent=0 // pred_region
    _
  $region5: #{_lambda_.10} parent=0 // pred_fallthru
    _
  // Predicated region
  $region6: #{_lambda_.10} parent=0 // pred_check
    _
  $region7: #{_lambda_.10} parent=0 // pred_check_branch
    %11 = sbr.rel (0) target = $region9
  $region8: #{_lambda_.10} parent=0 // pred_region
    _
  $region9: #{_lambda_.10} parent=0 // pred_fallthru
    _
  // Predicated region
  $region10: #{_lambda_.10} parent=0 // pred_check
    _
  $region11: #{_lambda_.10} parent=0 // pred_check_branch
    %13 = sbr.rel (0) target = $region13
  $region12: #{_lambda_.10} parent=0 // pred_region
    _
  $region13: #{_lambda_.10} parent=0 // pred_fallthru
    _
  %v14 = vld [vmem:[%s0] sm:$0xff]
  %v15 = vld [vmem:[%s0 + $0x8] sm:$0xff]
  %v16 = vld [vmem:[%s0 + $0x10] sm:$0xff]
  %v17 = vld [vmem:[%s0 + $0x18] sm:$0xff]
  %v18 = vld [vmem:[%s0 + $0x20] sm:$0xff]
  %v19 = vld [vmem:[%s0 + $0x28] sm:$0xff]
  %v20 = vld [vmem:[%s0 + $0x30] sm:$0xff]
  %v21 = vld [vmem:[%s0 + $0x38] sm:$0xff]
  %v22 = vld [vmem:[%s0 + $0x40] sm:$0xff]
  %v23 = vld [vmem:[%s0 + $0x48] sm:$0xff]
  %v24 = vld [vmem:[%s0 + $0x50] sm:$0xff]
  %v25 = vld [vmem:[%s0 + $0x58] sm:$0xff]
  %v26 = vld [vmem:[%s0 + $0x60] sm:$0xff]
  %v27 = vld [vmem:[%s0 + $0x68] sm:$0xff]
  %v28 = vld [vmem:[%s0 + $0x70] sm:$0xff]
  %v29 = vld [vmem:[%s0 + $0x78] sm:$0xff]
  %v30 = vld [vmem:[%s1] sm:$0x1]
  %v32 = vlaneseq
  %v33 = vshrl.u32 %v32, 7
  %v34 = vsub.s32 0, %v33
  %v35 = vrot.slane %v30, %v34
  %v37 = vmul.f32 %v14, %v35
  %v38 = vmul.f32 %v15, %v35
  %v39 = vmul.f32 %v16, %v35
  %v40 = vmul.f32 %v17, %v35
  %v41 = vmul.f32 %v18, %v35
  %v42 = vmul.f32 %v19, %v35
  %v43 = vmul.f32 %v20, %v35
  %v44 = vmul.f32 %v21, %v35
  %v45 = vmul.f32 %v22, %v35
  %v46 = vmul.f32 %v23, %v35
  %v47 = vmul.f32 %v24, %v35
  %v48 = vmul.f32 %v25, %v35
  %v49 = vmul.f32 %v26, %v35
  %v50 = vmul.f32 %v27, %v35
  %v51 = vmul.f32 %v28, %v35
  %v52 = vmul.f32 %v29, %v35
  %v53 = vld [vmem:[%s2] sm:$0x1]
  %v55 = vlaneseq
  %v56 = vshrl.u32 %v55, 7
  %v57 = vsub.s32 0, %v56
  %v58 = vrot.slane %v53, %v57
  %v60 = vadd.f32 %v37, %v58
  %v61 = vadd.f32 %v38, %v58
  %v62 = vadd.f32 %v39, %v58
  %v63 = vadd.f32 %v40, %v58
  %v64 = vadd.f32 %v41, %v58
  %v65 = vadd.f32 %v42, %v58
  %v66 = vadd.f32 %v43, %v58
  %v67 = vadd.f32 %v44, %v58
  %v68 = vadd.f32 %v45, %v58
  %v69 = vadd.f32 %v46, %v58
  %v70 = vadd.f32 %v47, %v58
  %v71 = vadd.f32 %v48, %v58
  %v72 = vadd.f32 %v49, %v58
  %v73 = vadd.f32 %v50, %v58
  %v74 = vadd.f32 %v51, %v58
  %v75 = vadd.f32 %v52, %v58
  %vm76 = vcmp.ge.f32.partialorder %v60, 0.0
  %vm77 = vcmp.ge.f32.partialorder %v61, 0.0
  %vm78 = vcmp.ge.f32.partialorder %v62, 0.0
  %vm79 = vcmp.ge.f32.partialorder %v63, 0.0
  %vm80 = vcmp.ge.f32.partialorder %v64, 0.0
  %vm81 = vcmp.ge.f32.partialorder %v65, 0.0
  %vm82 = vcmp.ge.f32.partialorder %v66, 0.0
  %vm83 = vcmp.ge.f32.partialorder %v67, 0.0
  %vm84 = vcmp.ge.f32.partialorder %v68, 0.0
  %vm85 = vcmp.ge.f32.partialorder %v69, 0.0
  %vm86 = vcmp.ge.f32.partialorder %v70, 0.0
  %vm87 = vcmp.ge.f32.partialorder %v71, 0.0
  %vm88 = vcmp.ge.f32.partialorder %v72, 0.0
  %vm89 = vcmp.ge.f32.partialorder %v73, 0.0
  %vm90 = vcmp.ge.f32.partialorder %v74, 0.0
  %vm91 = vcmp.ge.f32.partialorder %v75, 0.0
  %v92 = vmul.f32 %v60, 0.2
  %v93 = vmul.f32 %v61, 0.2
  %v94 = vmul.f32 %v62, 0.2
  %v95 = vmul.f32 %v63, 0.2
  %v96 = vmul.f32 %v64, 0.2
  %v97 = vmul.f32 %v65, 0.2
  %v98 = vmul.f32 %v66, 0.2
  %v99 = vmul.f32 %v67, 0.2
  %v100 = vmul.f32 %v68, 0.2
  %v101 = vmul.f32 %v69, 0.2
  %v102 = vmul.f32 %v70, 0.2
  %v103 = vmul.f32 %v71, 0.2
  %v104 = vmul.f32 %v72, 0.2
  %v105 = vmul.f32 %v73, 0.2
  %v106 = vmul.f32 %v74, 0.2
  %v107 = vmul.f32 %v75, 0.2
  %v108 = vsel %vm76, %v60, %v92
  %v109 = vsel %vm77, %v61, %v93
  %v110 = vsel %vm78, %v62, %v94
  %v111 = vsel %vm79, %v63, %v95
  %v112 = vsel %vm80, %v64, %v96
  %v113 = vsel %vm81, %v65, %v97
  %v114 = vsel %vm82, %v66, %v98
  %v115 = vsel %vm83, %v67, %v99
  %v116 = vsel %vm84, %v68, %v100
  %v117 = vsel %vm85, %v69, %v101
  %v118 = vsel %vm86, %v70, %v102
  %v119 = vsel %vm87, %v71, %v103
  %v120 = vsel %vm88, %v72, %v104
  %v121 = vsel %vm89, %v73, %v105
  %v122 = vsel %vm90, %v74, %v106
  %v123 = vsel %vm91, %v75, %v107
  %124 = vst [vmem:[%s3] sm:$0xff] %v108
  %125 = vst [vmem:[%s3 + $0x8] sm:$0xff] %v109
  %126 = vst [vmem:[%s3 + $0x10] sm:$0xff] %v110
  %127 = vst [vmem:[%s3 + $0x18] sm:$0xff] %v111
  %128 = vst [vmem:[%s3 + $0x20] sm:$0xff] %v112
  %129 = vst [vmem:[%s3 + $0x28] sm:$0xff] %v113
  %130 = vst [vmem:[%s3 + $0x30] sm:$0xff] %v114
  %131 = vst [vmem:[%s3 + $0x38] sm:$0xff] %v115
  %132 = vst [vmem:[%s3 + $0x40] sm:$0xff] %v116
  %133 = vst [vmem:[%s3 + $0x48] sm:$0xff] %v117
  %134 = vst [vmem:[%s3 + $0x50] sm:$0xff] %v118
  %135 = vst [vmem:[%s3 + $0x58] sm:$0xff] %v119
  %136 = vst [vmem:[%s3 + $0x60] sm:$0xff] %v120
  %137 = vst [vmem:[%s3 + $0x68] sm:$0xff] %v121
  %138 = vst [vmem:[%s3 + $0x70] sm:$0xff] %v122
  %139 = vst [vmem:[%s3 + $0x78] sm:$0xff] %v123
  // Predicated region
  $region14: #{_lambda_.10} parent=0 // pred_check
    _
  $region15: #{_lambda_.10} parent=0 // pred_check_branch
    %141 = sbr.rel (0) target = $region17
  $region16: #{_lambda_.10} parent=0 // pred_region
    _
  $region17: #{_lambda_.10} parent=0 // pred_fallthru
    _
  // Predicated region
  $region18: #{_lambda_.10} parent=0 // pred_check
    _
  $region19: #{_lambda_.10} parent=0 // pred_check_branch
    %143 = sbr.rel (0) target = $region21
  $region20: #{_lambda_.10} parent=0 // pred_region
    _
  $region21: #{_lambda_.10} parent=0 // pred_fallthru
    _

// kernel: _lambda_.9
$region0: #{_lambda_.9}
  #allocation0 [shape = 'u32[]', space=smem, size = 0x4, offset = 0x4, fixed_abs, tag = 'smem constant byte address 0x4 - core index']
  #allocation1 [shape = 'u32[144,128]{1,0:T(1,128)}', space=vmem, size = 0x12000, scoped, tag = 'internal scratch']
  %s0 = inlined_call_operand.vmem [shape: bf16[128,128], index: 0, kind: input, shape index: {}]
  %s1 = inlined_call_operand.vmem [shape: bf16[128,128], index: 1, kind: input, shape index: {}]
  %s2 = inlined_call_operand.vmem [shape: f32[1,128], index: 2, kind: input, shape index: {}]
  %s3 = inlined_call_operand.vmem [shape: f32[128,128], index: 3, kind: output, shape index: {0}]
  %s4 = inlined_call_operand.vmem [shape: f32[8,128], index: 4, kind: output, shape index: {1}]
  %5 = xla_tuple %s3, %s4
  %s6 = sld [smem:[#allocation0]]
  $region30: #{_lambda_.9} parent=0
    _
  %s8 = ssub.s32 1, %s6
  %s9 = scalar_select 0, %s8, %s6
  // Predicated region
  $region2: #{_lambda_.9} parent=0 // pred_check
    _
  $region3: #{_lambda_.9} parent=0 // pred_check_branch
    %11 = sbr.rel (0) target = $region5
  $region4: #{_lambda_.9} parent=0 // pred_region
    _
  $region5: #{_lambda_.9} parent=0 // pred_fallthru
    _
  // Predicated region
  $region6: #{_lambda_.9} parent=0 // pred_check
    _
  $region7: #{_lambda_.9} parent=0 // pred_check_branch
    %13 = sbr.rel (0) target = $region9
  $region8: #{_lambda_.9} parent=0 // pred_region
    _
  $region9: #{_lambda_.9} parent=0 // pred_fallthru
    _
  // Predicated region
  $region10: #{_lambda_.9} parent=0 // pred_check
    _
  $region11: #{_lambda_.9} parent=0 // pred_check_branch
    %15 = sbr.rel (0) target = $region13
  $region12: #{_lambda_.9} parent=0 // pred_region
    _
  $region13: #{_lambda_.9} parent=0 // pred_fallthru
    _
  %v17 = vld [vmem:[%s0] sm:$0xf]
  %v18 = vld [vmem:[%s0 + $0x4] sm:$0xf]
  %v19 = vld [vmem:[%s0 + $0x8] sm:$0xf]
  %v20 = vld [vmem:[%s0 + $0xc] sm:$0xf]
  %v21 = vld [vmem:[%s0 + $0x10] sm:$0xf]
  %v22 = vld [vmem:[%s0 + $0x14] sm:$0xf]
  %v23 = vld [vmem:[%s0 + $0x18] sm:$0xf]
  %v24 = vld [vmem:[%s0 + $0x1c] sm:$0xf]
  %v25 = vld [vmem:[%s0 + $0x20] sm:$0xf]
  %v26 = vld [vmem:[%s0 + $0x24] sm:$0xf]
  %v27 = vld [vmem:[%s0 + $0x28] sm:$0xf]
  %v28 = vld [vmem:[%s0 + $0x2c] sm:$0xf]
  %v29 = vld [vmem:[%s0 + $0x30] sm:$0xf]
  %v30 = vld [vmem:[%s0 + $0x34] sm:$0xf]
  %v31 = vld [vmem:[%s0 + $0x38] sm:$0xf]
  %v32 = vld [vmem:[%s0 + $0x3c] sm:$0xf]
  %v33 = vld [vmem:[%s1] sm:$0xf]
  %v34 = vld [vmem:[%s1 + $0x4] sm:$0xf]
  %v35 = vld [vmem:[%s1 + $0x8] sm:$0xf]
  %v36 = vld [vmem:[%s1 + $0xc] sm:$0xf]
  %v37 = vld [vmem:[%s1 + $0x10] sm:$0xf]
  %v38 = vld [vmem:[%s1 + $0x14] sm:$0xf]
  %v39 = vld [vmem:[%s1 + $0x18] sm:$0xf]
  %v40 = vld [vmem:[%s1 + $0x1c] sm:$0xf]
  %v41 = vld [vmem:[%s1 + $0x20] sm:$0xf]
  %v42 = vld [vmem:[%s1 + $0x24] sm:$0xf]
  %v43 = vld [vmem:[%s1 + $0x28] sm:$0xf]
  %v44 = vld [vmem:[%s1 + $0x2c] sm:$0xf]
  %v45 = vld [vmem:[%s1 + $0x30] sm:$0xf]
  %v46 = vld [vmem:[%s1 + $0x34] sm:$0xf]
  %v47 = vld [vmem:[%s1 + $0x38] sm:$0xf]
  %v48 = vld [vmem:[%s1 + $0x3c] sm:$0xf]
  %v49 = vld [vmem:[%s2] sm:$0x1]
  %v51 = vlaneseq
  %v52 = vshrl.u32 %v51, 7
  %v53 = vsub.s32 0, %v52
  %v54 = vrot.slane %v49, %v53
  %v72 = vunpack.c.l.b16 %v17
  %v73 = vunpack.c.l.b16 %v18
  %v74 = vunpack.c.l.b16 %v19
  %v75 = vunpack.c.l.b16 %v20
  %v76 = vunpack.c.l.b16 %v21
  %v77 = vunpack.c.l.b16 %v22
  %v78 = vunpack.c.l.b16 %v23
  %v79 = vunpack.c.l.b16 %v24
  %v80 = vunpack.c.l.b16 %v25
  %v81 = vunpack.c.l.b16 %v26
  %v82 = vunpack.c.l.b16 %v27
  %v83 = vunpack.c.l.b16 %v28
  %v84 = vunpack.c.l.b16 %v29
  %v85 = vunpack.c.l.b16 %v30
  %v86 = vunpack.c.l.b16 %v31
  %v87 = vunpack.c.l.b16 %v32
  %v88 = vpack.c.b16 %v73, %v72
  %v89 = vpack.c.b16 %v75, %v74
  %v90 = vpack.c.b16 %v77, %v76
  %v91 = vpack.c.b16 %v79, %v78
  %v92 = vpack.c.b16 %v81, %v80
  %v93 = vpack.c.b16 %v83, %v82
  %v94 = vpack.c.b16 %v85, %v84
  %v95 = vpack.c.b16 %v87, %v86
  %v120 = vunpack.c.l.b16 %v33
  %v121 = vunpack.c.l.b16 %v34
  %v122 = vunpack.c.l.b16 %v35
  %v123 = vunpack.c.l.b16 %v36
  %v124 = vunpack.c.l.b16 %v37
  %v125 = vunpack.c.l.b16 %v38
  %v126 = vunpack.c.l.b16 %v39
  %v127 = vunpack.c.l.b16 %v40
  %v128 = vunpack.c.l.b16 %v41
  %v129 = vunpack.c.l.b16 %v42
  %v130 = vunpack.c.l.b16 %v43
  %v131 = vunpack.c.l.b16 %v44
  %v132 = vunpack.c.l.b16 %v45
  %v133 = vunpack.c.l.b16 %v46
  %v134 = vunpack.c.l.b16 %v47
  %v135 = vunpack.c.l.b16 %v48
  %v136 = vpack.c.b16 %v121, %v120
  %v137 = vpack.c.b16 %v123, %v122
  %v138 = vpack.c.b16 %v125, %v124
  %v139 = vpack.c.b16 %v127, %v126
  %v140 = vpack.c.b16 %v129, %v128
  %v141 = vpack.c.b16 %v131, %v130
  %v142 = vpack.c.b16 %v133, %v132
  %v143 = vpack.c.b16 %v135, %v134
  %152 = vmatprep.subr.bf16.mxu0 0
  %153 = vmatpush1.bf16.msra.mxu0 %v136
  %154 = vmatprep.subr.bf16.mxu0 0
  %155 = vmatpush1.bf16.msra.mxu0 %v137
  %156 = vmatprep.subr.bf16.mxu0 0
  %157 = vmatpush1.bf16.msra.mxu0 %v138
  %158 = vmatprep.subr.bf16.mxu0 0
  %159 = vmatpush1.bf16.msra.mxu0 %v139
  %160 = vmatprep.subr.bf16.mxu0 0
  %161 = vmatpush1.bf16.msra.mxu0 %v140
  %162 = vmatprep.subr.bf16.mxu0 0
  %163 = vmatpush1.bf16.msra.mxu0 %v141
  %164 = vmatprep.subr.bf16.mxu0 0
  %165 = vmatpush1.bf16.msra.mxu0 %v142
  %166 = vmatprep.subr.bf16.mxu0 0
  %167 = vmatpush1.bf16.msra.mxu0 %v143
  %168 = vmatprep.subr.bf16.mxu0 0
  %169 = vmatpush1.bf16.msra.mxu0 0
  %170 = vmatprep.subr.bf16.mxu0 0
  %171 = vmatpush1.bf16.msra.mxu0 0
  %172 = vmatprep.subr.bf16.mxu0 0
  %173 = vmatpush1.bf16.msra.mxu0 0
  %174 = vmatprep.subr.bf16.mxu0 0
  %175 = vmatpush1.bf16.msra.mxu0 0
  %176 = vmatprep.subr.bf16.mxu0 0
  %177 = vmatpush1.bf16.msra.mxu0 0
  %178 = vmatprep.subr.bf16.mxu0 0
  %179 = vmatpush1.bf16.msra.mxu0 0
  %180 = vmatprep.subr.bf16.mxu0 0
  %181 = vmatpush1.bf16.msra.mxu0 0
  %182 = vmatprep.subr.bf16.mxu0 0
  %183 = vmatpush1.bf16.msra.mxu0 0
  %184 = vmatprep.mubr.bf16.mxu0 0
  %185 = vmatmul.mubr.bf16.gmra.mrb[0].mxu0 %v88
  %v186 = vpop.f32.mrb[0].mxu0
  %v187 = vadd.f32 %v54, %v186
  %v188 = vpop.f32.mrb[0].mxu0
  %v189 = vpop.f32.mrb[0].mxu0
  %v190 = vadd.f32 %v54, %v189
  %v191 = vpop.f32.mrb[0].mxu0
  %192 = vmatprep.mubr.bf16.mxu0 0
  %193 = vmatmul.mubr.bf16.gmra.mrb[0].mxu0 %v89
  %v194 = vpop.f32.mrb[0].mxu0
  %v195 = vadd.f32 %v54, %v194
  %v196 = vpop.f32.mrb[0].mxu0
  %v197 = vpop.f32.mrb[0].mxu0
  %v198 = vadd.f32 %v54, %v197
  %v199 = vpop.f32.mrb[0].mxu0
  %200 = vmatprep.mubr.bf16.mxu0 0
  %201 = vmatmul.mubr.bf16.gmra.mrb[0].mxu0 %v90
  %v202 = vpop.f32.mrb[0].mxu0
  %v203 = vadd.f32 %v54, %v202
  %v204 = vpop.f32.mrb[0].mxu0
  %v205 = vpop.f32.mrb[0].mxu0
  %v206 = vadd.f32 %v54, %v205
  %v207 = vpop.f32.mrb[0].mxu0
  %208 = vmatprep.mubr.bf16.mxu0 0
  %209 = vmatmul.mubr.bf16.gmra.mrb[0].mxu0 %v91
  %v210 = vpop.f32.mrb[0].mxu0
  %v211 = vadd.f32 %v54, %v210
  %v212 = vpop.f32.mrb[0].mxu0
  %v213 = vpop.f32.mrb[0].mxu0
  %v214 = vadd.f32 %v54, %v213
  %v215 = vpop.f32.mrb[0].mxu0
  %216 = vmatprep.mubr.bf16.mxu0 0
  %217 = vmatmul.mubr.bf16.gmra.mrb[0].mxu0 %v92
  %v218 = vpop.f32.mrb[0].mxu0
  %v219 = vadd.f32 %v54, %v218
  %v220 = vpop.f32.mrb[0].mxu0
  %v221 = vpop.f32.mrb[0].mxu0
  %v222 = vadd.f32 %v54, %v221
  %v223 = vpop.f32.mrb[0].mxu0
  %224 = vmatprep.mubr.bf16.mxu0 0
  %225 = vmatmul.mubr.bf16.gmra.mrb[0].mxu0 %v93
  %v226 = vpop.f32.mrb[0].mxu0
  %v227 = vadd.f32 %v54, %v226
  %v228 = vpop.f32.mrb[0].mxu0
  %v229 = vpop.f32.mrb[0].mxu0
  %v230 = vadd.f32 %v54, %v229
  %v231 = vpop.f32.mrb[0].mxu0
  %232 = vmatprep.mubr.bf16.mxu0 0
  %233 = vmatmul.mubr.bf16.gmra.mrb[0].mxu0 %v94
  %v234 = vpop.f32.mrb[0].mxu0
  %v235 = vadd.f32 %v54, %v234
  %v236 = vpop.f32.mrb[0].mxu0
  %v237 = vpop.f32.mrb[0].mxu0
  %v238 = vadd.f32 %v54, %v237
  %v239 = vpop.f32.mrb[0].mxu0
  %240 = vmatprep.mubr.bf16.mxu0 0
  %241 = vmatmul.mubr.bf16.gmra.mrb[0].mxu0 %v95
  %v242 = vpop.f32.mrb[0].mxu0
  %v243 = vadd.f32 %v54, %v242
  %v244 = vpop.f32.mrb[0].mxu0
  %v245 = vpop.f32.mrb[0].mxu0
  %v246 = vadd.f32 %v54, %v245
  %v247 = vpop.f32.mrb[0].mxu0
  %248 = vdwg.mxu0
  %249 = vst [vmem:[%s3] sm:$0xff] %v187
  %250 = vst [vmem:[%s3 + $0x8] sm:$0xff] %v190
  %251 = vst [vmem:[%s3 + $0x10] sm:$0xff] %v195
  %252 = vst [vmem:[%s3 + $0x18] sm:$0xff] %v198
  %253 = vst [vmem:[%s3 + $0x20] sm:$0xff] %v203
  %254 = vst [vmem:[%s3 + $0x28] sm:$0xff] %v206
  %255 = vst [vmem:[%s3 + $0x30] sm:$0xff] %v211
  %256 = vst [vmem:[%s3 + $0x38] sm:$0xff] %v214
  %257 = vst [vmem:[%s3 + $0x40] sm:$0xff] %v219
  %258 = vst [vmem:[%s3 + $0x48] sm:$0xff] %v222
  %259 = vst [vmem:[%s3 + $0x50] sm:$0xff] %v227
  %260 = vst [vmem:[%s3 + $0x58] sm:$0xff] %v230
  %261 = vst [vmem:[%s3 + $0x60] sm:$0xff] %v235
  %262 = vst [vmem:[%s3 + $0x68] sm:$0xff] %v238
  %263 = vst [vmem:[%s3 + $0x70] sm:$0xff] %v243
  %264 = vst [vmem:[%s3 + $0x78] sm:$0xff] %v246
  %v265 = vadd.f32 %v187, %v190
  %v266 = vadd.f32 %v265, %v195
  %v267 = vadd.f32 %v266, %v198
  %v268 = vadd.f32 %v267, %v203
  %v269 = vadd.f32 %v268, %v206
  %v270 = vadd.f32 %v269, %v211
  %v271 = vadd.f32 %v270, %v214
  %v272 = vadd.f32 %v271, %v219
  %v273 = vadd.f32 %v272, %v222
  %v274 = vadd.f32 %v273, %v227
  %v275 = vadd.f32 %v274, %v230
  %v276 = vadd.f32 %v275, %v235
  %v277 = vadd.f32 %v276, %v238
  %v278 = vadd.f32 %v277, %v243
  %v279 = vadd.f32 %v278, %v246
  %v280 = vrot.slane %v279, 4
  %v281 = vadd.f32 %v279, %v280
  %v282 = vrot.slane %v281, 2
  %v283 = vadd.f32 %v281, %v282
  %v284 = vrot.slane %v283, 1
  %v285 = vadd.f32 %v283, %v284
  %v286 = vmul.f32 %v187, %v187
  %v287 = vmul.f32 %v190, %v190
  %v288 = vmul.f32 %v195, %v195
  %v289 = vmul.f32 %v198, %v198
  %v290 = vmul.f32 %v203, %v203
  %v291 = vmul.f32 %v206, %v206
  %v292 = vmul.f32 %v211, %v211
  %v293 = vmul.f32 %v214, %v214
  %v294 = vmul.f32 %v219, %v219
  %v295 = vmul.f32 %v222, %v222
  %v296 = vmul.f32 %v227, %v227
  %v297 = vmul.f32 %v230, %v230
  %v298 = vmul.f32 %v235, %v235
  %v299 = vmul.f32 %v238, %v238
  %v300 = vmul.f32 %v243, %v243
  %v301 = vmul.f32 %v246, %v246
  %v302 = vadd.f32 %v286, %v287
  %v303 = vadd.f32 %v302, %v288
  %v304 = vadd.f32 %v303, %v289
  %v305 = vadd.f32 %v304, %v290
  %v306 = vadd.f32 %v305, %v291
  %v307 = vadd.f32 %v306, %v292
  %v308 = vadd.f32 %v307, %v293
  %v309 = vadd.f32 %v308, %v294
  %v310 = vadd.f32 %v309, %v295
  %v311 = vadd.f32 %v310, %v296
  %v312 = vadd.f32 %v311, %v297
  %v313 = vadd.f32 %v312, %v298
  %v314 = vadd.f32 %v313, %v299
  %v315 = vadd.f32 %v314, %v300
  %v316 = vadd.f32 %v315, %v301
  %v317 = vrot.slane %v316, 4
  %v318 = vadd.f32 %v316, %v317
  %v319 = vrot.slane %v318, 2
  %v320 = vadd.f32 %v318, %v319
  %v321 = vrot.slane %v320, 1
  %v322 = vadd.f32 %v320, %v321
  %v323 = vlaneseq
  %v324 = vshrl.u32 %v323, 7
  %vm325 = vcmp.eq.s32.totalorder %v324, 0
  %v326 = vsel %vm325, %v285, 0.0
  %vm327 = vcmp.eq.s32.totalorder %v324, 1
  %v328 = vsel %vm327, %v322, 0.0
  %v329 = vadd.f32 %v326, %v328
  %330 = vst [vmem:[%s4] sm:$0xff] %v329
  // Predicated region
  $region14: #{_lambda_.9} parent=0 // pred_check
    _
  $region15: #{_lambda_.9} parent=0 // pred_check_branch
    %332 = sbr.rel (0) target = $region17
  $region16: #{_lambda_.9} parent=0 // pred_region
    _
  $region17: #{_lambda_.9} parent=0 // pred_fallthru
    _
  // Predicated region
  $region18: #{_lambda_.9} parent=0 // pred_check
    _
  $region19: #{_lambda_.9} parent=0 // pred_check_branch
    %334 = sbr.rel (0) target = $region21
  $region20: #{_lambda_.9} parent=0 // pred_region
    _
  $region21: #{_lambda_.9} parent=0 // pred_fallthru
    _
  // Predicated region
  $region22: #{_lambda_.9} parent=0 // pred_check
    _
  $region23: #{_lambda_.9} parent=0 // pred_check_branch
    %336 = sbr.rel (0) target = $region25
  $region24: #{_lambda_.9} parent=0 // pred_region
    _
  $region25: #{_lambda_.9} parent=0 // pred_fallthru
    _
  // Predicated region
  $region26: #{_lambda_.9} parent=0 // pred_check
    _
  $region27: #{_lambda_.9} parent=0 // pred_check_branch
    %338 = sbr.rel (0) target = $region29
  $region28: #{_lambda_.9} parent=0 // pred_region
    _
  $region29: #{_lambda_.9} parent=0 // pred_fallthru
    _

// kernel: _lambda_.11
$region0: #{_lambda_.11}
  #allocation0 [shape = 'u32[]', space=smem, size = 0x4, offset = 0x4, fixed_abs, tag = 'smem constant byte address 0x4 - core index']
  #allocation1 [shape = 'u32[144,128]{1,0:T(1,128)}', space=vmem, size = 0x12000, scoped, tag = 'internal scratch']
  %s0 = inlined_call_operand.vmem [shape: bf16[128,256], index: 0, kind: input, shape index: {}]
  %s1 = inlined_call_operand.vmem [shape: bf16[256,128], index: 1, kind: input, shape index: {}]
  %s2 = inlined_call_operand.vmem [shape: f32[1,128], index: 2, kind: input, shape index: {}]
  %s3 = inlined_call_operand.vmem [shape: f32[128,128], index: 3, kind: output, shape index: {0}]
  %s4 = inlined_call_operand.vmem [shape: f32[8,128], index: 4, kind: output, shape index: {1}]
  %5 = xla_tuple %s3, %s4
  %s6 = sld [smem:[#allocation0]]
  $region30: #{_lambda_.11} parent=0
    _
  %s8 = ssub.s32 1, %s6
  %s9 = scalar_select 0, %s8, %s6
  // Predicated region
  $region2: #{_lambda_.11} parent=0 // pred_check
    _
  $region3: #{_lambda_.11} parent=0 // pred_check_branch
    %11 = sbr.rel (0) target = $region5
  $region4: #{_lambda_.11} parent=0 // pred_region
    _
  $region5: #{_lambda_.11} parent=0 // pred_fallthru
    _
  // Predicated region
  $region6: #{_lambda_.11} parent=0 // pred_check
    _
  $region7: #{_lambda_.11} parent=0 // pred_check_branch
    %13 = sbr.rel (0) target = $region9
  $region8: #{_lambda_.11} parent=0 // pred_region
    _
  $region9: #{_lambda_.11} parent=0 // pred_fallthru
    _
  // Predicated region
  $region10: #{_lambda_.11} parent=0 // pred_check
    _
  $region11: #{_lambda_.11} parent=0 // pred_check_branch
    %15 = sbr.rel (0) target = $region13
  $region12: #{_lambda_.11} parent=0 // pred_region
    _
  $region13: #{_lambda_.11} parent=0 // pred_fallthru
    _
  %v17 = vld [vmem:[%s0] sm:$0xff]
  %v18 = vld [vmem:[%s0 + $0x8] sm:$0xff]
  %v19 = vld [vmem:[%s0 + $0x10] sm:$0xff]
  %v20 = vld [vmem:[%s0 + $0x18] sm:$0xff]
  %v21 = vld [vmem:[%s0 + $0x20] sm:$0xff]
  %v22 = vld [vmem:[%s0 + $0x28] sm:$0xff]
  %v23 = vld [vmem:[%s0 + $0x30] sm:$0xff]
  %v24 = vld [vmem:[%s0 + $0x38] sm:$0xff]
  %v25 = vld [vmem:[%s0 + $0x40] sm:$0xff]
  %v26 = vld [vmem:[%s0 + $0x48] sm:$0xff]
  %v27 = vld [vmem:[%s0 + $0x50] sm:$0xff]
  %v28 = vld [vmem:[%s0 + $0x58] sm:$0xff]
  %v29 = vld [vmem:[%s0 + $0x60] sm:$0xff]
  %v30 = vld [vmem:[%s0 + $0x68] sm:$0xff]
  %v31 = vld [vmem:[%s0 + $0x70] sm:$0xff]
  %v32 = vld [vmem:[%s0 + $0x78] sm:$0xff]
  %v33 = vld [vmem:[%s1] sm:$0xf]
  %v34 = vld [vmem:[%s1 + $0x4] sm:$0xf]
  %v35 = vld [vmem:[%s1 + $0x8] sm:$0xf]
  %v36 = vld [vmem:[%s1 + $0xc] sm:$0xf]
  %v37 = vld [vmem:[%s1 + $0x10] sm:$0xf]
  %v38 = vld [vmem:[%s1 + $0x14] sm:$0xf]
  %v39 = vld [vmem:[%s1 + $0x18] sm:$0xf]
  %v40 = vld [vmem:[%s1 + $0x1c] sm:$0xf]
  %v41 = vld [vmem:[%s1 + $0x20] sm:$0xf]
  %v42 = vld [vmem:[%s1 + $0x24] sm:$0xf]
  %v43 = vld [vmem:[%s1 + $0x28] sm:$0xf]
  %v44 = vld [vmem:[%s1 + $0x2c] sm:$0xf]
  %v45 = vld [vmem:[%s1 + $0x30] sm:$0xf]
  %v46 = vld [vmem:[%s1 + $0x34] sm:$0xf]
  %v47 = vld [vmem:[%s1 + $0x38] sm:$0xf]
  %v48 = vld [vmem:[%s1 + $0x3c] sm:$0xf]
  %v49 = vld [vmem:[%s1 + $0x40] sm:$0xf]
  %v50 = vld [vmem:[%s1 + $0x44] sm:$0xf]
  %v51 = vld [vmem:[%s1 + $0x48] sm:$0xf]
  %v52 = vld [vmem:[%s1 + $0x4c] sm:$0xf]
  %v53 = vld [vmem:[%s1 + $0x50] sm:$0xf]
  %v54 = vld [vmem:[%s1 + $0x54] sm:$0xf]
  %v55 = vld [vmem:[%s1 + $0x58] sm:$0xf]
  %v56 = vld [vmem:[%s1 + $0x5c] sm:$0xf]
  %v57 = vld [vmem:[%s1 + $0x60] sm:$0xf]
  %v58 = vld [vmem:[%s1 + $0x64] sm:$0xf]
  %v59 = vld [vmem:[%s1 + $0x68] sm:$0xf]
  %v60 = vld [vmem:[%s1 + $0x6c] sm:$0xf]
  %v61 = vld [vmem:[%s1 + $0x70] sm:$0xf]
  %v62 = vld [vmem:[%s1 + $0x74] sm:$0xf]
  %v63 = vld [vmem:[%s1 + $0x78] sm:$0xf]
  %v64 = vld [vmem:[%s1 + $0x7c] sm:$0xf]
  %v65 = vld [vmem:[%s2] sm:$0x1]
  %v67 = vlaneseq
  %v68 = vshrl.u32 %v67, 7
  %v69 = vsub.s32 0, %v68
  %v70 = vrot.slane %v65, %v69
  %v88 = vunpack.c.l.b16 %v17
  %v89 = vunpack.c.h.b16 %v17
  %v90 = vunpack.c.l.b16 %v18
  %v91 = vunpack.c.h.b16 %v18
  %v92 = vunpack.c.l.b16 %v19
  %v93 = vunpack.c.h.b16 %v19
  %v94 = vunpack.c.l.b16 %v20
  %v95 = vunpack.c.h.b16 %v20
  %v96 = vunpack.c.l.b16 %v21
  %v97 = vunpack.c.h.b16 %v21
  %v98 = vunpack.c.l.b16 %v22
  %v99 = vunpack.c.h.b16 %v22
  %v100 = vunpack.c.l.b16 %v23
  %v101 = vunpack.c.h.b16 %v23
  %v102 = vunpack.c.l.b16 %v24
  %v103 = vunpack.c.h.b16 %v24
  %v104 = vunpack.c.l.b16 %v25
  %v105 = vunpack.c.h.b16 %v25
  %v106 = vunpack.c.l.b16 %v26
  %v107 = vunpack.c.h.b16 %v26
  %v108 = vunpack.c.l.b16 %v27
  %v109 = vunpack.c.h.b16 %v27
  %v110 = vunpack.c.l.b16 %v28
  %v111 = vunpack.c.h.b16 %v28
  %v112 = vunpack.c.l.b16 %v29
  %v113 = vunpack.c.h.b16 %v29
  %v114 = vunpack.c.l.b16 %v30
  %v115 = vunpack.c.h.b16 %v30
  %v116 = vunpack.c.l.b16 %v31
  %v117 = vunpack.c.h.b16 %v31
  %v118 = vunpack.c.l.b16 %v32
  %v119 = vunpack.c.h.b16 %v32
  %v120 = vpack.c.b16 %v90, %v88
  %v121 = vpack.c.b16 %v91, %v89
  %v122 = vpack.c.b16 %v94, %v92
  %v123 = vpack.c.b16 %v95, %v93
  %v124 = vpack.c.b16 %v98, %v96
  %v125 = vpack.c.b16 %v99, %v97
  %v126 = vpack.c.b16 %v102, %v100
  %v127 = vpack.c.b16 %v103, %v101
  %v128 = vpack.c.b16 %v106, %v104
  %v129 = vpack.c.b16 %v107, %v105
  %v130 = vpack.c.b16 %v110, %v108
  %v131 = vpack.c.b16 %v111, %v109
  %v132 = vpack.c.b16 %v114, %v112
  %v133 = vpack.c.b16 %v115, %v113
  %v134 = vpack.c.b16 %v118, %v116
  %v135 = vpack.c.b16 %v119, %v117
  %v184 = vunpack.c.l.b16 %v33
  %v185 = vunpack.c.l.b16 %v34
  %v186 = vunpack.c.l.b16 %v35
  %v187 = vunpack.c.l.b16 %v36
  %v188 = vunpack.c.l.b16 %v37
  %v189 = vunpack.c.l.b16 %v38
  %v190 = vunpack.c.l.b16 %v39
  %v191 = vunpack.c.l.b16 %v40
  %v192 = vunpack.c.l.b16 %v41
  %v193 = vunpack.c.l.b16 %v42
  %v194 = vunpack.c.l.b16 %v43
  %v195 = vunpack.c.l.b16 %v44
  %v196 = vunpack.c.l.b16 %v45
  %v197 = vunpack.c.l.b16 %v46
  %v198 = vunpack.c.l.b16 %v47
  %v199 = vunpack.c.l.b16 %v48
  %v200 = vunpack.c.l.b16 %v49
  %v201 = vunpack.c.l.b16 %v50
  %v202 = vunpack.c.l.b16 %v51
  %v203 = vunpack.c.l.b16 %v52
  %v204 = vunpack.c.l.b16 %v53
  %v205 = vunpack.c.l.b16 %v54
  %v206 = vunpack.c.l.b16 %v55
  %v207 = vunpack.c.l.b16 %v56
  %v208 = vunpack.c.l.b16 %v57
  %v209 = vunpack.c.l.b16 %v58
  %v210 = vunpack.c.l.b16 %v59
  %v211 = vunpack.c.l.b16 %v60
  %v212 = vunpack.c.l.b16 %v61
  %v213 = vunpack.c.l.b16 %v62
  %v214 = vunpack.c.l.b16 %v63
  %v215 = vunpack.c.l.b16 %v64
  %v216 = vpack.c.b16 %v185, %v184
  %v217 = vpack.c.b16 %v187, %v186
  %v218 = vpack.c.b16 %v189, %v188
  %v219 = vpack.c.b16 %v191, %v190
  %v220 = vpack.c.b16 %v193, %v192
  %v221 = vpack.c.b16 %v195, %v194
  %v222 = vpack.c.b16 %v197, %v196
  %v223 = vpack.c.b16 %v199, %v198
  %v224 = vpack.c.b16 %v201, %v200
  %v225 = vpack.c.b16 %v203, %v202
  %v226 = vpack.c.b16 %v205, %v204
  %v227 = vpack.c.b16 %v207, %v206
  %v228 = vpack.c.b16 %v209, %v208
  %v229 = vpack.c.b16 %v211, %v210
  %v230 = vpack.c.b16 %v213, %v212
  %v231 = vpack.c.b16 %v215, %v214
  %248 = vmatprep.subr.bf16.mxu0 0
  %249 = vmatpush1.bf16.msra.mxu0 %v216
  %250 = vmatprep.subr.bf16.mxu0 0
  %251 = vmatpush1.bf16.msra.mxu0 %v217
  %252 = vmatprep.subr.bf16.mxu0 0
  %253 = vmatpush1.bf16.msra.mxu0 %v218
  %254 = vmatprep.subr.bf16.mxu0 0
  %255 = vmatpush1.bf16.msra.mxu0 %v219
  %256 = vmatprep.subr.bf16.mxu0 0
  %257 = vmatpush1.bf16.msra.mxu0 %v220
  %258 = vmatprep.subr.bf16.mxu0 0
  %259 = vmatpush1.bf16.msra.mxu0 %v221
  %260 = vmatprep.subr.bf16.mxu0 0
  %261 = vmatpush1.bf16.msra.mxu0 %v222
  %262 = vmatprep.subr.bf16.mxu0 0
  %263 = vmatpush1.bf16.msra.mxu0 %v223
  %264 = vmatprep.subr.bf16.mxu0 0
  %265 = vmatpush1.bf16.msra.mxu0 %v224
  %266 = vmatprep.subr.bf16.mxu0 0
  %267 = vmatpush1.bf16.msra.mxu0 %v225
  %268 = vmatprep.subr.bf16.mxu0 0
  %269 = vmatpush1.bf16.msra.mxu0 %v226
  %270 = vmatprep.subr.bf16.mxu0 0
  %271 = vmatpush1.bf16.msra.mxu0 %v227
  %272 = vmatprep.subr.bf16.mxu0 0
  %273 = vmatpush1.bf16.msra.mxu0 %v228
  %274 = vmatprep.subr.bf16.mxu0 0
  %275 = vmatpush1.bf16.msra.mxu0 %v229
  %276 = vmatprep.subr.bf16.mxu0 0
  %277 = vmatpush1.bf16.msra.mxu0 %v230
  %278 = vmatprep.subr.bf16.mxu0 0
  %279 = vmatpush1.bf16.msra.mxu0 %v231
  %280 = vmatprep.mubr.bf16.mxu0 %v121
  %281 = vmatmul.mubr.bf16.gmra.mrb[0].mxu0 %v120
  %v282 = vpop.f32.mrb[0].mxu0
  %v283 = vadd.f32 %v70, %v282
  %v284 = vpop.f32.mrb[0].mxu0
  %v285 = vpop.f32.mrb[0].mxu0
  %v286 = vadd.f32 %v70, %v285
  %v287 = vpop.f32.mrb[0].mxu0
  %288 = vmatprep.mubr.bf16.mxu0 %v123
  %289 = vmatmul.mubr.bf16.gmra.mrb[0].mxu0 %v122
  %v290 = vpop.f32.mrb[0].mxu0
  %v291 = vadd.f32 %v70, %v290
  %v292 = vpop.f32.mrb[0].mxu0
  %v293 = vpop.f32.mrb[0].mxu0
  %v294 = vadd.f32 %v70, %v293
  %v295 = vpop.f32.mrb[0].mxu0
  %296 = vmatprep.mubr.bf16.mxu0 %v125
  %297 = vmatmul.mubr.bf16.gmra.mrb[0].mxu0 %v124
  %v298 = vpop.f32.mrb[0].mxu0
  %v299 = vadd.f32 %v70, %v298
  %v300 = vpop.f32.mrb[0].mxu0
  %v301 = vpop.f32.mrb[0].mxu0
  %v302 = vadd.f32 %v70, %v301
  %v303 = vpop.f32.mrb[0].mxu0
  %304 = vmatprep.mubr.bf16.mxu0 %v127
  %305 = vmatmul.mubr.bf16.gmra.mrb[0].mxu0 %v126
  %v306 = vpop.f32.mrb[0].mxu0
  %v307 = vadd.f32 %v70, %v306
  %v308 = vpop.f32.mrb[0].mxu0
  %v309 = vpop.f32.mrb[0].mxu0
  %v310 = vadd.f32 %v70, %v309
  %v311 = vpop.f32.mrb[0].mxu0
  %312 = vmatprep.mubr.bf16.mxu0 %v129
  %313 = vmatmul.mubr.bf16.gmra.mrb[0].mxu0 %v128
  %v314 = vpop.f32.mrb[0].mxu0
  %v315 = vadd.f32 %v70, %v314
  %v316 = vpop.f32.mrb[0].mxu0
  %v317 = vpop.f32.mrb[0].mxu0
  %v318 = vadd.f32 %v70, %v317
  %v319 = vpop.f32.mrb[0].mxu0
  %320 = vmatprep.mubr.bf16.mxu0 %v131
  %321 = vmatmul.mubr.bf16.gmra.mrb[0].mxu0 %v130
  %v322 = vpop.f32.mrb[0].mxu0
  %v323 = vadd.f32 %v70, %v322
  %v324 = vpop.f32.mrb[0].mxu0
  %v325 = vpop.f32.mrb[0].mxu0
  %v326 = vadd.f32 %v70, %v325
  %v327 = vpop.f32.mrb[0].mxu0
  %328 = vmatprep.mubr.bf16.mxu0 %v133
  %329 = vmatmul.mubr.bf16.gmra.mrb[0].mxu0 %v132
  %v330 = vpop.f32.mrb[0].mxu0
  %v331 = vadd.f32 %v70, %v330
  %v332 = vpop.f32.mrb[0].mxu0
  %v333 = vpop.f32.mrb[0].mxu0
  %v334 = vadd.f32 %v70, %v333
  %v335 = vpop.f32.mrb[0].mxu0
  %336 = vmatprep.mubr.bf16.mxu0 %v135
  %337 = vmatmul.mubr.bf16.gmra.mrb[0].mxu0 %v134
  %v338 = vpop.f32.mrb[0].mxu0
  %v339 = vadd.f32 %v70, %v338
  %v340 = vpop.f32.mrb[0].mxu0
  %v341 = vpop.f32.mrb[0].mxu0
  %v342 = vadd.f32 %v70, %v341
  %v343 = vpop.f32.mrb[0].mxu0
  %344 = vdwg.mxu0
  %345 = vst [vmem:[%s3] sm:$0xff] %v283
  %346 = vst [vmem:[%s3 + $0x8] sm:$0xff] %v286
  %347 = vst [vmem:[%s3 + $0x10] sm:$0xff] %v291
  %348 = vst [vmem:[%s3 + $0x18] sm:$0xff] %v294
  %349 = vst [vmem:[%s3 + $0x20] sm:$0xff] %v299
  %350 = vst [vmem:[%s3 + $0x28] sm:$0xff] %v302
  %351 = vst [vmem:[%s3 + $0x30] sm:$0xff] %v307
  %352 = vst [vmem:[%s3 + $0x38] sm:$0xff] %v310
  %353 = vst [vmem:[%s3 + $0x40] sm:$0xff] %v315
  %354 = vst [vmem:[%s3 + $0x48] sm:$0xff] %v318
  %355 = vst [vmem:[%s3 + $0x50] sm:$0xff] %v323
  %356 = vst [vmem:[%s3 + $0x58] sm:$0xff] %v326
  %357 = vst [vmem:[%s3 + $0x60] sm:$0xff] %v331
  %358 = vst [vmem:[%s3 + $0x68] sm:$0xff] %v334
  %359 = vst [vmem:[%s3 + $0x70] sm:$0xff] %v339
  %360 = vst [vmem:[%s3 + $0x78] sm:$0xff] %v342
  %v361 = vadd.f32 %v283, %v286
  %v362 = vadd.f32 %v361, %v291
  %v363 = vadd.f32 %v362, %v294
  %v364 = vadd.f32 %v363, %v299
  %v365 = vadd.f32 %v364, %v302
  %v366 = vadd.f32 %v365, %v307
  %v367 = vadd.f32 %v366, %v310
  %v368 = vadd.f32 %v367, %v315
  %v369 = vadd.f32 %v368, %v318
  %v370 = vadd.f32 %v369, %v323
  %v371 = vadd.f32 %v370, %v326
  %v372 = vadd.f32 %v371, %v331
  %v373 = vadd.f32 %v372, %v334
  %v374 = vadd.f32 %v373, %v339
  %v375 = vadd.f32 %v374, %v342
  %v376 = vrot.slane %v375, 4
  %v377 = vadd.f32 %v375, %v376
  %v378 = vrot.slane %v377, 2
  %v379 = vadd.f32 %v377, %v378
  %v380 = vrot.slane %v379, 1
  %v381 = vadd.f32 %v379, %v380
  %v382 = vmul.f32 %v283, %v283
  %v383 = vmul.f32 %v286, %v286
  %v384 = vmul.f32 %v291, %v291
  %v385 = vmul.f32 %v294, %v294
  %v386 = vmul.f32 %v299, %v299
  %v387 = vmul.f32 %v302, %v302
  %v388 = vmul.f32 %v307, %v307
  %v389 = vmul.f32 %v310, %v310
  %v390 = vmul.f32 %v315, %v315
  %v391 = vmul.f32 %v318, %v318
  %v392 = vmul.f32 %v323, %v323
  %v393 = vmul.f32 %v326, %v326
  %v394 = vmul.f32 %v331, %v331
  %v395 = vmul.f32 %v334, %v334
  %v396 = vmul.f32 %v339, %v339
  %v397 = vmul.f32 %v342, %v342
  %v398 = vadd.f32 %v382, %v383
  %v399 = vadd.f32 %v398, %v384
  %v400 = vadd.f32 %v399, %v385
  %v401 = vadd.f32 %v400, %v386
  %v402 = vadd.f32 %v401, %v387
  %v403 = vadd.f32 %v402, %v388
  %v404 = vadd.f32 %v403, %v389
  %v405 = vadd.f32 %v404, %v390
  %v406 = vadd.f32 %v405, %v391
  %v407 = vadd.f32 %v406, %v392
  %v408 = vadd.f32 %v407, %v393
  %v409 = vadd.f32 %v408, %v394
  %v410 = vadd.f32 %v409, %v395
  %v411 = vadd.f32 %v410, %v396
  %v412 = vadd.f32 %v411, %v397
  %v413 = vrot.slane %v412, 4
  %v414 = vadd.f32 %v412, %v413
  %v415 = vrot.slane %v414, 2
  %v416 = vadd.f32 %v414, %v415
  %v417 = vrot.slane %v416, 1
  %v418 = vadd.f32 %v416, %v417
  %v419 = vlaneseq
  %v420 = vshrl.u32 %v419, 7
  %vm421 = vcmp.eq.s32.totalorder %v420, 0
  %v422 = vsel %vm421, %v381, 0.0
  %vm423 = vcmp.eq.s32.totalorder %v420, 1
  %v424 = vsel %vm423, %v418, 0.0
  %v425 = vadd.f32 %v422, %v424
  %426 = vst [vmem:[%s4] sm:$0xff] %v425
  // Predicated region
  $region14: #{_lambda_.11} parent=0 // pred_check
    _
  $region15: #{_lambda_.11} parent=0 // pred_check_branch
    %428 = sbr.rel (0) target = $region17
  $region16: #{_lambda_.11} parent=0 // pred_region
    _
  $region17: #{_lambda_.11} parent=0 // pred_fallthru
    _
  // Predicated region
  $region18: #{_lambda_.11} parent=0 // pred_check
    _
  $region19: #{_lambda_.11} parent=0 // pred_check_branch
    %430 = sbr.rel (0) target = $region21
  $region20: #{_lambda_.11} parent=0 // pred_region
    _
  $region21: #{_lambda_.11} parent=0 // pred_fallthru
    _
  // Predicated region
  $region22: #{_lambda_.11} parent=0 // pred_check
    _
  $region23: #{_lambda_.11} parent=0 // pred_check_branch
    %432 = sbr.rel (0) target = $region25
  $region24: #{_lambda_.11} parent=0 // pred_region
    _
  $region25: #{_lambda_.11} parent=0 // pred_fallthru
    _
  // Predicated region
  $region26: #{_lambda_.11} parent=0 // pred_check
    _
  $region27: #{_lambda_.11} parent=0 // pred_check_branch
    %434 = sbr.rel (0) target = $region29
  $region28: #{_lambda_.11} parent=0 // pred_region
    _
  $region29: #{_lambda_.11} parent=0 // pred_fallthru
    _

// kernel: _lambda_.13
$region0: #{_lambda_.13}
  #allocation0 [shape = 'u32[]', space=smem, size = 0x4, offset = 0x4, fixed_abs, tag = 'smem constant byte address 0x4 - core index']
  #allocation1 [shape = 'u32[144,128]{1,0:T(1,128)}', space=vmem, size = 0x12000, scoped, tag = 'internal scratch']
  %s0 = inlined_call_operand.vmem [shape: bf16[128,512], index: 0, kind: input, shape index: {}]
  %s1 = inlined_call_operand.vmem [shape: bf16[512,128], index: 1, kind: input, shape index: {}]
  %s2 = inlined_call_operand.vmem [shape: f32[1,128], index: 2, kind: input, shape index: {}]
  %s3 = inlined_call_operand.vmem [shape: f32[128,128], index: 3, kind: output, shape index: {0}]
  %s4 = inlined_call_operand.vmem [shape: f32[8,128], index: 4, kind: output, shape index: {1}]
  %5 = xla_tuple %s3, %s4
  %s6 = sld [smem:[#allocation0]]
  $region30: #{_lambda_.13} parent=0
    _
  %s8 = ssub.s32 1, %s6
  %s9 = scalar_select 0, %s8, %s6
  // Predicated region
  $region2: #{_lambda_.13} parent=0 // pred_check
    _
  $region3: #{_lambda_.13} parent=0 // pred_check_branch
    %11 = sbr.rel (0) target = $region5
  $region4: #{_lambda_.13} parent=0 // pred_region
    _
  $region5: #{_lambda_.13} parent=0 // pred_fallthru
    _
  // Predicated region
  $region6: #{_lambda_.13} parent=0 // pred_check
    _
  $region7: #{_lambda_.13} parent=0 // pred_check_branch
    %13 = sbr.rel (0) target = $region9
  $region8: #{_lambda_.13} parent=0 // pred_region
    _
  $region9: #{_lambda_.13} parent=0 // pred_fallthru
    _
  // Predicated region
  $region10: #{_lambda_.13} parent=0 // pred_check
    _
  $region11: #{_lambda_.13} parent=0 // pred_check_branch
    %15 = sbr.rel (0) target = $region13
  $region12: #{_lambda_.13} parent=0 // pred_region
    _
  $region13: #{_lambda_.13} parent=0 // pred_fallthru
    _
  %v17 = vld [vmem:[%s0] sm:$0xff]
  %v18 = vld [vmem:[%s0 + $0x8] sm:$0xff]
  %v19 = vld [vmem:[%s0 + $0x10] sm:$0xff]
  %v20 = vld [vmem:[%s0 + $0x18] sm:$0xff]
  %v21 = vld [vmem:[%s0 + $0x20] sm:$0xff]
  %v22 = vld [vmem:[%s0 + $0x28] sm:$0xff]
  %v23 = vld [vmem:[%s0 + $0x30] sm:$0xff]
  %v24 = vld [vmem:[%s0 + $0x38] sm:$0xff]
  %v25 = vld [vmem:[%s0 + $0x40] sm:$0xff]
  %v26 = vld [vmem:[%s0 + $0x48] sm:$0xff]
  %v27 = vld [vmem:[%s0 + $0x50] sm:$0xff]
  %v28 = vld [vmem:[%s0 + $0x58] sm:$0xff]
  %v29 = vld [vmem:[%s0 + $0x60] sm:$0xff]
  %v30 = vld [vmem:[%s0 + $0x68] sm:$0xff]
  %v31 = vld [vmem:[%s0 + $0x70] sm:$0xff]
  %v32 = vld [vmem:[%s0 + $0x78] sm:$0xff]
  %v33 = vld [vmem:[%s0 + $0x80] sm:$0xff]
  %v34 = vld [vmem:[%s0 + $0x88] sm:$0xff]
  %v35 = vld [vmem:[%s0 + $0x90] sm:$0xff]
  %v36 = vld [vmem:[%s0 + $0x98] sm:$0xff]
  %v37 = vld [vmem:[%s0 + $0xa0] sm:$0xff]
  %v38 = vld [vmem:[%s0 + $0xa8] sm:$0xff]
  %v39 = vld [vmem:[%s0 + $0xb0] sm:$0xff]
  %v40 = vld [vmem:[%s0 + $0xb8] sm:$0xff]
  %v41 = vld [vmem:[%s0 + $0xc0] sm:$0xff]
  %v42 = vld [vmem:[%s0 + $0xc8] sm:$0xff]
  %v43 = vld [vmem:[%s0 + $0xd0] sm:$0xff]
  %v44 = vld [vmem:[%s0 + $0xd8] sm:$0xff]
  %v45 = vld [vmem:[%s0 + $0xe0] sm:$0xff]
  %v46 = vld [vmem:[%s0 + $0xe8] sm:$0xff]
  %v47 = vld [vmem:[%s0 + $0xf0] sm:$0xff]
  %v48 = vld [vmem:[%s0 + $0xf8] sm:$0xff]
  %v49 = vld [vmem:[%s1] sm:$0xf]
  %v50 = vld [vmem:[%s1 + $0x4] sm:$0xf]
  %v51 = vld [vmem:[%s1 + $0x8] sm:$0xf]
  %v52 = vld [vmem:[%s1 + $0xc] sm:$0xf]
  %v53 = vld [vmem:[%s1 + $0x10] sm:$0xf]
  %v54 = vld [vmem:[%s1 + $0x14] sm:$0xf]
  %v55 = vld [vmem:[%s1 + $0x18] sm:$0xf]
  %v56 = vld [vmem:[%s1 + $0x1c] sm:$0xf]
  %v57 = vld [vmem:[%s1 + $0x20] sm:$0xf]
  %v58 = vld [vmem:[%s1 + $0x24] sm:$0xf]
  %v59 = vld [vmem:[%s1 + $0x28] sm:$0xf]
  %v60 = vld [vmem:[%s1 + $0x2c] sm:$0xf]
  %v61 = vld [vmem:[%s1 + $0x30] sm:$0xf]
  %v62 = vld [vmem:[%s1 + $0x34] sm:$0xf]
  %v63 = vld [vmem:[%s1 + $0x38] sm:$0xf]
  %v64 = vld [vmem:[%s1 + $0x3c] sm:$0xf]
  %v65 = vld [vmem:[%s1 + $0x40] sm:$0xf]
  %v66 = vld [vmem:[%s1 + $0x44] sm:$0xf]
  %v67 = vld [vmem:[%s1 + $0x48] sm:$0xf]
  %v68 = vld [vmem:[%s1 + $0x4c] sm:$0xf]
  %v69 = vld [vmem:[%s1 + $0x50] sm:$0xf]
  %v70 = vld [vmem:[%s1 + $0x54] sm:$0xf]
  %v71 = vld [vmem:[%s1 + $0x58] sm:$0xf]
  %v72 = vld [vmem:[%s1 + $0x5c] sm:$0xf]
  %v73 = vld [vmem:[%s1 + $0x60] sm:$0xf]
  %v74 = vld [vmem:[%s1 + $0x64] sm:$0xf]
  %v75 = vld [vmem:[%s1 + $0x68] sm:$0xf]
  %v76 = vld [vmem:[%s1 + $0x6c] sm:$0xf]
  %v77 = vld [vmem:[%s1 + $0x70] sm:$0xf]
  %v78 = vld [vmem:[%s1 + $0x74] sm:$0xf]
  %v79 = vld [vmem:[%s1 + $0x78] sm:$0xf]
  %v80 = vld [vmem:[%s1 + $0x7c] sm:$0xf]
  %v81 = vld [vmem:[%s1 + $0x80] sm:$0xf]
  %v82 = vld [vmem:[%s1 + $0x84] sm:$0xf]
  %v83 = vld [vmem:[%s1 + $0x88] sm:$0xf]
  %v84 = vld [vmem:[%s1 + $0x8c] sm:$0xf]
  %v85 = vld [vmem:[%s1 + $0x90] sm:$0xf]
  %v86 = vld [vmem:[%s1 + $0x94] sm:$0xf]
  %v87 = vld [vmem:[%s1 + $0x98] sm:$0xf]
  %v88 = vld [vmem:[%s1 + $0x9c] sm:$0xf]
  %v89 = vld [vmem:[%s1 + $0xa0] sm:$0xf]
  %v90 = vld [vmem:[%s1 + $0xa4] sm:$0xf]
  %v91 = vld [vmem:[%s1 + $0xa8] sm:$0xf]
  %v92 = vld [vmem:[%s1 + $0xac] sm:$0xf]
  %v93 = vld [vmem:[%s1 + $0xb0] sm:$0xf]
  %v94 = vld [vmem:[%s1 + $0xb4] sm:$0xf]
  %v95 = vld [vmem:[%s1 + $0xb8] sm:$0xf]
  %v96 = vld [vmem:[%s1 + $0xbc] sm:$0xf]
  %v97 = vld [vmem:[%s1 + $0xc0] sm:$0xf]
  %v98 = vld [vmem:[%s1 + $0xc4] sm:$0xf]
  %v99 = vld [vmem:[%s1 + $0xc8] sm:$0xf]
  %v100 = vld [vmem:[%s1 + $0xcc] sm:$0xf]
  %v101 = vld [vmem:[%s1 + $0xd0] sm:$0xf]
  %v102 = vld [vmem:[%s1 + $0xd4] sm:$0xf]
  %v103 = vld [vmem:[%s1 + $0xd8] sm:$0xf]
  %v104 = vld [vmem:[%s1 + $0xdc] sm:$0xf]
  %v105 = vld [vmem:[%s1 + $0xe0] sm:$0xf]
  %v106 = vld [vmem:[%s1 + $0xe4] sm:$0xf]
  %v107 = vld [vmem:[%s1 + $0xe8] sm:$0xf]
  %v108 = vld [vmem:[%s1 + $0xec] sm:$0xf]
  %v109 = vld [vmem:[%s1 + $0xf0] sm:$0xf]
  %v110 = vld [vmem:[%s1 + $0xf4] sm:$0xf]
  %v111 = vld [vmem:[%s1 + $0xf8] sm:$0xf]
  %v112 = vld [vmem:[%s1 + $0xfc] sm:$0xf]
  %v113 = vld [vmem:[%s2] sm:$0x1]
  %v115 = vlaneseq
  %v116 = vshrl.u32 %v115, 7
  %v117 = vsub.s32 0, %v116
  %v118 = vrot.slane %v113, %v117
  %v152 = vunpack.c.l.b16 %v17
  %v153 = vunpack.c.h.b16 %v17
  %v154 = vunpack.c.l.b16 %v18
  %v155 = vunpack.c.h.b16 %v18
  %v156 = vunpack.c.l.b16 %v19
  %v157 = vunpack.c.h.b16 %v19
  %v158 = vunpack.c.l.b16 %v20
  %v159 = vunpack.c.h.b16 %v20
  %v160 = vunpack.c.l.b16 %v21
  %v161 = vunpack.c.h.b16 %v21
  %v162 = vunpack.c.l.b16 %v22
  %v163 = vunpack.c.h.b16 %v22
  %v164 = vunpack.c.l.b16 %v23
  %v165 = vunpack.c.h.b16 %v23
  %v166 = vunpack.c.l.b16 %v24
  %v167 = vunpack.c.h.b16 %v24
  %v168 = vunpack.c.l.b16 %v25
  %v169 = vunpack.c.h.b16 %v25
  %v170 = vunpack.c.l.b16 %v26
  %v171 = vunpack.c.h.b16 %v26
  %v172 = vunpack.c.l.b16 %v27
  %v173 = vunpack.c.h.b16 %v27
  %v174 = vunpack.c.l.b16 %v28
  %v175 = vunpack.c.h.b16 %v28
  %v176 = vunpack.c.l.b16 %v29
  %v177 = vunpack.c.h.b16 %v29
  %v178 = vunpack.c.l.b16 %v30
  %v179 = vunpack.c.h.b16 %v30
  %v180 = vunpack.c.l.b16 %v31
  %v181 = vunpack.c.h.b16 %v31
  %v182 = vunpack.c.l.b16 %v32
  %v183 = vunpack.c.h.b16 %v32
  %v184 = vunpack.c.l.b16 %v33
  %v185 = vunpack.c.h.b16 %v33
  %v186 = vunpack.c.l.b16 %v34
  %v187 = vunpack.c.h.b16 %v34
  %v188 = vunpack.c.l.b16 %v35
  %v189 = vunpack.c.h.b16 %v35
  %v190 = vunpack.c.l.b16 %v36
  %v191 = vunpack.c.h.b16 %v36
  %v192 = vunpack.c.l.b16 %v37
  %v193 = vunpack.c.h.b16 %v37
  %v194 = vunpack.c.l.b16 %v38
  %v195 = vunpack.c.h.b16 %v38
  %v196 = vunpack.c.l.b16 %v39
  %v197 = vunpack.c.h.b16 %v39
  %v198 = vunpack.c.l.b16 %v40
  %v199 = vunpack.c.h.b16 %v40
  %v200 = vunpack.c.l.b16 %v41
  %v201 = vunpack.c.h.b16 %v41
  %v202 = vunpack.c.l.b16 %v42
  %v203 = vunpack.c.h.b16 %v42
  %v204 = vunpack.c.l.b16 %v43
  %v205 = vunpack.c.h.b16 %v43
  %v206 = vunpack.c.l.b16 %v44
  %v207 = vunpack.c.h.b16 %v44
  %v208 = vunpack.c.l.b16 %v45
  %v209 = vunpack.c.h.b16 %v45
  %v210 = vunpack.c.l.b16 %v46
  %v211 = vunpack.c.h.b16 %v46
  %v212 = vunpack.c.l.b16 %v47
  %v213 = vunpack.c.h.b16 %v47
  %v214 = vunpack.c.l.b16 %v48
  %v215 = vunpack.c.h.b16 %v48
  %v216 = vpack.c.b16 %v156, %v152
  %v217 = vpack.c.b16 %v157, %v153
  %v218 = vpack.c.b16 %v158, %v154
  %v219 = vpack.c.b16 %v159, %v155
  %v220 = vpack.c.b16 %v164, %v160
  %v221 = vpack.c.b16 %v165, %v161
  %v222 = vpack.c.b16 %v166, %v162
  %v223 = vpack.c.b16 %v167, %v163
  %v224 = vpack.c.b16 %v172, %v168
  %v225 = vpack.c.b16 %v173, %v169
  %v226 = vpack.c.b16 %v174, %v170
  %v227 = vpack.c.b16 %v175, %v171
  %v228 = vpack.c.b16 %v180, %v176
  %v229 = vpack.c.b16 %v181, %v177
  %v230 = vpack.c.b16 %v182, %v178
  %v231 = vpack.c.b16 %v183, %v179
  %v232 = vpack.c.b16 %v188, %v184
  %v233 = vpack.c.b16 %v189, %v185
  %v234 = vpack.c.b16 %v190, %v186
  %v235 = vpack.c.b16 %v191, %v187
  %v236 = vpack.c.b16 %v196, %v192
  %v237 = vpack.c.b16 %v197, %v193
  %v238 = vpack.c.b16 %v198, %v194
  %v239 = vpack.c.b16 %v199, %v195
  %v240 = vpack.c.b16 %v204, %v200
  %v241 = vpack.c.b16 %v205, %v201
  %v242 = vpack.c.b16 %v206, %v202
  %v243 = vpack.c.b16 %v207, %v203
  %v244 = vpack.c.b16 %v212, %v208
  %v245 = vpack.c.b16 %v213, %v209
  %v246 = vpack.c.b16 %v214, %v210
  %v247 = vpack.c.b16 %v215, %v211
  %v344 = vunpack.c.l.b16 %v49
  %v345 = vunpack.c.l.b16 %v50
  %v346 = vunpack.c.l.b16 %v51
  %v347 = vunpack.c.l.b16 %v52
  %v348 = vunpack.c.l.b16 %v53
  %v349 = vunpack.c.l.b16 %v54
  %v350 = vunpack.c.l.b16 %v55
  %v351 = vunpack.c.l.b16 %v56
  %v352 = vunpack.c.l.b16 %v57
  %v353 = vunpack.c.l.b16 %v58
  %v354 = vunpack.c.l.b16 %v59
  %v355 = vunpack.c.l.b16 %v60
  %v356 = vunpack.c.l.b16 %v61
  %v357 = vunpack.c.l.b16 %v62
  %v358 = vunpack.c.l.b16 %v63
  %v359 = vunpack.c.l.b16 %v64
  %v360 = vunpack.c.l.b16 %v65
  %v361 = vunpack.c.l.b16 %v66
  %v362 = vunpack.c.l.b16 %v67
  %v363 = vunpack.c.l.b16 %v68
  %v364 = vunpack.c.l.b16 %v69
  %v365 = vunpack.c.l.b16 %v70
  %v366 = vunpack.c.l.b16 %v71
  %v367 = vunpack.c.l.b16 %v72
  %v368 = vunpack.c.l.b16 %v73
  %v369 = vunpack.c.l.b16 %v74
  %v370 = vunpack.c.l.b16 %v75
  %v371 = vunpack.c.l.b16 %v76
  %v372 = vunpack.c.l.b16 %v77
  %v373 = vunpack.c.l.b16 %v78
  %v374 = vunpack.c.l.b16 %v79
  %v375 = vunpack.c.l.b16 %v80
  %v376 = vunpack.c.l.b16 %v81
  %v377 = vunpack.c.l.b16 %v82
  %v378 = vunpack.c.l.b16 %v83
  %v379 = vunpack.c.l.b16 %v84
  %v380 = vunpack.c.l.b16 %v85
  %v381 = vunpack.c.l.b16 %v86
  %v382 = vunpack.c.l.b16 %v87
  %v383 = vunpack.c.l.b16 %v88
  %v384 = vunpack.c.l.b16 %v89
  %v385 = vunpack.c.l.b16 %v90
  %v386 = vunpack.c.l.b16 %v91
  %v387 = vunpack.c.l.b16 %v92
  %v388 = vunpack.c.l.b16 %v93
  %v389 = vunpack.c.l.b16 %v94
  %v390 = vunpack.c.l.b16 %v95
  %v391 = vunpack.c.l.b16 %v96
  %v392 = vunpack.c.l.b16 %v97
  %v393 = vunpack.c.l.b16 %v98
  %v394 = vunpack.c.l.b16 %v99
  %v395 = vunpack.c.l.b16 %v100
  %v396 = vunpack.c.l.b16 %v101
  %v397 = vunpack.c.l.b16 %v102
  %v398 = vunpack.c.l.b16 %v103
  %v399 = vunpack.c.l.b16 %v104
  %v400 = vunpack.c.l.b16 %v105
  %v401 = vunpack.c.l.b16 %v106
  %v402 = vunpack.c.l.b16 %v107
  %v403 = vunpack.c.l.b16 %v108
  %v404 = vunpack.c.l.b16 %v109
  %v405 = vunpack.c.l.b16 %v110
  %v406 = vunpack.c.l.b16 %v111
  %v407 = vunpack.c.l.b16 %v112
  %v408 = vpack.c.b16 %v345, %v344
  %v409 = vpack.c.b16 %v347, %v346
  %v410 = vpack.c.b16 %v349, %v348
  %v411 = vpack.c.b16 %v351, %v350
  %v412 = vpack.c.b16 %v353, %v352
  %v413 = vpack.c.b16 %v355, %v354
  %v414 = vpack.c.b16 %v357, %v356
  %v415 = vpack.c.b16 %v359, %v358
  %v416 = vpack.c.b16 %v361, %v360
  %v417 = vpack.c.b16 %v363, %v362
  %v418 = vpack.c.b16 %v365, %v364
  %v419 = vpack.c.b16 %v367, %v366
  %v420 = vpack.c.b16 %v369, %v368
  %v421 = vpack.c.b16 %v371, %v370
  %v422 = vpack.c.b16 %v373, %v372
  %v423 = vpack.c.b16 %v375, %v374
  %v424 = vpack.c.b16 %v377, %v376
  %v425 = vpack.c.b16 %v379, %v378
  %v426 = vpack.c.b16 %v381, %v380
  %v427 = vpack.c.b16 %v383, %v382
  %v428 = vpack.c.b16 %v385, %v384
  %v429 = vpack.c.b16 %v387, %v386
  %v430 = vpack.c.b16 %v389, %v388
  %v431 = vpack.c.b16 %v391, %v390
  %v432 = vpack.c.b16 %v393, %v392
  %v433 = vpack.c.b16 %v395, %v394
  %v434 = vpack.c.b16 %v397, %v396
  %v435 = vpack.c.b16 %v399, %v398
  %v436 = vpack.c.b16 %v401, %v400
  %v437 = vpack.c.b16 %v403, %v402
  %v438 = vpack.c.b16 %v405, %v404
  %v439 = vpack.c.b16 %v407, %v406
  %472 = vmatprep.subr.bf16.mxu0 0
  %473 = vmatpush1.bf16.msra.mxu0 %v408
  %474 = vmatprep.subr.bf16.mxu0 0
  %475 = vmatpush1.bf16.msra.mxu0 %v409
  %476 = vmatprep.subr.bf16.mxu0 0
  %477 = vmatpush1.bf16.msra.mxu0 %v410
  %478 = vmatprep.subr.bf16.mxu0 0
  %479 = vmatpush1.bf16.msra.mxu0 %v411
  %480 = vmatprep.subr.bf16.mxu0 0
  %481 = vmatpush1.bf16.msra.mxu0 %v412
  %482 = vmatprep.subr.bf16.mxu0 0
  %483 = vmatpush1.bf16.msra.mxu0 %v413
  %484 = vmatprep.subr.bf16.mxu0 0
  %485 = vmatpush1.bf16.msra.mxu0 %v414
  %486 = vmatprep.subr.bf16.mxu0 0
  %487 = vmatpush1.bf16.msra.mxu0 %v415
  %488 = vmatprep.subr.bf16.mxu0 0
  %489 = vmatpush1.bf16.msra.mxu0 %v416
  %490 = vmatprep.subr.bf16.mxu0 0
  %491 = vmatpush1.bf16.msra.mxu0 %v417
  %492 = vmatprep.subr.bf16.mxu0 0
  %493 = vmatpush1.bf16.msra.mxu0 %v418
  %494 = vmatprep.subr.bf16.mxu0 0
  %495 = vmatpush1.bf16.msra.mxu0 %v419
  %496 = vmatprep.subr.bf16.mxu0 0
  %497 = vmatpush1.bf16.msra.mxu0 %v420
  %498 = vmatprep.subr.bf16.mxu0 0
  %499 = vmatpush1.bf16.msra.mxu0 %v421
  %500 = vmatprep.subr.bf16.mxu0 0
  %501 = vmatpush1.bf16.msra.mxu0 %v422
  %502 = vmatprep.subr.bf16.mxu0 0
  %503 = vmatpush1.bf16.msra.mxu0 %v423
  %504 = vmatprep.mubr.bf16.mxu0 %v217
  %505 = vmatmul.mubr.bf16.gmra.mrb[0].mxu0 %v216
  %v506 = vpop.f32.mrb[0].mxu0
  %v507 = vadd.f32 %v118, %v506
  %v508 = vpop.f32.mrb[0].mxu0
  %v509 = vpop.f32.mrb[0].mxu0
  %v510 = vadd.f32 %v118, %v509
  %v511 = vpop.f32.mrb[0].mxu0
  %512 = vmatprep.mubr.bf16.mxu0 %v221
  %513 = vmatmul.mubr.bf16.gmra.mrb[0].mxu0 %v220
  %v514 = vpop.f32.mrb[0].mxu0
  %v515 = vadd.f32 %v118, %v514
  %v516 = vpop.f32.mrb[0].mxu0
  %v517 = vpop.f32.mrb[0].mxu0
  %v518 = vadd.f32 %v118, %v517
  %v519 = vpop.f32.mrb[0].mxu0
  %520 = vmatprep.mubr.bf16.mxu0 %v225
  %521 = vmatmul.mubr.bf16.gmra.mrb[0].mxu0 %v224
  %v522 = vpop.f32.mrb[0].mxu0
  %v523 = vadd.f32 %v118, %v522
  %v524 = vpop.f32.mrb[0].mxu0
  %v525 = vpop.f32.mrb[0].mxu0
  %v526 = vadd.f32 %v118, %v525
  %v527 = vpop.f32.mrb[0].mxu0
  %528 = vmatprep.mubr.bf16.mxu0 %v229
  %529 = vmatmul.mubr.bf16.gmra.mrb[0].mxu0 %v228
  %v530 = vpop.f32.mrb[0].mxu0
  %v531 = vadd.f32 %v118, %v530
  %v532 = vpop.f32.mrb[0].mxu0
  %v533 = vpop.f32.mrb[0].mxu0
  %v534 = vadd.f32 %v118, %v533
  %v535 = vpop.f32.mrb[0].mxu0
  %536 = vmatprep.mubr.bf16.mxu0 %v233
  %537 = vmatmul.mubr.bf16.gmra.mrb[0].mxu0 %v232
  %v538 = vpop.f32.mrb[0].mxu0
  %v539 = vadd.f32 %v118, %v538
  %v540 = vpop.f32.mrb[0].mxu0
  %v541 = vpop.f32.mrb[0].mxu0
  %v542 = vadd.f32 %v118, %v541
  %v543 = vpop.f32.mrb[0].mxu0
  %544 = vmatprep.mubr.bf16.mxu0 %v237
  %545 = vmatmul.mubr.bf16.gmra.mrb[0].mxu0 %v236
  %v546 = vpop.f32.mrb[0].mxu0
  %v547 = vadd.f32 %v118, %v546
  %v548 = vpop.f32.mrb[0].mxu0
  %v549 = vpop.f32.mrb[0].mxu0
  %v550 = vadd.f32 %v118, %v549
  %v551 = vpop.f32.mrb[0].mxu0
  %552 = vmatprep.mubr.bf16.mxu0 %v241
  %553 = vmatmul.mubr.bf16.gmra.mrb[0].mxu0 %v240
  %v554 = vpop.f32.mrb[0].mxu0
  %v555 = vadd.f32 %v118, %v554
  %v556 = vpop.f32.mrb[0].mxu0
  %v557 = vpop.f32.mrb[0].mxu0
  %v558 = vadd.f32 %v118, %v557
  %v559 = vpop.f32.mrb[0].mxu0
  %560 = vmatprep.mubr.bf16.mxu0 %v245
  %561 = vmatmul.mubr.bf16.gmra.mrb[0].mxu0 %v244
  %v562 = vpop.f32.mrb[0].mxu0
  %v563 = vadd.f32 %v118, %v562
  %v564 = vpop.f32.mrb[0].mxu0
  %v565 = vpop.f32.mrb[0].mxu0
  %v566 = vadd.f32 %v118, %v565
  %v567 = vpop.f32.mrb[0].mxu0
  %568 = vdwg.mxu0
  %569 = vmatprep.subr.bf16.mxu0 0
  %570 = vmatpush1.bf16.msra.mxu0 %v424
  %571 = vmatprep.subr.bf16.mxu0 0
  %572 = vmatpush1.bf16.msra.mxu0 %v425
  %573 = vmatprep.subr.bf16.mxu0 0
  %574 = vmatpush1.bf16.msra.mxu0 %v426
  %575 = vmatprep.subr.bf16.mxu0 0
  %576 = vmatpush1.bf16.msra.mxu0 %v427
  %577 = vmatprep.subr.bf16.mxu0 0
  %578 = vmatpush1.bf16.msra.mxu0 %v428
  %579 = vmatprep.subr.bf16.mxu0 0
  %580 = vmatpush1.bf16.msra.mxu0 %v429
  %581 = vmatprep.subr.bf16.mxu0 0
  %582 = vmatpush1.bf16.msra.mxu0 %v430
  %583 = vmatprep.subr.bf16.mxu0 0
  %584 = vmatpush1.bf16.msra.mxu0 %v431
  %585 = vmatprep.subr.bf16.mxu0 0
  %586 = vmatpush1.bf16.msra.mxu0 %v432
  %587 = vmatprep.subr.bf16.mxu0 0
  %588 = vmatpush1.bf16.msra.mxu0 %v433
  %589 = vmatprep.subr.bf16.mxu0 0
  %590 = vmatpush1.bf16.msra.mxu0 %v434
  %591 = vmatprep.subr.bf16.mxu0 0
  %592 = vmatpush1.bf16.msra.mxu0 %v435
  %593 = vmatprep.subr.bf16.mxu0 0
  %594 = vmatpush1.bf16.msra.mxu0 %v436
  %595 = vmatprep.subr.bf16.mxu0 0
  %596 = vmatpush1.bf16.msra.mxu0 %v437
  %597 = vmatprep.subr.bf16.mxu0 0
  %598 = vmatpush1.bf16.msra.mxu0 %v438
  %599 = vmatprep.subr.bf16.mxu0 0
  %600 = vmatpush1.bf16.msra.mxu0 %v439
  %601 = vmatprep.mubr.bf16.mxu0 %v219
  %602 = vmatmul.mubr.bf16.gmra.mrb[0].mxu0 %v218
  %v603 = vpop.f32.mrb[0].mxu0
  %v604 = vadd.f32 %v507, %v603
  %v605 = vpop.f32.mrb[0].mxu0
  %v606 = vpop.f32.mrb[0].mxu0
  %v607 = vadd.f32 %v510, %v606
  %v608 = vpop.f32.mrb[0].mxu0
  %609 = vmatprep.mubr.bf16.mxu0 %v223
  %610 = vmatmul.mubr.bf16.gmra.mrb[0].mxu0 %v222
  %v611 = vpop.f32.mrb[0].mxu0
  %v612 = vadd.f32 %v515, %v611
  %v613 = vpop.f32.mrb[0].mxu0
  %v614 = vpop.f32.mrb[0].mxu0
  %v615 = vadd.f32 %v518, %v614
  %v616 = vpop.f32.mrb[0].mxu0
  %617 = vmatprep.mubr.bf16.mxu0 %v227
  %618 = vmatmul.mubr.bf16.gmra.mrb[0].mxu0 %v226
  %v619 = vpop.f32.mrb[0].mxu0
  %v620 = vadd.f32 %v523, %v619
  %v621 = vpop.f32.mrb[0].mxu0
  %v622 = vpop.f32.mrb[0].mxu0
  %v623 = vadd.f32 %v526, %v622
  %v624 = vpop.f32.mrb[0].mxu0
  %625 = vmatprep.mubr.bf16.mxu0 %v231
  %626 = vmatmul.mubr.bf16.gmra.mrb[0].mxu0 %v230
  %v627 = vpop.f32.mrb[0].mxu0
  %v628 = vadd.f32 %v531, %v627
  %v629 = vpop.f32.mrb[0].mxu0
  %v630 = vpop.f32.mrb[0].mxu0
  %v631 = vadd.f32 %v534, %v630
  %v632 = vpop.f32.mrb[0].mxu0
  %633 = vmatprep.mubr.bf16.mxu0 %v235
  %634 = vmatmul.mubr.bf16.gmra.mrb[0].mxu0 %v234
  %v635 = vpop.f32.mrb[0].mxu0
  %v636 = vadd.f32 %v539, %v635
  %v637 = vpop.f32.mrb[0].mxu0
  %v638 = vpop.f32.mrb[0].mxu0
  %v639 = vadd.f32 %v542, %v638
  %v640 = vpop.f32.mrb[0].mxu0
  %641 = vmatprep.mubr.bf16.mxu0 %v239
  %642 = vmatmul.mubr.bf16.gmra.mrb[0].mxu0 %v238
  %v643 = vpop.f32.mrb[0].mxu0
  %v644 = vadd.f32 %v547, %v643
  %v645 = vpop.f32.mrb[0].mxu0
  %v646 = vpop.f32.mrb[0].mxu0
  %v647 = vadd.f32 %v550, %v646
  %v648 = vpop.f32.mrb[0].mxu0
  %649 = vmatprep.mubr.bf16.mxu0 %v243
  %650 = vmatmul.mubr.bf16.gmra.mrb[0].mxu0 %v242
  %v651 = vpop.f32.mrb[0].mxu0
  %v652 = vadd.f32 %v555, %v651
  %v653 = vpop.f32.mrb[0].mxu0
  %v654 = vpop.f32.mrb[0].mxu0
  %v655 = vadd.f32 %v558, %v654
  %v656 = vpop.f32.mrb[0].mxu0
  %657 = vmatprep.mubr.bf16.mxu0 %v247
  %658 = vmatmul.mubr.bf16.gmra.mrb[0].mxu0 %v246
  %v659 = vpop.f32.mrb[0].mxu0
  %v660 = vadd.f32 %v563, %v659
  %v661 = vpop.f32.mrb[0].mxu0
  %v662 = vpop.f32.mrb[0].mxu0
  %v663 = vadd.f32 %v566, %v662
  %v664 = vpop.f32.mrb[0].mxu0
  %665 = vdwg.mxu0
  %666 = vst [vmem:[%s3] sm:$0xff] %v604
  %667 = vst [vmem:[%s3 + $0x8] sm:$0xff] %v607
  %668 = vst [vmem:[%s3 + $0x10] sm:$0xff] %v612
  %669 = vst [vmem:[%s3 + $0x18] sm:$0xff] %v615
  %670 = vst [vmem:[%s3 + $0x20] sm:$0xff] %v620
  %671 = vst [vmem:[%s3 + $0x28] sm:$0xff] %v623
  %672 = vst [vmem:[%s3 + $0x30] sm:$0xff] %v628
  %673 = vst [vmem:[%s3 + $0x38] sm:$0xff] %v631
  %674 = vst [vmem:[%s3 + $0x40] sm:$0xff] %v636
  %675 = vst [vmem:[%s3 + $0x48] sm:$0xff] %v639
  %676 = vst [vmem:[%s3 + $0x50] sm:$0xff] %v644
  %677 = vst [vmem:[%s3 + $0x58] sm:$0xff] %v647
  %678 = vst [vmem:[%s3 + $0x60] sm:$0xff] %v652
  %679 = vst [vmem:[%s3 + $0x68] sm:$0xff] %v655
  %680 = vst [vmem:[%s3 + $0x70] sm:$0xff] %v660
  %681 = vst [vmem:[%s3 + $0x78] sm:$0xff] %v663
  %v682 = vadd.f32 %v604, %v607
  %v683 = vadd.f32 %v682, %v612
  %v684 = vadd.f32 %v683, %v615
  %v685 = vadd.f32 %v684, %v620
  %v686 = vadd.f32 %v685, %v623
  %v687 = vadd.f32 %v686, %v628
  %v688 = vadd.f32 %v687, %v631
  %v689 = vadd.f32 %v688, %v636
  %v690 = vadd.f32 %v689, %v639
  %v691 = vadd.f32 %v690, %v644
  %v692 = vadd.f32 %v691, %v647
  %v693 = vadd.f32 %v692, %v652
  %v694 = vadd.f32 %v693, %v655
  %v695 = vadd.f32 %v694, %v660
  %v696 = vadd.f32 %v695, %v663
  %v697 = vrot.slane %v696, 4
  %v698 = vadd.f32 %v696, %v697
  %v699 = vrot.slane %v698, 2
  %v700 = vadd.f32 %v698, %v699
  %v701 = vrot.slane %v700, 1
  %v702 = vadd.f32 %v700, %v701
  %v703 = vmul.f32 %v604, %v604
  %v704 = vmul.f32 %v607, %v607
  %v705 = vmul.f32 %v612, %v612
  %v706 = vmul.f32 %v615, %v615
  %v707 = vmul.f32 %v620, %v620
  %v708 = vmul.f32 %v623, %v623
  %v709 = vmul.f32 %v628, %v628
  %v710 = vmul.f32 %v631, %v631
  %v711 = vmul.f32 %v636, %v636
  %v712 = vmul.f32 %v639, %v639
  %v713 = vmul.f32 %v644, %v644
  %v714 = vmul.f32 %v647, %v647
  %v715 = vmul.f32 %v652, %v652
  %v716 = vmul.f32 %v655, %v655
  %v717 = vmul.f32 %v660, %v660
  %v718 = vmul.f32 %v663, %v663
  %v719 = vadd.f32 %v703, %v704
  %v720 = vadd.f32 %v719, %v705
  %v721 = vadd.f32 %v720, %v706
  %v722 = vadd.f32 %v721, %v707
  %v723 = vadd.f32 %v722, %v708
  %v724 = vadd.f32 %v723, %v709
  %v725 = vadd.f32 %v724, %v710
  %v726 = vadd.f32 %v725, %v711
  %v727 = vadd.f32 %v726, %v712
  %v728 = vadd.f32 %v727, %v713
  %v729 = vadd.f32 %v728, %v714
  %v730 = vadd.f32 %v729, %v715
  %v731 = vadd.f32 %v730, %v716
  %v732 = vadd.f32 %v731, %v717
  %v733 = vadd.f32 %v732, %v718
  %v734 = vrot.slane %v733, 4
  %v735 = vadd.f32 %v733, %v734
  %v736 = vrot.slane %v735, 2
  %v737 = vadd.f32 %v735, %v736
  %v738 = vrot.slane %v737, 1
  %v739 = vadd.f32 %v737, %v738
  %v740 = vlaneseq
  %v741 = vshrl.u32 %v740, 7
  %vm742 = vcmp.eq.s32.totalorder %v741, 0
  %v743 = vsel %vm742, %v702, 0.0
  %vm744 = vcmp.eq.s32.totalorder %v741, 1
  %v745 = vsel %vm744, %v739, 0.0
  %v746 = vadd.f32 %v743, %v745
  %747 = vst [vmem:[%s4] sm:$0xff] %v746
  // Predicated region
  $region14: #{_lambda_.13} parent=0 // pred_check
    _
  $region15: #{_lambda_.13} parent=0 // pred_check_branch
    %749 = sbr.rel (0) target = $region17
  $region16: #{_lambda_.13} parent=0 // pred_region
    _
  $region17: #{_lambda_.13} parent=0 // pred_fallthru
    _
  // Predicated region
  $region18: #{_lambda_.13} parent=0 // pred_check
    _
  $region19: #{_lambda_.13} parent=0 // pred_check_branch
    %751 = sbr.rel (0) target = $region21
  $region20: #{_lambda_.13} parent=0 // pred_region
    _
  $region21: #{_lambda_.13} parent=0 // pred_fallthru
    _
  // Predicated region
  $region22: #{_lambda_.13} parent=0 // pred_check
    _
  $region23: #{_lambda_.13} parent=0 // pred_check_branch
    %753 = sbr.rel (0) target = $region25
  $region24: #{_lambda_.13} parent=0 // pred_region
    _
  $region25: #{_lambda_.13} parent=0 // pred_fallthru
    _
  // Predicated region
  $region26: #{_lambda_.13} parent=0 // pred_check
    _
  $region27: #{_lambda_.13} parent=0 // pred_check_branch
    %755 = sbr.rel (0) target = $region29
  $region28: #{_lambda_.13} parent=0 // pred_region
    _
  $region29: #{_lambda_.13} parent=0 // pred_fallthru
    _

// kernel: _lambda_.15
$region0: #{_lambda_.15}
  #allocation0 [shape = 'u32[]', space=smem, size = 0x4, offset = 0x4, fixed_abs, tag = 'smem constant byte address 0x4 - core index']
  #allocation1 [shape = 'u32[144,128]{1,0:T(1,128)}', space=vmem, size = 0x12000, scoped, tag = 'internal scratch']
  %s0 = inlined_call_operand.vmem [shape: bf16[128,1024], index: 0, kind: input, shape index: {}]
  %s1 = inlined_call_operand.vmem [shape: bf16[1024,128], index: 1, kind: input, shape index: {}]
  %s2 = inlined_call_operand.vmem [shape: f32[1,128], index: 2, kind: input, shape index: {}]
  %s3 = inlined_call_operand.vmem [shape: f32[128,128], index: 3, kind: output, shape index: {}]
  %s4 = sld [smem:[#allocation0]]
  $region22: #{_lambda_.15} parent=0
    _
  %s6 = ssub.s32 1, %s4
  %s7 = scalar_select 0, %s6, %s4
  // Predicated region
  $region2: #{_lambda_.15} parent=0 // pred_check
    _
  $region3: #{_lambda_.15} parent=0 // pred_check_branch
    %9 = sbr.rel (0) target = $region5
  $region4: #{_lambda_.15} parent=0 // pred_region
    _
  $region5: #{_lambda_.15} parent=0 // pred_fallthru
    _
  // Predicated region
  $region6: #{_lambda_.15} parent=0 // pred_check
    _
  $region7: #{_lambda_.15} parent=0 // pred_check_branch
    %11 = sbr.rel (0) target = $region9
  $region8: #{_lambda_.15} parent=0 // pred_region
    _
  $region9: #{_lambda_.15} parent=0 // pred_fallthru
    _
  // Predicated region
  $region10: #{_lambda_.15} parent=0 // pred_check
    _
  $region11: #{_lambda_.15} parent=0 // pred_check_branch
    %13 = sbr.rel (0) target = $region13
  $region12: #{_lambda_.15} parent=0 // pred_region
    _
  $region13: #{_lambda_.15} parent=0 // pred_fallthru
    _
  %v15 = vld [vmem:[%s0] sm:$0xff]
  %v16 = vld [vmem:[%s0 + $0x8] sm:$0xff]
  %v17 = vld [vmem:[%s0 + $0x10] sm:$0xff]
  %v18 = vld [vmem:[%s0 + $0x18] sm:$0xff]
  %v19 = vld [vmem:[%s0 + $0x20] sm:$0xff]
  %v20 = vld [vmem:[%s0 + $0x28] sm:$0xff]
  %v21 = vld [vmem:[%s0 + $0x30] sm:$0xff]
  %v22 = vld [vmem:[%s0 + $0x38] sm:$0xff]
  %v23 = vld [vmem:[%s0 + $0x40] sm:$0xff]
  %v24 = vld [vmem:[%s0 + $0x48] sm:$0xff]
  %v25 = vld [vmem:[%s0 + $0x50] sm:$0xff]
  %v26 = vld [vmem:[%s0 + $0x58] sm:$0xff]
  %v27 = vld [vmem:[%s0 + $0x60] sm:$0xff]
  %v28 = vld [vmem:[%s0 + $0x68] sm:$0xff]
  %v29 = vld [vmem:[%s0 + $0x70] sm:$0xff]
  %v30 = vld [vmem:[%s0 + $0x78] sm:$0xff]
  %v31 = vld [vmem:[%s0 + $0x80] sm:$0xff]
  %v32 = vld [vmem:[%s0 + $0x88] sm:$0xff]
  %v33 = vld [vmem:[%s0 + $0x90] sm:$0xff]
  %v34 = vld [vmem:[%s0 + $0x98] sm:$0xff]
  %v35 = vld [vmem:[%s0 + $0xa0] sm:$0xff]
  %v36 = vld [vmem:[%s0 + $0xa8] sm:$0xff]
  %v37 = vld [vmem:[%s0 + $0xb0] sm:$0xff]
  %v38 = vld [vmem:[%s0 + $0xb8] sm:$0xff]
  %v39 = vld [vmem:[%s0 + $0xc0] sm:$0xff]
  %v40 = vld [vmem:[%s0 + $0xc8] sm:$0xff]
  %v41 = vld [vmem:[%s0 + $0xd0] sm:$0xff]
  %v42 = vld [vmem:[%s0 + $0xd8] sm:$0xff]
  %v43 = vld [vmem:[%s0 + $0xe0] sm:$0xff]
  %v44 = vld [vmem:[%s0 + $0xe8] sm:$0xff]
  %v45 = vld [vmem:[%s0 + $0xf0] sm:$0xff]
  %v46 = vld [vmem:[%s0 + $0xf8] sm:$0xff]
  %v47 = vld [vmem:[%s0 + $0x100] sm:$0xff]
  %v48 = vld [vmem:[%s0 + $0x108] sm:$0xff]
  %v49 = vld [vmem:[%s0 + $0x110] sm:$0xff]
  %v50 = vld [vmem:[%s0 + $0x118] sm:$0xff]
  %v51 = vld [vmem:[%s0 + $0x120] sm:$0xff]
  %v52 = vld [vmem:[%s0 + $0x128] sm:$0xff]
  %v53 = vld [vmem:[%s0 + $0x130] sm:$0xff]
  %v54 = vld [vmem:[%s0 + $0x138] sm:$0xff]
  %v55 = vld [vmem:[%s0 + $0x140] sm:$0xff]
  %v56 = vld [vmem:[%s0 + $0x148] sm:$0xff]
  %v57 = vld [vmem:[%s0 + $0x150] sm:$0xff]
  %v58 = vld [vmem:[%s0 + $0x158] sm:$0xff]
  %v59 = vld [vmem:[%s0 + $0x160] sm:$0xff]
  %v60 = vld [vmem:[%s0 + $0x168] sm:$0xff]
  %v61 = vld [vmem:[%s0 + $0x170] sm:$0xff]
  %v62 = vld [vmem:[%s0 + $0x178] sm:$0xff]
  %v63 = vld [vmem:[%s0 + $0x180] sm:$0xff]
  %v64 = vld [vmem:[%s0 + $0x188] sm:$0xff]
  %v65 = vld [vmem:[%s0 + $0x190] sm:$0xff]
  %v66 = vld [vmem:[%s0 + $0x198] sm:$0xff]
  %v67 = vld [vmem:[%s0 + $0x1a0] sm:$0xff]
  %v68 = vld [vmem:[%s0 + $0x1a8] sm:$0xff]
  %v69 = vld [vmem:[%s0 + $0x1b0] sm:$0xff]
  %v70 = vld [vmem:[%s0 + $0x1b8] sm:$0xff]
  %v71 = vld [vmem:[%s0 + $0x1c0] sm:$0xff]
  %v72 = vld [vmem:[%s0 + $0x1c8] sm:$0xff]
  %v73 = vld [vmem:[%s0 + $0x1d0] sm:$0xff]
  %v74 = vld [vmem:[%s0 + $0x1d8] sm:$0xff]
  %v75 = vld [vmem:[%s0 + $0x1e0] sm:$0xff]
  %v76 = vld [vmem:[%s0 + $0x1e8] sm:$0xff]
  %v77 = vld [vmem:[%s0 + $0x1f0] sm:$0xff]
  %v78 = vld [vmem:[%s0 + $0x1f8] sm:$0xff]
  %v79 = vld [vmem:[%s1] sm:$0xf]
  %v80 = vld [vmem:[%s1 + $0x4] sm:$0xf]
  %v81 = vld [vmem:[%s1 + $0x8] sm:$0xf]
  %v82 = vld [vmem:[%s1 + $0xc] sm:$0xf]
  %v83 = vld [vmem:[%s1 + $0x10] sm:$0xf]
  %v84 = vld [vmem:[%s1 + $0x14] sm:$0xf]
  %v85 = vld [vmem:[%s1 + $0x18] sm:$0xf]
  %v86 = vld [vmem:[%s1 + $0x1c] sm:$0xf]
  %v87 = vld [vmem:[%s1 + $0x20] sm:$0xf]
  %v88 = vld [vmem:[%s1 + $0x24] sm:$0xf]
  %v89 = vld [vmem:[%s1 + $0x28] sm:$0xf]
  %v90 = vld [vmem:[%s1 + $0x2c] sm:$0xf]
  %v91 = vld [vmem:[%s1 + $0x30] sm:$0xf]
  %v92 = vld [vmem:[%s1 + $0x34] sm:$0xf]
  %v93 = vld [vmem:[%s1 + $0x38] sm:$0xf]
  %v94 = vld [vmem:[%s1 + $0x3c] sm:$0xf]
  %v95 = vld [vmem:[%s1 + $0x40] sm:$0xf]
  %v96 = vld [vmem:[%s1 + $0x44] sm:$0xf]
  %v97 = vld [vmem:[%s1 + $0x48] sm:$0xf]
  %v98 = vld [vmem:[%s1 + $0x4c] sm:$0xf]
  %v99 = vld [vmem:[%s1 + $0x50] sm:$0xf]
  %v100 = vld [vmem:[%s1 + $0x54] sm:$0xf]
  %v101 = vld [vmem:[%s1 + $0x58] sm:$0xf]
  %v102 = vld [vmem:[%s1 + $0x5c] sm:$0xf]
  %v103 = vld [vmem:[%s1 + $0x60] sm:$0xf]
  %v104 = vld [vmem:[%s1 + $0x64] sm:$0xf]
  %v105 = vld [vmem:[%s1 + $0x68] sm:$0xf]
  %v106 = vld [vmem:[%s1 + $0x6c] sm:$0xf]
  %v107 = vld [vmem:[%s1 + $0x70] sm:$0xf]
  %v108 = vld [vmem:[%s1 + $0x74] sm:$0xf]
  %v109 = vld [vmem:[%s1 + $0x78] sm:$0xf]
  %v110 = vld [vmem:[%s1 + $0x7c] sm:$0xf]
  %v111 = vld [vmem:[%s1 + $0x80] sm:$0xf]
  %v112 = vld [vmem:[%s1 + $0x84] sm:$0xf]
  %v113 = vld [vmem:[%s1 + $0x88] sm:$0xf]
  %v114 = vld [vmem:[%s1 + $0x8c] sm:$0xf]
  %v115 = vld [vmem:[%s1 + $0x90] sm:$0xf]
  %v116 = vld [vmem:[%s1 + $0x94] sm:$0xf]
  %v117 = vld [vmem:[%s1 + $0x98] sm:$0xf]
  %v118 = vld [vmem:[%s1 + $0x9c] sm:$0xf]
  %v119 = vld [vmem:[%s1 + $0xa0] sm:$0xf]
  %v120 = vld [vmem:[%s1 + $0xa4] sm:$0xf]
  %v121 = vld [vmem:[%s1 + $0xa8] sm:$0xf]
  %v122 = vld [vmem:[%s1 + $0xac] sm:$0xf]
  %v123 = vld [vmem:[%s1 + $0xb0] sm:$0xf]
  %v124 = vld [vmem:[%s1 + $0xb4] sm:$0xf]
  %v125 = vld [vmem:[%s1 + $0xb8] sm:$0xf]
  %v126 = vld [vmem:[%s1 + $0xbc] sm:$0xf]
  %v127 = vld [vmem:[%s1 + $0xc0] sm:$0xf]
  %v128 = vld [vmem:[%s1 + $0xc4] sm:$0xf]
  %v129 = vld [vmem:[%s1 + $0xc8] sm:$0xf]
  %v130 = vld [vmem:[%s1 + $0xcc] sm:$0xf]
  %v131 = vld [vmem:[%s1 + $0xd0] sm:$0xf]
  %v132 = vld [vmem:[%s1 + $0xd4] sm:$0xf]
  %v133 = vld [vmem:[%s1 + $0xd8] sm:$0xf]
  %v134 = vld [vmem:[%s1 + $0xdc] sm:$0xf]
  %v135 = vld [vmem:[%s1 + $0xe0] sm:$0xf]
  %v136 = vld [vmem:[%s1 + $0xe4] sm:$0xf]
  %v137 = vld [vmem:[%s1 + $0xe8] sm:$0xf]
  %v138 = vld [vmem:[%s1 + $0xec] sm:$0xf]
  %v139 = vld [vmem:[%s1 + $0xf0] sm:$0xf]
  %v140 = vld [vmem:[%s1 + $0xf4] sm:$0xf]
  %v141 = vld [vmem:[%s1 + $0xf8] sm:$0xf]
  %v142 = vld [vmem:[%s1 + $0xfc] sm:$0xf]
  %v143 = vld [vmem:[%s1 + $0x100] sm:$0xf]
  %v144 = vld [vmem:[%s1 + $0x104] sm:$0xf]
  %v145 = vld [vmem:[%s1 + $0x108] sm:$0xf]
  %v146 = vld [vmem:[%s1 + $0x10c] sm:$0xf]
  %v147 = vld [vmem:[%s1 + $0x110] sm:$0xf]
  %v148 = vld [vmem:[%s1 + $0x114] sm:$0xf]
  %v149 = vld [vmem:[%s1 + $0x118] sm:$0xf]
  %v150 = vld [vmem:[%s1 + $0x11c] sm:$0xf]
  %v151 = vld [vmem:[%s1 + $0x120] sm:$0xf]
  %v152 = vld [vmem:[%s1 + $0x124] sm:$0xf]
  %v153 = vld [vmem:[%s1 + $0x128] sm:$0xf]
  %v154 = vld [vmem:[%s1 + $0x12c] sm:$0xf]
  %v155 = vld [vmem:[%s1 + $0x130] sm:$0xf]
  %v156 = vld [vmem:[%s1 + $0x134] sm:$0xf]
  %v157 = vld [vmem:[%s1 + $0x138] sm:$0xf]
  %v158 = vld [vmem:[%s1 + $0x13c] sm:$0xf]
  %v159 = vld [vmem:[%s1 + $0x140] sm:$0xf]
  %v160 = vld [vmem:[%s1 + $0x144] sm:$0xf]
  %v161 = vld [vmem:[%s1 + $0x148] sm:$0xf]
  %v162 = vld [vmem:[%s1 + $0x14c] sm:$0xf]
  %v163 = vld [vmem:[%s1 + $0x150] sm:$0xf]
  %v164 = vld [vmem:[%s1 + $0x154] sm:$0xf]
  %v165 = vld [vmem:[%s1 + $0x158] sm:$0xf]
  %v166 = vld [vmem:[%s1 + $0x15c] sm:$0xf]
  %v167 = vld [vmem:[%s1 + $0x160] sm:$0xf]
  %v168 = vld [vmem:[%s1 + $0x164] sm:$0xf]
  %v169 = vld [vmem:[%s1 + $0x168] sm:$0xf]
  %v170 = vld [vmem:[%s1 + $0x16c] sm:$0xf]
  %v171 = vld [vmem:[%s1 + $0x170] sm:$0xf]
  %v172 = vld [vmem:[%s1 + $0x174] sm:$0xf]
  %v173 = vld [vmem:[%s1 + $0x178] sm:$0xf]
  %v174 = vld [vmem:[%s1 + $0x17c] sm:$0xf]
  %v175 = vld [vmem:[%s1 + $0x180] sm:$0xf]
  %v176 = vld [vmem:[%s1 + $0x184] sm:$0xf]
  %v177 = vld [vmem:[%s1 + $0x188] sm:$0xf]
  %v178 = vld [vmem:[%s1 + $0x18c] sm:$0xf]
  %v179 = vld [vmem:[%s1 + $0x190] sm:$0xf]
  %v180 = vld [vmem:[%s1 + $0x194] sm:$0xf]
  %v181 = vld [vmem:[%s1 + $0x198] sm:$0xf]
  %v182 = vld [vmem:[%s1 + $0x19c] sm:$0xf]
  %v183 = vld [vmem:[%s1 + $0x1a0] sm:$0xf]
  %v184 = vld [vmem:[%s1 + $0x1a4] sm:$0xf]
  %v185 = vld [vmem:[%s1 + $0x1a8] sm:$0xf]
  %v186 = vld [vmem:[%s1 + $0x1ac] sm:$0xf]
  %v187 = vld [vmem:[%s1 + $0x1b0] sm:$0xf]
  %v188 = vld [vmem:[%s1 + $0x1b4] sm:$0xf]
  %v189 = vld [vmem:[%s1 + $0x1b8] sm:$0xf]
  %v190 = vld [vmem:[%s1 + $0x1bc] sm:$0xf]
  %v191 = vld [vmem:[%s1 + $0x1c0] sm:$0xf]
  %v192 = vld [vmem:[%s1 + $0x1c4] sm:$0xf]
  %v193 = vld [vmem:[%s1 + $0x1c8] sm:$0xf]
  %v194 = vld [vmem:[%s1 + $0x1cc] sm:$0xf]
  %v195 = vld [vmem:[%s1 + $0x1d0] sm:$0xf]
  %v196 = vld [vmem:[%s1 + $0x1d4] sm:$0xf]
  %v197 = vld [vmem:[%s1 + $0x1d8] sm:$0xf]
  %v198 = vld [vmem:[%s1 + $0x1dc] sm:$0xf]
  %v199 = vld [vmem:[%s1 + $0x1e0] sm:$0xf]
  %v200 = vld [vmem:[%s1 + $0x1e4] sm:$0xf]
  %v201 = vld [vmem:[%s1 + $0x1e8] sm:$0xf]
  %v202 = vld [vmem:[%s1 + $0x1ec] sm:$0xf]
  %v203 = vld [vmem:[%s1 + $0x1f0] sm:$0xf]
  %v204 = vld [vmem:[%s1 + $0x1f4] sm:$0xf]
  %v205 = vld [vmem:[%s1 + $0x1f8] sm:$0xf]
  %v206 = vld [vmem:[%s1 + $0x1fc] sm:$0xf]
  %v207 = vld [vmem:[%s2] sm:$0x1]
  %v209 = vlaneseq
  %v210 = vshrl.u32 %v209, 7
  %v211 = vsub.s32 0, %v210
  %v212 = vrot.slane %v207, %v211
  %v278 = vunpack.c.l.b16 %v15
  %v279 = vunpack.c.h.b16 %v15
  %v280 = vunpack.c.l.b16 %v16
  %v281 = vunpack.c.h.b16 %v16
  %v282 = vunpack.c.l.b16 %v17
  %v283 = vunpack.c.h.b16 %v17
  %v284 = vunpack.c.l.b16 %v18
  %v285 = vunpack.c.h.b16 %v18
  %v286 = vunpack.c.l.b16 %v19
  %v287 = vunpack.c.h.b16 %v19
  %v288 = vunpack.c.l.b16 %v20
  %v289 = vunpack.c.h.b16 %v20
  %v290 = vunpack.c.l.b16 %v21
  %v291 = vunpack.c.h.b16 %v21
  %v292 = vunpack.c.l.b16 %v22
  %v293 = vunpack.c.h.b16 %v22
  %v294 = vunpack.c.l.b16 %v23
  %v295 = vunpack.c.h.b16 %v23
  %v296 = vunpack.c.l.b16 %v24
  %v297 = vunpack.c.h.b16 %v24
  %v298 = vunpack.c.l.b16 %v25
  %v299 = vunpack.c.h.b16 %v25
  %v300 = vunpack.c.l.b16 %v26
  %v301 = vunpack.c.h.b16 %v26
  %v302 = vunpack.c.l.b16 %v27
  %v303 = vunpack.c.h.b16 %v27
  %v304 = vunpack.c.l.b16 %v28
  %v305 = vunpack.c.h.b16 %v28
  %v306 = vunpack.c.l.b16 %v29
  %v307 = vunpack.c.h.b16 %v29
  %v308 = vunpack.c.l.b16 %v30
  %v309 = vunpack.c.h.b16 %v30
  %v310 = vunpack.c.l.b16 %v31
  %v311 = vunpack.c.h.b16 %v31
  %v312 = vunpack.c.l.b16 %v32
  %v313 = vunpack.c.h.b16 %v32
  %v314 = vunpack.c.l.b16 %v33
  %v315 = vunpack.c.h.b16 %v33
  %v316 = vunpack.c.l.b16 %v34
  %v317 = vunpack.c.h.b16 %v34
  %v318 = vunpack.c.l.b16 %v35
  %v319 = vunpack.c.h.b16 %v35
  %v320 = vunpack.c.l.b16 %v36
  %v321 = vunpack.c.h.b16 %v36
  %v322 = vunpack.c.l.b16 %v37
  %v323 = vunpack.c.h.b16 %v37
  %v324 = vunpack.c.l.b16 %v38
  %v325 = vunpack.c.h.b16 %v38
  %v326 = vunpack.c.l.b16 %v39
  %v327 = vunpack.c.h.b16 %v39
  %v328 = vunpack.c.l.b16 %v40
  %v329 = vunpack.c.h.b16 %v40
  %v330 = vunpack.c.l.b16 %v41
  %v331 = vunpack.c.h.b16 %v41
  %v332 = vunpack.c.l.b16 %v42
  %v333 = vunpack.c.h.b16 %v42
  %v334 = vunpack.c.l.b16 %v43
  %v335 = vunpack.c.h.b16 %v43
  %v336 = vunpack.c.l.b16 %v44
  %v337 = vunpack.c.h.b16 %v44
  %v338 = vunpack.c.l.b16 %v45
  %v339 = vunpack.c.h.b16 %v45
  %v340 = vunpack.c.l.b16 %v46
  %v341 = vunpack.c.h.b16 %v46
  %v342 = vunpack.c.l.b16 %v47
  %v343 = vunpack.c.h.b16 %v47
  %v344 = vunpack.c.l.b16 %v48
  %v345 = vunpack.c.h.b16 %v48
  %v346 = vunpack.c.l.b16 %v49
  %v347 = vunpack.c.h.b16 %v49
  %v348 = vunpack.c.l.b16 %v50
  %v349 = vunpack.c.h.b16 %v50
  %v350 = vunpack.c.l.b16 %v51
  %v351 = vunpack.c.h.b16 %v51
  %v352 = vunpack.c.l.b16 %v52
  %v353 = vunpack.c.h.b16 %v52
  %v354 = vunpack.c.l.b16 %v53
  %v355 = vunpack.c.h.b16 %v53
  %v356 = vunpack.c.l.b16 %v54
  %v357 = vunpack.c.h.b16 %v54
  %v358 = vunpack.c.l.b16 %v55
  %v359 = vunpack.c.h.b16 %v55
  %v360 = vunpack.c.l.b16 %v56
  %v361 = vunpack.c.h.b16 %v56
  %v362 = vunpack.c.l.b16 %v57
  %v363 = vunpack.c.h.b16 %v57
  %v364 = vunpack.c.l.b16 %v58
  %v365 = vunpack.c.h.b16 %v58
  %v366 = vunpack.c.l.b16 %v59
  %v367 = vunpack.c.h.b16 %v59
  %v368 = vunpack.c.l.b16 %v60
  %v369 = vunpack.c.h.b16 %v60
  %v370 = vunpack.c.l.b16 %v61
  %v371 = vunpack.c.h.b16 %v61
  %v372 = vunpack.c.l.b16 %v62
  %v373 = vunpack.c.h.b16 %v62
  %v374 = vunpack.c.l.b16 %v63
  %v375 = vunpack.c.h.b16 %v63
  %v376 = vunpack.c.l.b16 %v64
  %v377 = vunpack.c.h.b16 %v64
  %v378 = vunpack.c.l.b16 %v65
  %v379 = vunpack.c.h.b16 %v65
  %v380 = vunpack.c.l.b16 %v66
  %v381 = vunpack.c.h.b16 %v66
  %v382 = vunpack.c.l.b16 %v67
  %v383 = vunpack.c.h.b16 %v67
  %v384 = vunpack.c.l.b16 %v68
  %v385 = vunpack.c.h.b16 %v68
  %v386 = vunpack.c.l.b16 %v69
  %v387 = vunpack.c.h.b16 %v69
  %v388 = vunpack.c.l.b16 %v70
  %v389 = vunpack.c.h.b16 %v70
  %v390 = vunpack.c.l.b16 %v71
  %v391 = vunpack.c.h.b16 %v71
  %v392 = vunpack.c.l.b16 %v72
  %v393 = vunpack.c.h.b16 %v72
  %v394 = vunpack.c.l.b16 %v73
  %v395 = vunpack.c.h.b16 %v73
  %v396 = vunpack.c.l.b16 %v74
  %v397 = vunpack.c.h.b16 %v74
  %v398 = vunpack.c.l.b16 %v75
  %v399 = vunpack.c.h.b16 %v75
  %v400 = vunpack.c.l.b16 %v76
  %v401 = vunpack.c.h.b16 %v76
  %v402 = vunpack.c.l.b16 %v77
  %v403 = vunpack.c.h.b16 %v77
  %v404 = vunpack.c.l.b16 %v78
  %v405 = vunpack.c.h.b16 %v78
  %v406 = vpack.c.b16 %v286, %v278
  %v407 = vpack.c.b16 %v287, %v279
  %v408 = vpack.c.b16 %v288, %v280
  %v409 = vpack.c.b16 %v289, %v281
  %v410 = vpack.c.b16 %v290, %v282
  %v411 = vpack.c.b16 %v291, %v283
  %v412 = vpack.c.b16 %v292, %v284
  %v413 = vpack.c.b16 %v293, %v285
  %v414 = vpack.c.b16 %v302, %v294
  %v415 = vpack.c.b16 %v303, %v295
  %v416 = vpack.c.b16 %v304, %v296
  %v417 = vpack.c.b16 %v305, %v297
  %v418 = vpack.c.b16 %v306, %v298
  %v419 = vpack.c.b16 %v307, %v299
  %v420 = vpack.c.b16 %v308, %v300
  %v421 = vpack.c.b16 %v309, %v301
  %v422 = vpack.c.b16 %v318, %v310
  %v423 = vpack.c.b16 %v319, %v311
  %v424 = vpack.c.b16 %v320, %v312
  %v425 = vpack.c.b16 %v321, %v313
  %v426 = vpack.c.b16 %v322, %v314
  %v427 = vpack.c.b16 %v323, %v315
  %v428 = vpack.c.b16 %v324, %v316
  %v429 = vpack.c.b16 %v325, %v317
  %v430 = vpack.c.b16 %v334, %v326
  %v431 = vpack.c.b16 %v335, %v327
  %v432 = vpack.c.b16 %v336, %v328
  %v433 = vpack.c.b16 %v337, %v329
  %v434 = vpack.c.b16 %v338, %v330
  %v435 = vpack.c.b16 %v339, %v331
  %v436 = vpack.c.b16 %v340, %v332
  %v437 = vpack.c.b16 %v341, %v333
  %v438 = vpack.c.b16 %v350, %v342
  %v439 = vpack.c.b16 %v351, %v343
  %v440 = vpack.c.b16 %v352, %v344
  %v441 = vpack.c.b16 %v353, %v345
  %v442 = vpack.c.b16 %v354, %v346
  %v443 = vpack.c.b16 %v355, %v347
  %v444 = vpack.c.b16 %v356, %v348
  %v445 = vpack.c.b16 %v357, %v349
  %v446 = vpack.c.b16 %v366, %v358
  %v447 = vpack.c.b16 %v367, %v359
  %v448 = vpack.c.b16 %v368, %v360
  %v449 = vpack.c.b16 %v369, %v361
  %v450 = vpack.c.b16 %v370, %v362
  %v451 = vpack.c.b16 %v371, %v363
  %v452 = vpack.c.b16 %v372, %v364
  %v453 = vpack.c.b16 %v373, %v365
  %v454 = vpack.c.b16 %v382, %v374
  %v455 = vpack.c.b16 %v383, %v375
  %v456 = vpack.c.b16 %v384, %v376
  %v457 = vpack.c.b16 %v385, %v377
  %v458 = vpack.c.b16 %v386, %v378
  %v459 = vpack.c.b16 %v387, %v379
  %v460 = vpack.c.b16 %v388, %v380
  %v461 = vpack.c.b16 %v389, %v381
  %v462 = vpack.c.b16 %v398, %v390
  %v463 = vpack.c.b16 %v399, %v391
  %v464 = vpack.c.b16 %v400, %v392
  %v465 = vpack.c.b16 %v401, %v393
  %v466 = vpack.c.b16 %v402, %v394
  %v467 = vpack.c.b16 %v403, %v395
  %v468 = vpack.c.b16 %v404, %v396
  %v469 = vpack.c.b16 %v405, %v397
  %v662 = vunpack.c.l.b16 %v79
  %v663 = vunpack.c.l.b16 %v80
  %v664 = vunpack.c.l.b16 %v81
  %v665 = vunpack.c.l.b16 %v82
  %v666 = vunpack.c.l.b16 %v83
  %v667 = vunpack.c.l.b16 %v84
  %v668 = vunpack.c.l.b16 %v85
  %v669 = vunpack.c.l.b16 %v86
  %v670 = vunpack.c.l.b16 %v87
  %v671 = vunpack.c.l.b16 %v88
  %v672 = vunpack.c.l.b16 %v89
  %v673 = vunpack.c.l.b16 %v90
  %v674 = vunpack.c.l.b16 %v91
  %v675 = vunpack.c.l.b16 %v92
  %v676 = vunpack.c.l.b16 %v93
  %v677 = vunpack.c.l.b16 %v94
  %v678 = vunpack.c.l.b16 %v95
  %v679 = vunpack.c.l.b16 %v96
  %v680 = vunpack.c.l.b16 %v97
  %v681 = vunpack.c.l.b16 %v98
  %v682 = vunpack.c.l.b16 %v99
  %v683 = vunpack.c.l.b16 %v100
  %v684 = vunpack.c.l.b16 %v101
  %v685 = vunpack.c.l.b16 %v102
  %v686 = vunpack.c.l.b16 %v103
  %v687 = vunpack.c.l.b16 %v104
  %v688 = vunpack.c.l.b16 %v105
  %v689 = vunpack.c.l.b16 %v106
  %v690 = vunpack.c.l.b16 %v107
  %v691 = vunpack.c.l.b16 %v108
  %v692 = vunpack.c.l.b16 %v109
  %v693 = vunpack.c.l.b16 %v110
  %v694 = vunpack.c.l.b16 %v111
  %v695 = vunpack.c.l.b16 %v112
  %v696 = vunpack.c.l.b16 %v113
  %v697 = vunpack.c.l.b16 %v114
  %v698 = vunpack.c.l.b16 %v115
  %v699 = vunpack.c.l.b16 %v116
  %v700 = vunpack.c.l.b16 %v117
  %v701 = vunpack.c.l.b16 %v118
  %v702 = vunpack.c.l.b16 %v119
  %v703 = vunpack.c.l.b16 %v120
  %v704 = vunpack.c.l.b16 %v121
  %v705 = vunpack.c.l.b16 %v122
  %v706 = vunpack.c.l.b16 %v123
  %v707 = vunpack.c.l.b16 %v124
  %v708 = vunpack.c.l.b16 %v125
  %v709 = vunpack.c.l.b16 %v126
  %v710 = vunpack.c.l.b16 %v127
  %v711 = vunpack.c.l.b16 %v128
  %v712 = vunpack.c.l.b16 %v129
  %v713 = vunpack.c.l.b16 %v130
  %v714 = vunpack.c.l.b16 %v131
  %v715 = vunpack.c.l.b16 %v132
  %v716 = vunpack.c.l.b16 %v133
  %v717 = vunpack.c.l.b16 %v134
  %v718 = vunpack.c.l.b16 %v135
  %v719 = vunpack.c.l.b16 %v136
  %v720 = vunpack.c.l.b16 %v137
  %v721 = vunpack.c.l.b16 %v138
  %v722 = vunpack.c.l.b16 %v139
  %v723 = vunpack.c.l.b16 %v140
  %v724 = vunpack.c.l.b16 %v141
  %v725 = vunpack.c.l.b16 %v142
  %v726 = vunpack.c.l.b16 %v143
  %v727 = vunpack.c.l.b16 %v144
  %v728 = vunpack.c.l.b16 %v145
  %v729 = vunpack.c.l.b16 %v146
  %v730 = vunpack.c.l.b16 %v147
  %v731 = vunpack.c.l.b16 %v148
  %v732 = vunpack.c.l.b16 %v149
  %v733 = vunpack.c.l.b16 %v150
  %v734 = vunpack.c.l.b16 %v151
  %v735 = vunpack.c.l.b16 %v152
  %v736 = vunpack.c.l.b16 %v153
  %v737 = vunpack.c.l.b16 %v154
  %v738 = vunpack.c.l.b16 %v155
  %v739 = vunpack.c.l.b16 %v156
  %v740 = vunpack.c.l.b16 %v157
  %v741 = vunpack.c.l.b16 %v158
  %v742 = vunpack.c.l.b16 %v159
  %v743 = vunpack.c.l.b16 %v160
  %v744 = vunpack.c.l.b16 %v161
  %v745 = vunpack.c.l.b16 %v162
  %v746 = vunpack.c.l.b16 %v163
  %v747 = vunpack.c.l.b16 %v164
  %v748 = vunpack.c.l.b16 %v165
  %v749 = vunpack.c.l.b16 %v166
  %v750 = vunpack.c.l.b16 %v167
  %v751 = vunpack.c.l.b16 %v168
  %v752 = vunpack.c.l.b16 %v169
  %v753 = vunpack.c.l.b16 %v170
  %v754 = vunpack.c.l.b16 %v171
  %v755 = vunpack.c.l.b16 %v172
  %v756 = vunpack.c.l.b16 %v173
  %v757 = vunpack.c.l.b16 %v174
  %v758 = vunpack.c.l.b16 %v175
  %v759 = vunpack.c.l.b16 %v176
  %v760 = vunpack.c.l.b16 %v177
  %v761 = vunpack.c.l.b16 %v178
  %v762 = vunpack.c.l.b16 %v179
  %v763 = vunpack.c.l.b16 %v180
  %v764 = vunpack.c.l.b16 %v181
  %v765 = vunpack.c.l.b16 %v182
  %v766 = vunpack.c.l.b16 %v183
  %v767 = vunpack.c.l.b16 %v184
  %v768 = vunpack.c.l.b16 %v185
  %v769 = vunpack.c.l.b16 %v186
  %v770 = vunpack.c.l.b16 %v187
  %v771 = vunpack.c.l.b16 %v188
  %v772 = vunpack.c.l.b16 %v189
  %v773 = vunpack.c.l.b16 %v190
  %v774 = vunpack.c.l.b16 %v191
  %v775 = vunpack.c.l.b16 %v192
  %v776 = vunpack.c.l.b16 %v193
  %v777 = vunpack.c.l.b16 %v194
  %v778 = vunpack.c.l.b16 %v195
  %v779 = vunpack.c.l.b16 %v196
  %v780 = vunpack.c.l.b16 %v197
  %v781 = vunpack.c.l.b16 %v198
  %v782 = vunpack.c.l.b16 %v199
  %v783 = vunpack.c.l.b16 %v200
  %v784 = vunpack.c.l.b16 %v201
  %v785 = vunpack.c.l.b16 %v202
  %v786 = vunpack.c.l.b16 %v203
  %v787 = vunpack.c.l.b16 %v204
  %v788 = vunpack.c.l.b16 %v205
  %v789 = vunpack.c.l.b16 %v206
  %v790 = vpack.c.b16 %v663, %v662
  %v791 = vpack.c.b16 %v665, %v664
  %v792 = vpack.c.b16 %v667, %v666
  %v793 = vpack.c.b16 %v669, %v668
  %v794 = vpack.c.b16 %v671, %v670
  %v795 = vpack.c.b16 %v673, %v672
  %v796 = vpack.c.b16 %v675, %v674
  %v797 = vpack.c.b16 %v677, %v676
  %v798 = vpack.c.b16 %v679, %v678
  %v799 = vpack.c.b16 %v681, %v680
  %v800 = vpack.c.b16 %v683, %v682
  %v801 = vpack.c.b16 %v685, %v684
  %v802 = vpack.c.b16 %v687, %v686
  %v803 = vpack.c.b16 %v689, %v688
  %v804 = vpack.c.b16 %v691, %v690
  %v805 = vpack.c.b16 %v693, %v692
  %v806 = vpack.c.b16 %v695, %v694
  %v807 = vpack.c.b16 %v697, %v696
  %v808 = vpack.c.b16 %v699, %v698
  %v809 = vpack.c.b16 %v701, %v700
  %v810 = vpack.c.b16 %v703, %v702
  %v811 = vpack.c.b16 %v705, %v704
  %v812 = vpack.c.b16 %v707, %v706
  %v813 = vpack.c.b16 %v709, %v708
  %v814 = vpack.c.b16 %v711, %v710
  %v815 = vpack.c.b16 %v713, %v712
  %v816 = vpack.c.b16 %v715, %v714
  %v817 = vpack.c.b16 %v717, %v716
  %v818 = vpack.c.b16 %v719, %v718
  %v819 = vpack.c.b16 %v721, %v720
  %v820 = vpack.c.b16 %v723, %v722
  %v821 = vpack.c.b16 %v725, %v724
  %v822 = vpack.c.b16 %v727, %v726
  %v823 = vpack.c.b16 %v729, %v728
  %v824 = vpack.c.b16 %v731, %v730
  %v825 = vpack.c.b16 %v733, %v732
  %v826 = vpack.c.b16 %v735, %v734
  %v827 = vpack.c.b16 %v737, %v736
  %v828 = vpack.c.b16 %v739, %v738
  %v829 = vpack.c.b16 %v741, %v740
  %v830 = vpack.c.b16 %v743, %v742
  %v831 = vpack.c.b16 %v745, %v744
  %v832 = vpack.c.b16 %v747, %v746
  %v833 = vpack.c.b16 %v749, %v748
  %v834 = vpack.c.b16 %v751, %v750
  %v835 = vpack.c.b16 %v753, %v752
  %v836 = vpack.c.b16 %v755, %v754
  %v837 = vpack.c.b16 %v757, %v756
  %v838 = vpack.c.b16 %v759, %v758
  %v839 = vpack.c.b16 %v761, %v760
  %v840 = vpack.c.b16 %v763, %v762
  %v841 = vpack.c.b16 %v765, %v764
  %v842 = vpack.c.b16 %v767, %v766
  %v843 = vpack.c.b16 %v769, %v768
  %v844 = vpack.c.b16 %v771, %v770
  %v845 = vpack.c.b16 %v773, %v772
  %v846 = vpack.c.b16 %v775, %v774
  %v847 = vpack.c.b16 %v777, %v776
  %v848 = vpack.c.b16 %v779, %v778
  %v849 = vpack.c.b16 %v781, %v780
  %v850 = vpack.c.b16 %v783, %v782
  %v851 = vpack.c.b16 %v785, %v784
  %v852 = vpack.c.b16 %v787, %v786
  %v853 = vpack.c.b16 %v789, %v788
  %918 = vmatprep.subr.bf16.mxu0 0
  %919 = vmatpush1.bf16.msra.mxu0 %v790
  %920 = vmatprep.subr.bf16.mxu0 0
  %921 = vmatpush1.bf16.msra.mxu0 %v791
  %922 = vmatprep.subr.bf16.mxu0 0
  %923 = vmatpush1.bf16.msra.mxu0 %v792
  %924 = vmatprep.subr.bf16.mxu0 0
  %925 = vmatpush1.bf16.msra.mxu0 %v793
  %926 = vmatprep.subr.bf16.mxu0 0
  %927 = vmatpush1.bf16.msra.mxu0 %v794
  %928 = vmatprep.subr.bf16.mxu0 0
  %929 = vmatpush1.bf16.msra.mxu0 %v795
  %930 = vmatprep.subr.bf16.mxu0 0
  %931 = vmatpush1.bf16.msra.mxu0 %v796
  %932 = vmatprep.subr.bf16.mxu0 0
  %933 = vmatpush1.bf16.msra.mxu0 %v797
  %934 = vmatprep.subr.bf16.mxu0 0
  %935 = vmatpush1.bf16.msra.mxu0 %v798
  %936 = vmatprep.subr.bf16.mxu0 0
  %937 = vmatpush1.bf16.msra.mxu0 %v799
  %938 = vmatprep.subr.bf16.mxu0 0
  %939 = vmatpush1.bf16.msra.mxu0 %v800
  %940 = vmatprep.subr.bf16.mxu0 0
  %941 = vmatpush1.bf16.msra.mxu0 %v801
  %942 = vmatprep.subr.bf16.mxu0 0
  %943 = vmatpush1.bf16.msra.mxu0 %v802
  %944 = vmatprep.subr.bf16.mxu0 0
  %945 = vmatpush1.bf16.msra.mxu0 %v803
  %946 = vmatprep.subr.bf16.mxu0 0
  %947 = vmatpush1.bf16.msra.mxu0 %v804
  %948 = vmatprep.subr.bf16.mxu0 0
  %949 = vmatpush1.bf16.msra.mxu0 %v805
  %950 = vmatprep.mubr.bf16.mxu0 %v407
  %951 = vmatmul.mubr.bf16.gmra.mrb[0].mxu0 %v406
  %v952 = vpop.f32.mrb[0].mxu0
  %v953 = vadd.f32 %v212, %v952
  %v954 = vpop.f32.mrb[0].mxu0
  %v955 = vpop.f32.mrb[0].mxu0
  %v956 = vadd.f32 %v212, %v955
  %v957 = vpop.f32.mrb[0].mxu0
  %958 = vmatprep.mubr.bf16.mxu0 %v415
  %959 = vmatmul.mubr.bf16.gmra.mrb[0].mxu0 %v414
  %v960 = vpop.f32.mrb[0].mxu0
  %v961 = vadd.f32 %v212, %v960
  %v962 = vpop.f32.mrb[0].mxu0
  %v963 = vpop.f32.mrb[0].mxu0
  %v964 = vadd.f32 %v212, %v963
  %v965 = vpop.f32.mrb[0].mxu0
  %966 = vmatprep.mubr.bf16.mxu0 %v423
  %967 = vmatmul.mubr.bf16.gmra.mrb[0].mxu0 %v422
  %v968 = vpop.f32.mrb[0].mxu0
  %v969 = vadd.f32 %v212, %v968
  %v970 = vpop.f32.mrb[0].mxu0
  %v971 = vpop.f32.mrb[0].mxu0
  %v972 = vadd.f32 %v212, %v971
  %v973 = vpop.f32.mrb[0].mxu0
  %974 = vmatprep.mubr.bf16.mxu0 %v431
  %975 = vmatmul.mubr.bf16.gmra.mrb[0].mxu0 %v430
  %v976 = vpop.f32.mrb[0].mxu0
  %v977 = vadd.f32 %v212, %v976
  %v978 = vpop.f32.mrb[0].mxu0
  %v979 = vpop.f32.mrb[0].mxu0
  %v980 = vadd.f32 %v212, %v979
  %v981 = vpop.f32.mrb[0].mxu0
  %982 = vmatprep.mubr.bf16.mxu0 %v439
  %983 = vmatmul.mubr.bf16.gmra.mrb[0].mxu0 %v438
  %v984 = vpop.f32.mrb[0].mxu0
  %v985 = vadd.f32 %v212, %v984
  %v986 = vpop.f32.mrb[0].mxu0
  %v987 = vpop.f32.mrb[0].mxu0
  %v988 = vadd.f32 %v212, %v987
  %v989 = vpop.f32.mrb[0].mxu0
  %990 = vmatprep.mubr.bf16.mxu0 %v447
  %991 = vmatmul.mubr.bf16.gmra.mrb[0].mxu0 %v446
  %v992 = vpop.f32.mrb[0].mxu0
  %v993 = vadd.f32 %v212, %v992
  %v994 = vpop.f32.mrb[0].mxu0
  %v995 = vpop.f32.mrb[0].mxu0
  %v996 = vadd.f32 %v212, %v995
  %v997 = vpop.f32.mrb[0].mxu0
  %998 = vmatprep.mubr.bf16.mxu0 %v455
  %999 = vmatmul.mubr.bf16.gmra.mrb[0].mxu0 %v454
  %v1000 = vpop.f32.mrb[0].mxu0
  %v1001 = vadd.f32 %v212, %v1000
  %v1002 = vpop.f32.mrb[0].mxu0
  %v1003 = vpop.f32.mrb[0].mxu0
  %v1004 = vadd.f32 %v212, %v1003
  %v1005 = vpop.f32.mrb[0].mxu0
  %1006 = vmatprep.mubr.bf16.mxu0 %v463
  %1007 = vmatmul.mubr.bf16.gmra.mrb[0].mxu0 %v462
  %v1008 = vpop.f32.mrb[0].mxu0
  %v1009 = vadd.f32 %v212, %v1008
  %v1010 = vpop.f32.mrb[0].mxu0
  %v1011 = vpop.f32.mrb[0].mxu0
  %v1012 = vadd.f32 %v212, %v1011
  %v1013 = vpop.f32.mrb[0].mxu0
  %1014 = vdwg.mxu0
  %1015 = vmatprep.subr.bf16.mxu0 0
  %1016 = vmatpush1.bf16.msra.mxu0 %v806
  %1017 = vmatprep.subr.bf16.mxu0 0
  %1018 = vmatpush1.bf16.msra.mxu0 %v807
  %1019 = vmatprep.subr.bf16.mxu0 0
  %1020 = vmatpush1.bf16.msra.mxu0 %v808
  %1021 = vmatprep.subr.bf16.mxu0 0
  %1022 = vmatpush1.bf16.msra.mxu0 %v809
  %1023 = vmatprep.subr.bf16.mxu0 0
  %1024 = vmatpush1.bf16.msra.mxu0 %v810
  %1025 = vmatprep.subr.bf16.mxu0 0
  %1026 = vmatpush1.bf16.msra.mxu0 %v811
  %1027 = vmatprep.subr.bf16.mxu0 0
  %1028 = vmatpush1.bf16.msra.mxu0 %v812
  %1029 = vmatprep.subr.bf16.mxu0 0
  %1030 = vmatpush1.bf16.msra.mxu0 %v813
  %1031 = vmatprep.subr.bf16.mxu0 0
  %1032 = vmatpush1.bf16.msra.mxu0 %v814
  %1033 = vmatprep.subr.bf16.mxu0 0
  %1034 = vmatpush1.bf16.msra.mxu0 %v815
  %1035 = vmatprep.subr.bf16.mxu0 0
  %1036 = vmatpush1.bf16.msra.mxu0 %v816
  %1037 = vmatprep.subr.bf16.mxu0 0
  %1038 = vmatpush1.bf16.msra.mxu0 %v817
  %1039 = vmatprep.subr.bf16.mxu0 0
  %1040 = vmatpush1.bf16.msra.mxu0 %v818
  %1041 = vmatprep.subr.bf16.mxu0 0
  %1042 = vmatpush1.bf16.msra.mxu0 %v819
  %1043 = vmatprep.subr.bf16.mxu0 0
  %1044 = vmatpush1.bf16.msra.mxu0 %v820
  %1045 = vmatprep.subr.bf16.mxu0 0
  %1046 = vmatpush1.bf16.msra.mxu0 %v821
  %1047 = vmatprep.mubr.bf16.mxu0 %v409
  %1048 = vmatmul.mubr.bf16.gmra.mrb[0].mxu0 %v408
  %v1049 = vpop.f32.mrb[0].mxu0
  %v1050 = vadd.f32 %v953, %v1049
  %v1051 = vpop.f32.mrb[0].mxu0
  %v1052 = vpop.f32.mrb[0].mxu0
  %v1053 = vadd.f32 %v956, %v1052
  %v1054 = vpop.f32.mrb[0].mxu0
  %1055 = vmatprep.mubr.bf16.mxu0 %v417
  %1056 = vmatmul.mubr.bf16.gmra.mrb[0].mxu0 %v416
  %v1057 = vpop.f32.mrb[0].mxu0
  %v1058 = vadd.f32 %v961, %v1057
  %v1059 = vpop.f32.mrb[0].mxu0
  %v1060 = vpop.f32.mrb[0].mxu0
  %v1061 = vadd.f32 %v964, %v1060
  %v1062 = vpop.f32.mrb[0].mxu0
  %1063 = vmatprep.mubr.bf16.mxu0 %v425
  %1064 = vmatmul.mubr.bf16.gmra.mrb[0].mxu0 %v424
  %v1065 = vpop.f32.mrb[0].mxu0
  %v1066 = vadd.f32 %v969, %v1065
  %v1067 = vpop.f32.mrb[0].mxu0
  %v1068 = vpop.f32.mrb[0].mxu0
  %v1069 = vadd.f32 %v972, %v1068
  %v1070 = vpop.f32.mrb[0].mxu0
  %1071 = vmatprep.mubr.bf16.mxu0 %v433
  %1072 = vmatmul.mubr.bf16.gmra.mrb[0].mxu0 %v432
  %v1073 = vpop.f32.mrb[0].mxu0
  %v1074 = vadd.f32 %v977, %v1073
  %v1075 = vpop.f32.mrb[0].mxu0
  %v1076 = vpop.f32.mrb[0].mxu0
  %v1077 = vadd.f32 %v980, %v1076
  %v1078 = vpop.f32.mrb[0].mxu0
  %1079 = vmatprep.mubr.bf16.mxu0 %v441
  %1080 = vmatmul.mubr.bf16.gmra.mrb[0].mxu0 %v440
  %v1081 = vpop.f32.mrb[0].mxu0
  %v1082 = vadd.f32 %v985, %v1081
  %v1083 = vpop.f32.mrb[0].mxu0
  %v1084 = vpop.f32.mrb[0].mxu0
  %v1085 = vadd.f32 %v988, %v1084
  %v1086 = vpop.f32.mrb[0].mxu0
  %1087 = vmatprep.mubr.bf16.mxu0 %v449
  %1088 = vmatmul.mubr.bf16.gmra.mrb[0].mxu0 %v448
  %v1089 = vpop.f32.mrb[0].mxu0
  %v1090 = vadd.f32 %v993, %v1089
  %v1091 = vpop.f32.mrb[0].mxu0
  %v1092 = vpop.f32.mrb[0].mxu0
  %v1093 = vadd.f32 %v996, %v1092
  %v1094 = vpop.f32.mrb[0].mxu0
  %1095 = vmatprep.mubr.bf16.mxu0 %v457
  %1096 = vmatmul.mubr.bf16.gmra.mrb[0].mxu0 %v456
  %v1097 = vpop.f32.mrb[0].mxu0
  %v1098 = vadd.f32 %v1001, %v1097
  %v1099 = vpop.f32.mrb[0].mxu0
  %v1100 = vpop.f32.mrb[0].mxu0
  %v1101 = vadd.f32 %v1004, %v1100
  %v1102 = vpop.f32.mrb[0].mxu0
  %1103 = vmatprep.mubr.bf16.mxu0 %v465
  %1104 = vmatmul.mubr.bf16.gmra.mrb[0].mxu0 %v464
  %v1105 = vpop.f32.mrb[0].mxu0
  %v1106 = vadd.f32 %v1009, %v1105
  %v1107 = vpop.f32.mrb[0].mxu0
  %v1108 = vpop.f32.mrb[0].mxu0
  %v1109 = vadd.f32 %v1012, %v1108
  %v1110 = vpop.f32.mrb[0].mxu0
  %1111 = vdwg.mxu0
  %1112 = vmatprep.subr.bf16.mxu0 0
  %1113 = vmatpush1.bf16.msra.mxu0 %v822
  %1114 = vmatprep.subr.bf16.mxu0 0
  %1115 = vmatpush1.bf16.msra.mxu0 %v823
  %1116 = vmatprep.subr.bf16.mxu0 0
  %1117 = vmatpush1.bf16.msra.mxu0 %v824
  %1118 = vmatprep.subr.bf16.mxu0 0
  %1119 = vmatpush1.bf16.msra.mxu0 %v825
  %1120 = vmatprep.subr.bf16.mxu0 0
  %1121 = vmatpush1.bf16.msra.mxu0 %v826
  %1122 = vmatprep.subr.bf16.mxu0 0
  %1123 = vmatpush1.bf16.msra.mxu0 %v827
  %1124 = vmatprep.subr.bf16.mxu0 0
  %1125 = vmatpush1.bf16.msra.mxu0 %v828
  %1126 = vmatprep.subr.bf16.mxu0 0
  %1127 = vmatpush1.bf16.msra.mxu0 %v829
  %1128 = vmatprep.subr.bf16.mxu0 0
  %1129 = vmatpush1.bf16.msra.mxu0 %v830
  %1130 = vmatprep.subr.bf16.mxu0 0
  %1131 = vmatpush1.bf16.msra.mxu0 %v831
  %1132 = vmatprep.subr.bf16.mxu0 0
  %1133 = vmatpush1.bf16.msra.mxu0 %v832
  %1134 = vmatprep.subr.bf16.mxu0 0
  %1135 = vmatpush1.bf16.msra.mxu0 %v833
  %1136 = vmatprep.subr.bf16.mxu0 0
  %1137 = vmatpush1.bf16.msra.mxu0 %v834
  %1138 = vmatprep.subr.bf16.mxu0 0
  %1139 = vmatpush1.bf16.msra.mxu0 %v835
  %1140 = vmatprep.subr.bf16.mxu0 0
  %1141 = vmatpush1.bf16.msra.mxu0 %v836
  %1142 = vmatprep.subr.bf16.mxu0 0
  %1143 = vmatpush1.bf16.msra.mxu0 %v837
  %1144 = vmatprep.mubr.bf16.mxu0 %v411
  %1145 = vmatmul.mubr.bf16.gmra.mrb[0].mxu0 %v410
  %v1146 = vpop.f32.mrb[0].mxu0
  %v1147 = vadd.f32 %v1050, %v1146
  %v1148 = vpop.f32.mrb[0].mxu0
  %v1149 = vpop.f32.mrb[0].mxu0
  %v1150 = vadd.f32 %v1053, %v1149
  %v1151 = vpop.f32.mrb[0].mxu0
  %1152 = vmatprep.mubr.bf16.mxu0 %v419
  %1153 = vmatmul.mubr.bf16.gmra.mrb[0].mxu0 %v418
  %v1154 = vpop.f32.mrb[0].mxu0
  %v1155 = vadd.f32 %v1058, %v1154
  %v1156 = vpop.f32.mrb[0].mxu0
  %v1157 = vpop.f32.mrb[0].mxu0
  %v1158 = vadd.f32 %v1061, %v1157
  %v1159 = vpop.f32.mrb[0].mxu0
  %1160 = vmatprep.mubr.bf16.mxu0 %v427
  %1161 = vmatmul.mubr.bf16.gmra.mrb[0].mxu0 %v426
  %v1162 = vpop.f32.mrb[0].mxu0
  %v1163 = vadd.f32 %v1066, %v1162
  %v1164 = vpop.f32.mrb[0].mxu0
  %v1165 = vpop.f32.mrb[0].mxu0
  %v1166 = vadd.f32 %v1069, %v1165
  %v1167 = vpop.f32.mrb[0].mxu0
  %1168 = vmatprep.mubr.bf16.mxu0 %v435
  %1169 = vmatmul.mubr.bf16.gmra.mrb[0].mxu0 %v434
  %v1170 = vpop.f32.mrb[0].mxu0
  %v1171 = vadd.f32 %v1074, %v1170
  %v1172 = vpop.f32.mrb[0].mxu0
  %v1173 = vpop.f32.mrb[0].mxu0
  %v1174 = vadd.f32 %v1077, %v1173
  %v1175 = vpop.f32.mrb[0].mxu0
  %1176 = vmatprep.mubr.bf16.mxu0 %v443
  %1177 = vmatmul.mubr.bf16.gmra.mrb[0].mxu0 %v442
  %v1178 = vpop.f32.mrb[0].mxu0
  %v1179 = vadd.f32 %v1082, %v1178
  %v1180 = vpop.f32.mrb[0].mxu0
  %v1181 = vpop.f32.mrb[0].mxu0
  %v1182 = vadd.f32 %v1085, %v1181
  %v1183 = vpop.f32.mrb[0].mxu0
  %1184 = vmatprep.mubr.bf16.mxu0 %v451
  %1185 = vmatmul.mubr.bf16.gmra.mrb[0].mxu0 %v450
  %v1186 = vpop.f32.mrb[0].mxu0
  %v1187 = vadd.f32 %v1090, %v1186
  %v1188 = vpop.f32.mrb[0].mxu0
  %v1189 = vpop.f32.mrb[0].mxu0
  %v1190 = vadd.f32 %v1093, %v1189
  %v1191 = vpop.f32.mrb[0].mxu0
  %1192 = vmatprep.mubr.bf16.mxu0 %v459
  %1193 = vmatmul.mubr.bf16.gmra.mrb[0].mxu0 %v458
  %v1194 = vpop.f32.mrb[0].mxu0
  %v1195 = vadd.f32 %v1098, %v1194
  %v1196 = vpop.f32.mrb[0].mxu0
  %v1197 = vpop.f32.mrb[0].mxu0
  %v1198 = vadd.f32 %v1101, %v1197
  %v1199 = vpop.f32.mrb[0].mxu0
  %1200 = vmatprep.mubr.bf16.mxu0 %v467
  %1201 = vmatmul.mubr.bf16.gmra.mrb[0].mxu0 %v466
  %v1202 = vpop.f32.mrb[0].mxu0
  %v1203 = vadd.f32 %v1106, %v1202
  %v1204 = vpop.f32.mrb[0].mxu0
  %v1205 = vpop.f32.mrb[0].mxu0
  %v1206 = vadd.f32 %v1109, %v1205
  %v1207 = vpop.f32.mrb[0].mxu0
  %1208 = vdwg.mxu0
  %1209 = vmatprep.subr.bf16.mxu0 0
  %1210 = vmatpush1.bf16.msra.mxu0 %v838
  %1211 = vmatprep.subr.bf16.mxu0 0
  %1212 = vmatpush1.bf16.msra.mxu0 %v839
  %1213 = vmatprep.subr.bf16.mxu0 0
  %1214 = vmatpush1.bf16.msra.mxu0 %v840
  %1215 = vmatprep.subr.bf16.mxu0 0
  %1216 = vmatpush1.bf16.msra.mxu0 %v841
  %1217 = vmatprep.subr.bf16.mxu0 0
  %1218 = vmatpush1.bf16.msra.mxu0 %v842
  %1219 = vmatprep.subr.bf16.mxu0 0
  %1220 = vmatpush1.bf16.msra.mxu0 %v843
  %1221 = vmatprep.subr.bf16.mxu0 0
  %1222 = vmatpush1.bf16.msra.mxu0 %v844
  %1223 = vmatprep.subr.bf16.mxu0 0
  %1224 = vmatpush1.bf16.msra.mxu0 %v845
  %1225 = vmatprep.subr.bf16.mxu0 0
  %1226 = vmatpush1.bf16.msra.mxu0 %v846
  %1227 = vmatprep.subr.bf16.mxu0 0
  %1228 = vmatpush1.bf16.msra.mxu0 %v847
  %1229 = vmatprep.subr.bf16.mxu0 0
  %1230 = vmatpush1.bf16.msra.mxu0 %v848
  %1231 = vmatprep.subr.bf16.mxu0 0
  %1232 = vmatpush1.bf16.msra.mxu0 %v849
  %1233 = vmatprep.subr.bf16.mxu0 0
  %1234 = vmatpush1.bf16.msra.mxu0 %v850
  %1235 = vmatprep.subr.bf16.mxu0 0
  %1236 = vmatpush1.bf16.msra.mxu0 %v851
  %1237 = vmatprep.subr.bf16.mxu0 0
  %1238 = vmatpush1.bf16.msra.mxu0 %v852
  %1239 = vmatprep.subr.bf16.mxu0 0
  %1240 = vmatpush1.bf16.msra.mxu0 %v853
  %1241 = vmatprep.mubr.bf16.mxu0 %v413
  %1242 = vmatmul.mubr.bf16.gmra.mrb[0].mxu0 %v412
  %v1243 = vpop.f32.mrb[0].mxu0
  %v1244 = vadd.f32 %v1147, %v1243
  %v1245 = vpop.f32.mrb[0].mxu0
  %v1246 = vpop.f32.mrb[0].mxu0
  %v1247 = vadd.f32 %v1150, %v1246
  %v1248 = vpop.f32.mrb[0].mxu0
  %1249 = vmatprep.mubr.bf16.mxu0 %v421
  %1250 = vmatmul.mubr.bf16.gmra.mrb[0].mxu0 %v420
  %v1251 = vpop.f32.mrb[0].mxu0
  %v1252 = vadd.f32 %v1155, %v1251
  %v1253 = vpop.f32.mrb[0].mxu0
  %v1254 = vpop.f32.mrb[0].mxu0
  %v1255 = vadd.f32 %v1158, %v1254
  %v1256 = vpop.f32.mrb[0].mxu0
  %1257 = vmatprep.mubr.bf16.mxu0 %v429
  %1258 = vmatmul.mubr.bf16.gmra.mrb[0].mxu0 %v428
  %v1259 = vpop.f32.mrb[0].mxu0
  %v1260 = vadd.f32 %v1163, %v1259
  %v1261 = vpop.f32.mrb[0].mxu0
  %v1262 = vpop.f32.mrb[0].mxu0
  %v1263 = vadd.f32 %v1166, %v1262
  %v1264 = vpop.f32.mrb[0].mxu0
  %1265 = vmatprep.mubr.bf16.mxu0 %v437
  %1266 = vmatmul.mubr.bf16.gmra.mrb[0].mxu0 %v436
  %v1267 = vpop.f32.mrb[0].mxu0
  %v1268 = vadd.f32 %v1171, %v1267
  %v1269 = vpop.f32.mrb[0].mxu0
  %v1270 = vpop.f32.mrb[0].mxu0
  %v1271 = vadd.f32 %v1174, %v1270
  %v1272 = vpop.f32.mrb[0].mxu0
  %1273 = vmatprep.mubr.bf16.mxu0 %v445
  %1274 = vmatmul.mubr.bf16.gmra.mrb[0].mxu0 %v444
  %v1275 = vpop.f32.mrb[0].mxu0
  %v1276 = vadd.f32 %v1179, %v1275
  %v1277 = vpop.f32.mrb[0].mxu0
  %v1278 = vpop.f32.mrb[0].mxu0
  %v1279 = vadd.f32 %v1182, %v1278
  %v1280 = vpop.f32.mrb[0].mxu0
  %1281 = vmatprep.mubr.bf16.mxu0 %v453
  %1282 = vmatmul.mubr.bf16.gmra.mrb[0].mxu0 %v452
  %v1283 = vpop.f32.mrb[0].mxu0
  %v1284 = vadd.f32 %v1187, %v1283
  %v1285 = vpop.f32.mrb[0].mxu0
  %v1286 = vpop.f32.mrb[0].mxu0
  %v1287 = vadd.f32 %v1190, %v1286
  %v1288 = vpop.f32.mrb[0].mxu0
  %1289 = vmatprep.mubr.bf16.mxu0 %v461
  %1290 = vmatmul.mubr.bf16.gmra.mrb[0].mxu0 %v460
  %v1291 = vpop.f32.mrb[0].mxu0
  %v1292 = vadd.f32 %v1195, %v1291
  %v1293 = vpop.f32.mrb[0].mxu0
  %v1294 = vpop.f32.mrb[0].mxu0
  %v1295 = vadd.f32 %v1198, %v1294
  %v1296 = vpop.f32.mrb[0].mxu0
  %1297 = vmatprep.mubr.bf16.mxu0 %v469
  %1298 = vmatmul.mubr.bf16.gmra.mrb[0].mxu0 %v468
  %v1299 = vpop.f32.mrb[0].mxu0
  %v1300 = vadd.f32 %v1203, %v1299
  %v1301 = vpop.f32.mrb[0].mxu0
  %v1302 = vpop.f32.mrb[0].mxu0
  %v1303 = vadd.f32 %v1206, %v1302
  %v1304 = vpop.f32.mrb[0].mxu0
  %1305 = vdwg.mxu0
  %1306 = vst [vmem:[%s3] sm:$0xff] %v1244
  %1307 = vst [vmem:[%s3 + $0x8] sm:$0xff] %v1247
  %1308 = vst [vmem:[%s3 + $0x10] sm:$0xff] %v1252
  %1309 = vst [vmem:[%s3 + $0x18] sm:$0xff] %v1255
  %1310 = vst [vmem:[%s3 + $0x20] sm:$0xff] %v1260
  %1311 = vst [vmem:[%s3 + $0x28] sm:$0xff] %v1263
  %1312 = vst [vmem:[%s3 + $0x30] sm:$0xff] %v1268
  %1313 = vst [vmem:[%s3 + $0x38] sm:$0xff] %v1271
  %1314 = vst [vmem:[%s3 + $0x40] sm:$0xff] %v1276
  %1315 = vst [vmem:[%s3 + $0x48] sm:$0xff] %v1279
  %1316 = vst [vmem:[%s3 + $0x50] sm:$0xff] %v1284
  %1317 = vst [vmem:[%s3 + $0x58] sm:$0xff] %v1287
  %1318 = vst [vmem:[%s3 + $0x60] sm:$0xff] %v1292
  %1319 = vst [vmem:[%s3 + $0x68] sm:$0xff] %v1295
  %1320 = vst [vmem:[%s3 + $0x70] sm:$0xff] %v1300
  %1321 = vst [vmem:[%s3 + $0x78] sm:$0xff] %v1303
  // Predicated region
  $region14: #{_lambda_.15} parent=0 // pred_check
    _
  $region15: #{_lambda_.15} parent=0 // pred_check_branch
    %1323 = sbr.rel (0) target = $region17
  $region16: #{_lambda_.15} parent=0 // pred_region
    _
  $region17: #{_lambda_.15} parent=0 // pred_fallthru
    _
  // Predicated region
  $region18: #{_lambda_.15} parent=0 // pred_check
    _
  $region19: #{_lambda_.15} parent=0 // pred_check_branch
    %1325 = sbr.rel (0) target = $region21
  $region20: #{_lambda_.15} parent=0 // pred_region
    _
  $region21: #{_lambda_.15} parent=0 // pred_fallthru
    _

</llo_original>
